<compile_context>
chip_gen: v6e
topology: v6e:2x2x1
jax: 0.10.0
libtpu: 0.0.40
codegen_flags: <defaults>
</compile_context>

<pallas_src>
import functools

import jax
import jax.numpy as jnp
import numpy as np
from jax import lax
from jax.experimental import pallas as pl
from jax.experimental.pallas import tpu as pltpu

LEAKY_SLOPE = 0.3  # nn.LeakyReLU(0.3) in the PyTorch module


def _leaky(x):
    return jnp.where(x > 0, x, LEAKY_SLOPE * x)


# --------------------------- fused forward kernel ---------------------------
def fused_forward_kernel(x_ref, noise_ref,
                         w1_ref, b1_ref, w2_ref, b2_ref, w3_ref, b3_ref,
                         wih_ref, whh_ref, lb_ref,
                         fc1w_ref, fc1b_ref, fc2w_ref, fc2b_ref,
                         o_ref, *, B, L, H):
    BL = B * L

    # Boundary masks, hoisted once and reused by all three convs.
    # Time-major rows: row = t*B + b  =>  t == 0 iff row < B, t == L-1 iff
    # row >= BL - B.
    row = lax.broadcasted_iota(jnp.int32, (BL, 1), 0)
    not_first = (row >= B).astype(jnp.float32)       # mask out the t==0 rows
    not_last = (row < BL - B).astype(jnp.float32)    # mask out the t==L-1 rows

    def conv_lrelu(z, w_ref, b_ref):
        # Conv1d(k=3, padding=1), channels-last, batch+time stacked on MXU M.
        zc = jnp.dot(z, w_ref[1], preferred_element_type=jnp.float32)
        zl = jnp.dot(z, w_ref[0], preferred_element_type=jnp.float32)
        zr = jnp.dot(z, w_ref[2], preferred_element_type=jnp.float32)
        # left tap  y[t] += x[t-1] @ w0 : rotate rows down by B, mask t == 0
        left = pltpu.roll(zl, B, 0) * not_first
        # right tap y[t] += x[t+1] @ w2 : rotate rows up by B, mask t == L-1
        right = pltpu.roll(zr, BL - B, 0) * not_last
        return _leaky(zc + left + right + b_ref[...])

    # ---- noise add (whole-tile VPU op) + conv stack, time-major (BL, C) ----
    xa = x_ref[...] + 0.05 * noise_ref[...]          # (B*L, 4)
    h1 = conv_lrelu(xa, w1_ref, b1_ref)              # (B*L, H/2)
    h2 = conv_lrelu(h1, w2_ref, b2_ref)              # (B*L, H)
    h3 = conv_lrelu(h2, w3_ref, b3_ref)              # (B*L, H)

    # ---- LSTM input projection: one lane-dense matmul, gates [i | f | g | o]
    gx = jnp.dot(h3, wih_ref[...],
                 preferred_element_type=jnp.float32) + lb_ref[...]   # (B*L, 4H)

    # ---- LSTM recurrence: one (B,H)@(H,4H) matmul per step, unrolled over L.
    whh = whh_ref[...]
    h = jnp.zeros((B, H), jnp.float32)
    c = jnp.zeros((B, H), jnp.float32)
    s = jnp.zeros((B, H), jnp.float32)
    for t in range(L):
        gates = gx[t * B:(t + 1) * B, :] + jnp.dot(
            h, whh, preferred_element_type=jnp.float32)              # (B, 4H)
        i_g = jax.nn.sigmoid(gates[:, 0 * H:1 * H])
        f_g = jax.nn.sigmoid(gates[:, 1 * H:2 * H])
        g_g = jnp.tanh(gates[:, 2 * H:3 * H])
        o_g = jax.nn.sigmoid(gates[:, 3 * H:4 * H])
        c = f_g * c + i_g * g_g
        h = o_g * jnp.tanh(c)
        s = s + h

    m = s * (1.0 / L)                                # temporal mean of LSTM outputs

    # ---- FC head: Linear -> LeakyReLU -> Linear(spectral_norm) -> sigmoid ----
    f = _leaky(jnp.dot(m, fc1w_ref[...],
                       preferred_element_type=jnp.float32) + fc1b_ref[...])
    y = jnp.dot(f, fc2w_ref[...],
                preferred_element_type=jnp.float32) + fc2b_ref[...]
    o_ref[...] = jax.nn.sigmoid(y)


def discriminator_rna_forward(params, x, noise):
    # x, noise: (B, L, 4) -> (B, 1)
    B, L, C = x.shape
    H = params["lstm_whh"].shape[0]

    # Layout plumbing only (done in plain JAX, outside the kernel): time-major
    # rows (row = t*B + b) make the per-step LSTM gate slices contiguous.
    x_tm = jnp.transpose(x, (1, 0, 2)).reshape(L * B, C)
    n_tm = jnp.transpose(noise, (1, 0, 2)).reshape(L * B, C)

    args = (x_tm, n_tm,
            params["conv1_w"], params["conv1_b"],
            params["conv2_w"], params["conv2_b"],
            params["conv3_w"], params["conv3_b"],
            params["lstm_wih"], params["lstm_whh"], params["lstm_b"],
            params["fc1_w"], params["fc1_b"],
            params["fc2_w_sn"], params["fc2_b"])

    vmem_spec = pl.BlockSpec(memory_space=pltpu.MemorySpace.VMEM)
    return pl.pallas_call(
        functools.partial(fused_forward_kernel, B=B, L=L, H=H),
        out_shape=jax.ShapeDtypeStruct((B, 1), jnp.float32),
        in_specs=[vmem_spec] * len(args),
        out_specs=vmem_spec,
    )(*args)


# ------------------------------- parameters -------------------------------
def init_params(key, hidden):
    H, Hh = hidden, hidden // 2
    ks = jax.random.split(key, 14)

    def u(k, shape, fan_in):
        bound = 1.0 / np.sqrt(fan_in)
        return jax.random.uniform(k, shape, jnp.float32, -bound, bound)

    params = {
        # conv weights stored as (K=3, Cin, Cout)
        "conv1_w": u(ks[0], (3, 4, Hh), 4 * 3),
        "conv1_b": u(ks[1], (1, Hh), 4 * 3),
        "conv2_w": u(ks[2], (3, Hh, H), Hh * 3),
        "conv2_b": u(ks[3], (1, H), Hh * 3),
        "conv3_w": u(ks[4], (3, H, H), H * 3),
        "conv3_b": u(ks[5], (1, H), H * 3),
        # LSTM weights gate-packed along lanes, columns [i | f | g | o]
        # (PyTorch gate order); bias = b_ih + b_hh.
        "lstm_wih": u(ks[6], (H, 4 * H), H),
        "lstm_whh": u(ks[7], (H, 4 * H), H),
        "lstm_b": u(ks[8], (1, 4 * H), H) + u(ks[9], (1, 4 * H), H),
        "fc1_w": u(ks[10], (H, Hh), H),
        "fc1_b": u(ks[11], (1, Hh), H),
        "fc2_b": u(ks[13], (1, 1), Hh),
    }
    fc2_w = u(ks[12], (Hh, 1), Hh)
    # spectral_norm on the final Linear: divide by the largest singular value
    # (exact for this rank-1 weight; matches the converged power iteration).
    params["fc2_w_sn"] = fc2_w / jnp.linalg.norm(fc2_w)
    return params


# --------------------------- pure-JAX reference ----------------------------
def reference_forward(params, x, noise):
    x = x + 0.05 * noise

    def conv(z, w, b):
        L = z.shape[1]
        zp = jnp.pad(z, ((0, 0), (1, 1), (0, 0)))
        y = sum(jnp.einsum("blc,cd->bld", zp[:, k:k + L, :], w[k])
                for k in range(3)) + b
        return _leaky(y)

    h = conv(x, params["conv1_w"], params["conv1_b"])
    h = conv(h, params["conv2_w"], params["conv2_b"])
    h = conv(h, params["conv3_w"], params["conv3_b"])

    B, L, H = h.shape
    wih, whh, bg = params["lstm_wih"], params["lstm_whh"], params["lstm_b"]

    def step(carry, xt):
        hh, cc = carry
        g = xt @ wih + bg + hh @ whh                 # (B, 4H), gates [i|f|g|o]
        i_g = jax.nn.sigmoid(g[:, 0 * H:1 * H])
        f_g = jax.nn.sigmoid(g[:, 1 * H:2 * H])
        g_g = jnp.tanh(g[:, 2 * H:3 * H])
        o_g = jax.nn.sigmoid(g[:, 3 * H:4 * H])
        cc = f_g * cc + i_g * g_g
        hh = o_g * jnp.tanh(cc)
        return (hh, cc), hh

    z0 = jnp.zeros((B, H), jnp.float32)
    _, hs = lax.scan(step, (z0, z0), jnp.swapaxes(h, 0, 1))
    m = jnp.mean(hs, axis=0)

    f = _leaky(m @ params["fc1_w"] + params["fc1_b"])
    y = f @ params["fc2_w_sn"] + params["fc2_b"]
    return jax.nn.sigmoid(y)


if __name__ == "__main__":
    B, L, HIDDEN = 2, 16, 32
    key = jax.random.PRNGKey(0)
    pkey, xkey, nkey = jax.random.split(key, 3)

    params = init_params(pkey, HIDDEN)
    x = jax.random.uniform(xkey, (B, L, 4), jnp.float32)       # (B, seq, 4) RNA
    noise = jax.random.normal(nkey, (B, L, 4), jnp.float32)    # x + 0.05*noise (fused in-kernel)

    out = discriminator_rna_forward(params, x, noise)
    out = jax.block_until_ready(out)
    assert out.shape == (B, 1)

    ref = reference_forward(params, x, noise)
    np.testing.assert_allclose(np.asarray(out), np.asarray(ref),
                               rtol=1e-2, atol=1e-2)
    print("KERNEL_OK")
</pallas_src>

<mosaic_0001>
module attributes {stable_mosaic.version = 11 : i64} {
  func.func @fused_forward_kernel(%arg0: memref<32x4xf32, #tpu.memory_space<vmem>>, %arg1: memref<32x4xf32, #tpu.memory_space<vmem>>, %arg2: memref<3x4x16xf32, #tpu.memory_space<vmem>>, %arg3: memref<1x16xf32, #tpu.memory_space<vmem>>, %arg4: memref<3x16x32xf32, #tpu.memory_space<vmem>>, %arg5: memref<1x32xf32, #tpu.memory_space<vmem>>, %arg6: memref<3x32x32xf32, #tpu.memory_space<vmem>>, %arg7: memref<1x32xf32, #tpu.memory_space<vmem>>, %arg8: memref<32x128xf32, #tpu.memory_space<vmem>>, %arg9: memref<32x128xf32, #tpu.memory_space<vmem>>, %arg10: memref<1x128xf32, #tpu.memory_space<vmem>>, %arg11: memref<32x16xf32, #tpu.memory_space<vmem>>, %arg12: memref<1x16xf32, #tpu.memory_space<vmem>>, %arg13: memref<16x1xf32, #tpu.memory_space<vmem>>, %arg14: memref<1x1xf32, #tpu.memory_space<vmem>>, %arg15: memref<2x1xf32, #tpu.memory_space<vmem>>) attributes {dimension_semantics = [], scalar_prefetch = 0 : i64, scratch_operands = 0 : i64, tpu.core_type = #tpu.core_type<tc>} {
    %0 = tpu.iota {dimensions = array<i32: 0>} : vector<32x1xi32>
    %c2_i32 = arith.constant 2 : i32
    %1 = vector.broadcast %c2_i32 : i32 to vector<32x1xi32>
    %2 = arith.cmpi sge, %0, %1 : vector<32x1xi32>
    %3 = arith.extui %2 : vector<32x1xi1> to vector<32x1xi32>
    %4 = arith.sitofp %3 : vector<32x1xi32> to vector<32x1xf32>
    %c30_i32 = arith.constant 30 : i32
    %5 = vector.broadcast %c30_i32 : i32 to vector<32x1xi32>
    %6 = arith.cmpi slt, %0, %5 : vector<32x1xi32>
    %7 = arith.extui %6 : vector<32x1xi1> to vector<32x1xi32>
    %8 = arith.sitofp %7 : vector<32x1xi32> to vector<32x1xf32>
    %c0 = arith.constant 0 : index
    %c0_0 = arith.constant 0 : index
    %9 = vector.load %arg0[%c0, %c0_0] : memref<32x4xf32, #tpu.memory_space<vmem>>, vector<32x4xf32>
    %c0_1 = arith.constant 0 : index
    %c0_2 = arith.constant 0 : index
    %10 = vector.load %arg1[%c0_1, %c0_2] : memref<32x4xf32, #tpu.memory_space<vmem>>, vector<32x4xf32>
    %cst = arith.constant 5.000000e-02 : f32
    %11 = vector.broadcast %cst : f32 to vector<32x4xf32>
    %12 = arith.mulf %11, %10 : vector<32x4xf32>
    %13 = arith.addf %9, %12 : vector<32x4xf32>
    %c1 = arith.constant 1 : index
    %c0_3 = arith.constant 0 : index
    %c0_4 = arith.constant 0 : index
    %14 = vector.load %arg2[%c1, %c0_3, %c0_4] : memref<3x4x16xf32, #tpu.memory_space<vmem>>, vector<1x4x16xf32>
    %15 = vector.shape_cast %14 : vector<1x4x16xf32> to vector<4x16xf32>
    %cst_5 = arith.constant dense<0.000000e+00> : vector<32x16xf32>
    %16 = tpu.matmul %13, %15, %cst_5 {dimension_numbers = #tpu.dot_dimension_numbers<[1], [0], [0], [1], [0, 0, 1, 1], [], []>} : vector<32x4xf32>, vector<4x16xf32>, vector<32x16xf32> -> vector<32x16xf32>
    %c0_6 = arith.constant 0 : index
    %c0_7 = arith.constant 0 : index
    %c0_8 = arith.constant 0 : index
    %17 = vector.load %arg2[%c0_6, %c0_7, %c0_8] : memref<3x4x16xf32, #tpu.memory_space<vmem>>, vector<1x4x16xf32>
    %18 = vector.shape_cast %17 : vector<1x4x16xf32> to vector<4x16xf32>
    %cst_9 = arith.constant dense<0.000000e+00> : vector<32x16xf32>
    %19 = tpu.matmul %13, %18, %cst_9 {dimension_numbers = #tpu.dot_dimension_numbers<[1], [0], [0], [1], [0, 0, 1, 1], [], []>} : vector<32x4xf32>, vector<4x16xf32>, vector<32x16xf32> -> vector<32x16xf32>
    %c2 = arith.constant 2 : index
    %c0_10 = arith.constant 0 : index
    %c0_11 = arith.constant 0 : index
    %20 = vector.load %arg2[%c2, %c0_10, %c0_11] : memref<3x4x16xf32, #tpu.memory_space<vmem>>, vector<1x4x16xf32>
    %21 = vector.shape_cast %20 : vector<1x4x16xf32> to vector<4x16xf32>
    %cst_12 = arith.constant dense<0.000000e+00> : vector<32x16xf32>
    %22 = tpu.matmul %13, %21, %cst_12 {dimension_numbers = #tpu.dot_dimension_numbers<[1], [0], [0], [1], [0, 0, 1, 1], [], []>} : vector<32x4xf32>, vector<4x16xf32>, vector<32x16xf32> -> vector<32x16xf32>
    %c2_i32_13 = arith.constant 2 : i32
    %23 = tpu.dynamic_rotate %19 by %c2_i32_13 dim 0 : vector<32x16xf32>, i32 -> vector<32x16xf32>
    %24 = vector.broadcast %4 : vector<32x1xf32> to vector<32x16xf32>
    %25 = arith.mulf %23, %24 : vector<32x16xf32>
    %c30_i32_14 = arith.constant 30 : i32
    %26 = tpu.dynamic_rotate %22 by %c30_i32_14 dim 0 : vector<32x16xf32>, i32 -> vector<32x16xf32>
    %27 = vector.broadcast %8 : vector<32x1xf32> to vector<32x16xf32>
    %28 = arith.mulf %26, %27 : vector<32x16xf32>
    %29 = arith.addf %16, %25 : vector<32x16xf32>
    %30 = arith.addf %29, %28 : vector<32x16xf32>
    %c0_15 = arith.constant 0 : index
    %c0_16 = arith.constant 0 : index
    %31 = vector.load %arg3[%c0_15, %c0_16] : memref<1x16xf32, #tpu.memory_space<vmem>>, vector<1x16xf32>
    %32 = vector.broadcast %31 : vector<1x16xf32> to vector<32x16xf32>
    %33 = arith.addf %30, %32 : vector<32x16xf32>
    %cst_17 = arith.constant 0.000000e+00 : f32
    %34 = vector.broadcast %cst_17 : f32 to vector<32x16xf32>
    %35 = arith.cmpf ogt, %33, %34 : vector<32x16xf32>
    %cst_18 = arith.constant 3.000000e-01 : f32
    %36 = vector.broadcast %cst_18 : f32 to vector<32x16xf32>
    %37 = arith.mulf %36, %33 : vector<32x16xf32>
    %38 = arith.select %35, %33, %37 : vector<32x16xi1>, vector<32x16xf32>
    %c1_19 = arith.constant 1 : index
    %c0_20 = arith.constant 0 : index
    %c0_21 = arith.constant 0 : index
    %39 = vector.load %arg4[%c1_19, %c0_20, %c0_21] : memref<3x16x32xf32, #tpu.memory_space<vmem>>, vector<1x16x32xf32>
    %40 = vector.shape_cast %39 : vector<1x16x32xf32> to vector<16x32xf32>
    %cst_22 = arith.constant dense<0.000000e+00> : vector<32x32xf32>
    %41 = tpu.matmul %38, %40, %cst_22 {dimension_numbers = #tpu.dot_dimension_numbers<[1], [0], [0], [1], [0, 0, 1, 1], [], []>} : vector<32x16xf32>, vector<16x32xf32>, vector<32x32xf32> -> vector<32x32xf32>
    %c0_23 = arith.constant 0 : index
    %c0_24 = arith.constant 0 : index
    %c0_25 = arith.constant 0 : index
    %42 = vector.load %arg4[%c0_23, %c0_24, %c0_25] : memref<3x16x32xf32, #tpu.memory_space<vmem>>, vector<1x16x32xf32>
    %43 = vector.shape_cast %42 : vector<1x16x32xf32> to vector<16x32xf32>
    %cst_26 = arith.constant dense<0.000000e+00> : vector<32x32xf32>
    %44 = tpu.matmul %38, %43, %cst_26 {dimension_numbers = #tpu.dot_dimension_numbers<[1], [0], [0], [1], [0, 0, 1, 1], [], []>} : vector<32x16xf32>, vector<16x32xf32>, vector<32x32xf32> -> vector<32x32xf32>
    %c2_27 = arith.constant 2 : index
    %c0_28 = arith.constant 0 : index
    %c0_29 = arith.constant 0 : index
    %45 = vector.load %arg4[%c2_27, %c0_28, %c0_29] : memref<3x16x32xf32, #tpu.memory_space<vmem>>, vector<1x16x32xf32>
    %46 = vector.shape_cast %45 : vector<1x16x32xf32> to vector<16x32xf32>
    %cst_30 = arith.constant dense<0.000000e+00> : vector<32x32xf32>
    %47 = tpu.matmul %38, %46, %cst_30 {dimension_numbers = #tpu.dot_dimension_numbers<[1], [0], [0], [1], [0, 0, 1, 1], [], []>} : vector<32x16xf32>, vector<16x32xf32>, vector<32x32xf32> -> vector<32x32xf32>
    %c2_i32_31 = arith.constant 2 : i32
    %48 = tpu.dynamic_rotate %44 by %c2_i32_31 dim 0 : vector<32x32xf32>, i32 -> vector<32x32xf32>
    %49 = vector.broadcast %4 : vector<32x1xf32> to vector<32x32xf32>
    %50 = arith.mulf %48, %49 : vector<32x32xf32>
    %c30_i32_32 = arith.constant 30 : i32
    %51 = tpu.dynamic_rotate %47 by %c30_i32_32 dim 0 : vector<32x32xf32>, i32 -> vector<32x32xf32>
    %52 = vector.broadcast %8 : vector<32x1xf32> to vector<32x32xf32>
    %53 = arith.mulf %51, %52 : vector<32x32xf32>
    %54 = arith.addf %41, %50 : vector<32x32xf32>
    %55 = arith.addf %54, %53 : vector<32x32xf32>
    %c0_33 = arith.constant 0 : index
    %c0_34 = arith.constant 0 : index
    %56 = vector.load %arg5[%c0_33, %c0_34] : memref<1x32xf32, #tpu.memory_space<vmem>>, vector<1x32xf32>
    %57 = vector.broadcast %56 : vector<1x32xf32> to vector<32x32xf32>
    %58 = arith.addf %55, %57 : vector<32x32xf32>
    %cst_35 = arith.constant 0.000000e+00 : f32
    %59 = vector.broadcast %cst_35 : f32 to vector<32x32xf32>
    %60 = arith.cmpf ogt, %58, %59 : vector<32x32xf32>
    %cst_36 = arith.constant 3.000000e-01 : f32
    %61 = vector.broadcast %cst_36 : f32 to vector<32x32xf32>
    %62 = arith.mulf %61, %58 : vector<32x32xf32>
    %63 = arith.select %60, %58, %62 : vector<32x32xi1>, vector<32x32xf32>
    %c1_37 = arith.constant 1 : index
    %c0_38 = arith.constant 0 : index
    %c0_39 = arith.constant 0 : index
    %64 = vector.load %arg6[%c1_37, %c0_38, %c0_39] : memref<3x32x32xf32, #tpu.memory_space<vmem>>, vector<1x32x32xf32>
    %65 = vector.shape_cast %64 : vector<1x32x32xf32> to vector<32x32xf32>
    %cst_40 = arith.constant dense<0.000000e+00> : vector<32x32xf32>
    %66 = tpu.matmul %63, %65, %cst_40 {dimension_numbers = #tpu.dot_dimension_numbers<[1], [0], [0], [1], [0, 0, 1, 1], [], []>} : vector<32x32xf32>, vector<32x32xf32>, vector<32x32xf32> -> vector<32x32xf32>
    %c0_41 = arith.constant 0 : index
    %c0_42 = arith.constant 0 : index
    %c0_43 = arith.constant 0 : index
    %67 = vector.load %arg6[%c0_41, %c0_42, %c0_43] : memref<3x32x32xf32, #tpu.memory_space<vmem>>, vector<1x32x32xf32>
    %68 = vector.shape_cast %67 : vector<1x32x32xf32> to vector<32x32xf32>
    %cst_44 = arith.constant dense<0.000000e+00> : vector<32x32xf32>
    %69 = tpu.matmul %63, %68, %cst_44 {dimension_numbers = #tpu.dot_dimension_numbers<[1], [0], [0], [1], [0, 0, 1, 1], [], []>} : vector<32x32xf32>, vector<32x32xf32>, vector<32x32xf32> -> vector<32x32xf32>
    %c2_45 = arith.constant 2 : index
    %c0_46 = arith.constant 0 : index
    %c0_47 = arith.constant 0 : index
    %70 = vector.load %arg6[%c2_45, %c0_46, %c0_47] : memref<3x32x32xf32, #tpu.memory_space<vmem>>, vector<1x32x32xf32>
    %71 = vector.shape_cast %70 : vector<1x32x32xf32> to vector<32x32xf32>
    %cst_48 = arith.constant dense<0.000000e+00> : vector<32x32xf32>
    %72 = tpu.matmul %63, %71, %cst_48 {dimension_numbers = #tpu.dot_dimension_numbers<[1], [0], [0], [1], [0, 0, 1, 1], [], []>} : vector<32x32xf32>, vector<32x32xf32>, vector<32x32xf32> -> vector<32x32xf32>
    %c2_i32_49 = arith.constant 2 : i32
    %73 = tpu.dynamic_rotate %69 by %c2_i32_49 dim 0 : vector<32x32xf32>, i32 -> vector<32x32xf32>
    %74 = vector.broadcast %4 : vector<32x1xf32> to vector<32x32xf32>
    %75 = arith.mulf %73, %74 : vector<32x32xf32>
    %c30_i32_50 = arith.constant 30 : i32
    %76 = tpu.dynamic_rotate %72 by %c30_i32_50 dim 0 : vector<32x32xf32>, i32 -> vector<32x32xf32>
    %77 = vector.broadcast %8 : vector<32x1xf32> to vector<32x32xf32>
    %78 = arith.mulf %76, %77 : vector<32x32xf32>
    %79 = arith.addf %66, %75 : vector<32x32xf32>
    %80 = arith.addf %79, %78 : vector<32x32xf32>
    %c0_51 = arith.constant 0 : index
    %c0_52 = arith.constant 0 : index
    %81 = vector.load %arg7[%c0_51, %c0_52] : memref<1x32xf32, #tpu.memory_space<vmem>>, vector<1x32xf32>
    %82 = vector.broadcast %81 : vector<1x32xf32> to vector<32x32xf32>
    %83 = arith.addf %80, %82 : vector<32x32xf32>
    %cst_53 = arith.constant 0.000000e+00 : f32
    %84 = vector.broadcast %cst_53 : f32 to vector<32x32xf32>
    %85 = arith.cmpf ogt, %83, %84 : vector<32x32xf32>
    %cst_54 = arith.constant 3.000000e-01 : f32
    %86 = vector.broadcast %cst_54 : f32 to vector<32x32xf32>
    %87 = arith.mulf %86, %83 : vector<32x32xf32>
    %88 = arith.select %85, %83, %87 : vector<32x32xi1>, vector<32x32xf32>
    %c0_55 = arith.constant 0 : index
    %c0_56 = arith.constant 0 : index
    %89 = vector.load %arg8[%c0_55, %c0_56] : memref<32x128xf32, #tpu.memory_space<vmem>>, vector<32x128xf32>
    %cst_57 = arith.constant dense<0.000000e+00> : vector<32x128xf32>
    %90 = tpu.matmul %88, %89, %cst_57 {dimension_numbers = #tpu.dot_dimension_numbers<[1], [0], [0], [1], [0, 0, 1, 1], [], []>} : vector<32x32xf32>, vector<32x128xf32>, vector<32x128xf32> -> vector<32x128xf32>
    %c0_58 = arith.constant 0 : index
    %c0_59 = arith.constant 0 : index
    %91 = vector.load %arg10[%c0_58, %c0_59] : memref<1x128xf32, #tpu.memory_space<vmem>>, vector<1x128xf32>
    %92 = vector.broadcast %91 : vector<1x128xf32> to vector<32x128xf32>
    %93 = arith.addf %90, %92 : vector<32x128xf32>
    %c0_60 = arith.constant 0 : index
    %c0_61 = arith.constant 0 : index
    %94 = vector.load %arg9[%c0_60, %c0_61] : memref<32x128xf32, #tpu.memory_space<vmem>>, vector<32x128xf32>
    %cst_62 = arith.constant 0.000000e+00 : f32
    %95 = vector.broadcast %cst_62 : f32 to vector<2x32xf32>
    %cst_63 = arith.constant 0.000000e+00 : f32
    %96 = vector.broadcast %cst_63 : f32 to vector<2x32xf32>
    %cst_64 = arith.constant 0.000000e+00 : f32
    %97 = vector.broadcast %cst_64 : f32 to vector<2x32xf32>
    %98 = vector.extract_strided_slice %93 {offsets = [0, 0], sizes = [2, 128], strides = [1, 1]} : vector<32x128xf32> to vector<2x128xf32>
    %cst_65 = arith.constant dense<0.000000e+00> : vector<2x128xf32>
    %99 = tpu.matmul %95, %94, %cst_65 {dimension_numbers = #tpu.dot_dimension_numbers<[1], [0], [0], [1], [0, 0, 1, 1], [], []>} : vector<2x32xf32>, vector<32x128xf32>, vector<2x128xf32> -> vector<2x128xf32>
    %100 = arith.addf %98, %99 : vector<2x128xf32>
    %101 = vector.extract_strided_slice %100 {offsets = [0, 0], sizes = [2, 32], strides = [1, 1]} : vector<2x128xf32> to vector<2x32xf32>
    %102 = arith.negf %101 : vector<2x32xf32>
    %103 = math.exp %102 : vector<2x32xf32>
    %cst_66 = arith.constant 1.000000e+00 : f32
    %104 = vector.broadcast %cst_66 : f32 to vector<2x32xf32>
    %105 = arith.addf %104, %103 : vector<2x32xf32>
    %106 = arith.divf %104, %105 : vector<2x32xf32>
    %107 = vector.extract_strided_slice %100 {offsets = [0, 32], sizes = [2, 32], strides = [1, 1]} : vector<2x128xf32> to vector<2x32xf32>
    %108 = arith.negf %107 : vector<2x32xf32>
    %109 = math.exp %108 : vector<2x32xf32>
    %cst_67 = arith.constant 1.000000e+00 : f32
    %110 = vector.broadcast %cst_67 : f32 to vector<2x32xf32>
    %111 = arith.addf %110, %109 : vector<2x32xf32>
    %112 = arith.divf %110, %111 : vector<2x32xf32>
    %113 = vector.extract_strided_slice %100 {offsets = [0, 64], sizes = [2, 32], strides = [1, 1]} : vector<2x128xf32> to vector<2x32xf32>
    %114 = math.tanh %113 : vector<2x32xf32>
    %115 = vector.extract_strided_slice %100 {offsets = [0, 96], sizes = [2, 32], strides = [1, 1]} : vector<2x128xf32> to vector<2x32xf32>
    %116 = arith.negf %115 : vector<2x32xf32>
    %117 = math.exp %116 : vector<2x32xf32>
    %cst_68 = arith.constant 1.000000e+00 : f32
    %118 = vector.broadcast %cst_68 : f32 to vector<2x32xf32>
    %119 = arith.addf %118, %117 : vector<2x32xf32>
    %120 = arith.divf %118, %119 : vector<2x32xf32>
    %121 = arith.mulf %112, %96 : vector<2x32xf32>
    %122 = arith.mulf %106, %114 : vector<2x32xf32>
    %123 = arith.addf %121, %122 : vector<2x32xf32>
    %124 = math.tanh %123 : vector<2x32xf32>
    %125 = arith.mulf %120, %124 : vector<2x32xf32>
    %126 = arith.addf %97, %125 : vector<2x32xf32>
    %127 = vector.extract_strided_slice %93 {offsets = [2, 0], sizes = [2, 128], strides = [1, 1]} : vector<32x128xf32> to vector<2x128xf32>
    %cst_69 = arith.constant dense<0.000000e+00> : vector<2x128xf32>
    %128 = tpu.matmul %125, %94, %cst_69 {dimension_numbers = #tpu.dot_dimension_numbers<[1], [0], [0], [1], [0, 0, 1, 1], [], []>} : vector<2x32xf32>, vector<32x128xf32>, vector<2x128xf32> -> vector<2x128xf32>
    %129 = arith.addf %127, %128 : vector<2x128xf32>
    %130 = vector.extract_strided_slice %129 {offsets = [0, 0], sizes = [2, 32], strides = [1, 1]} : vector<2x128xf32> to vector<2x32xf32>
    %131 = arith.negf %130 : vector<2x32xf32>
    %132 = math.exp %131 : vector<2x32xf32>
    %cst_70 = arith.constant 1.000000e+00 : f32
    %133 = vector.broadcast %cst_70 : f32 to vector<2x32xf32>
    %134 = arith.addf %133, %132 : vector<2x32xf32>
    %135 = arith.divf %133, %134 : vector<2x32xf32>
    %136 = vector.extract_strided_slice %129 {offsets = [0, 32], sizes = [2, 32], strides = [1, 1]} : vector<2x128xf32> to vector<2x32xf32>
    %137 = arith.negf %136 : vector<2x32xf32>
    %138 = math.exp %137 : vector<2x32xf32>
    %cst_71 = arith.constant 1.000000e+00 : f32
    %139 = vector.broadcast %cst_71 : f32 to vector<2x32xf32>
    %140 = arith.addf %139, %138 : vector<2x32xf32>
    %141 = arith.divf %139, %140 : vector<2x32xf32>
    %142 = vector.extract_strided_slice %129 {offsets = [0, 64], sizes = [2, 32], strides = [1, 1]} : vector<2x128xf32> to vector<2x32xf32>
    %143 = math.tanh %142 : vector<2x32xf32>
    %144 = vector.extract_strided_slice %129 {offsets = [0, 96], sizes = [2, 32], strides = [1, 1]} : vector<2x128xf32> to vector<2x32xf32>
    %145 = arith.negf %144 : vector<2x32xf32>
    %146 = math.exp %145 : vector<2x32xf32>
    %cst_72 = arith.constant 1.000000e+00 : f32
    %147 = vector.broadcast %cst_72 : f32 to vector<2x32xf32>
    %148 = arith.addf %147, %146 : vector<2x32xf32>
    %149 = arith.divf %147, %148 : vector<2x32xf32>
    %150 = arith.mulf %141, %123 : vector<2x32xf32>
    %151 = arith.mulf %135, %143 : vector<2x32xf32>
    %152 = arith.addf %150, %151 : vector<2x32xf32>
    %153 = math.tanh %152 : vector<2x32xf32>
    %154 = arith.mulf %149, %153 : vector<2x32xf32>
    %155 = arith.addf %126, %154 : vector<2x32xf32>
    %156 = vector.extract_strided_slice %93 {offsets = [4, 0], sizes = [2, 128], strides = [1, 1]} : vector<32x128xf32> to vector<2x128xf32>
    %cst_73 = arith.constant dense<0.000000e+00> : vector<2x128xf32>
    %157 = tpu.matmul %154, %94, %cst_73 {dimension_numbers = #tpu.dot_dimension_numbers<[1], [0], [0], [1], [0, 0, 1, 1], [], []>} : vector<2x32xf32>, vector<32x128xf32>, vector<2x128xf32> -> vector<2x128xf32>
    %158 = arith.addf %156, %157 : vector<2x128xf32>
    %159 = vector.extract_strided_slice %158 {offsets = [0, 0], sizes = [2, 32], strides = [1, 1]} : vector<2x128xf32> to vector<2x32xf32>
    %160 = arith.negf %159 : vector<2x32xf32>
    %161 = math.exp %160 : vector<2x32xf32>
    %cst_74 = arith.constant 1.000000e+00 : f32
    %162 = vector.broadcast %cst_74 : f32 to vector<2x32xf32>
    %163 = arith.addf %162, %161 : vector<2x32xf32>
    %164 = arith.divf %162, %163 : vector<2x32xf32>
    %165 = vector.extract_strided_slice %158 {offsets = [0, 32], sizes = [2, 32], strides = [1, 1]} : vector<2x128xf32> to vector<2x32xf32>
    %166 = arith.negf %165 : vector<2x32xf32>
    %167 = math.exp %166 : vector<2x32xf32>
    %cst_75 = arith.constant 1.000000e+00 : f32
    %168 = vector.broadcast %cst_75 : f32 to vector<2x32xf32>
    %169 = arith.addf %168, %167 : vector<2x32xf32>
    %170 = arith.divf %168, %169 : vector<2x32xf32>
    %171 = vector.extract_strided_slice %158 {offsets = [0, 64], sizes = [2, 32], strides = [1, 1]} : vector<2x128xf32> to vector<2x32xf32>
    %172 = math.tanh %171 : vector<2x32xf32>
    %173 = vector.extract_strided_slice %158 {offsets = [0, 96], sizes = [2, 32], strides = [1, 1]} : vector<2x128xf32> to vector<2x32xf32>
    %174 = arith.negf %173 : vector<2x32xf32>
    %175 = math.exp %174 : vector<2x32xf32>
    %cst_76 = arith.constant 1.000000e+00 : f32
    %176 = vector.broadcast %cst_76 : f32 to vector<2x32xf32>
    %177 = arith.addf %176, %175 : vector<2x32xf32>
    %178 = arith.divf %176, %177 : vector<2x32xf32>
    %179 = arith.mulf %170, %152 : vector<2x32xf32>
    %180 = arith.mulf %164, %172 : vector<2x32xf32>
    %181 = arith.addf %179, %180 : vector<2x32xf32>
    %182 = math.tanh %181 : vector<2x32xf32>
    %183 = arith.mulf %178, %182 : vector<2x32xf32>
    %184 = arith.addf %155, %183 : vector<2x32xf32>
    %185 = vector.extract_strided_slice %93 {offsets = [6, 0], sizes = [2, 128], strides = [1, 1]} : vector<32x128xf32> to vector<2x128xf32>
    %cst_77 = arith.constant dense<0.000000e+00> : vector<2x128xf32>
    %186 = tpu.matmul %183, %94, %cst_77 {dimension_numbers = #tpu.dot_dimension_numbers<[1], [0], [0], [1], [0, 0, 1, 1], [], []>} : vector<2x32xf32>, vector<32x128xf32>, vector<2x128xf32> -> vector<2x128xf32>
    %187 = arith.addf %185, %186 : vector<2x128xf32>
    %188 = vector.extract_strided_slice %187 {offsets = [0, 0], sizes = [2, 32], strides = [1, 1]} : vector<2x128xf32> to vector<2x32xf32>
    %189 = arith.negf %188 : vector<2x32xf32>
    %190 = math.exp %189 : vector<2x32xf32>
    %cst_78 = arith.constant 1.000000e+00 : f32
    %191 = vector.broadcast %cst_78 : f32 to vector<2x32xf32>
    %192 = arith.addf %191, %190 : vector<2x32xf32>
    %193 = arith.divf %191, %192 : vector<2x32xf32>
    %194 = vector.extract_strided_slice %187 {offsets = [0, 32], sizes = [2, 32], strides = [1, 1]} : vector<2x128xf32> to vector<2x32xf32>
    %195 = arith.negf %194 : vector<2x32xf32>
    %196 = math.exp %195 : vector<2x32xf32>
    %cst_79 = arith.constant 1.000000e+00 : f32
    %197 = vector.broadcast %cst_79 : f32 to vector<2x32xf32>
    %198 = arith.addf %197, %196 : vector<2x32xf32>
    %199 = arith.divf %197, %198 : vector<2x32xf32>
    %200 = vector.extract_strided_slice %187 {offsets = [0, 64], sizes = [2, 32], strides = [1, 1]} : vector<2x128xf32> to vector<2x32xf32>
    %201 = math.tanh %200 : vector<2x32xf32>
    %202 = vector.extract_strided_slice %187 {offsets = [0, 96], sizes = [2, 32], strides = [1, 1]} : vector<2x128xf32> to vector<2x32xf32>
    %203 = arith.negf %202 : vector<2x32xf32>
    %204 = math.exp %203 : vector<2x32xf32>
    %cst_80 = arith.constant 1.000000e+00 : f32
    %205 = vector.broadcast %cst_80 : f32 to vector<2x32xf32>
    %206 = arith.addf %205, %204 : vector<2x32xf32>
    %207 = arith.divf %205, %206 : vector<2x32xf32>
    %208 = arith.mulf %199, %181 : vector<2x32xf32>
    %209 = arith.mulf %193, %201 : vector<2x32xf32>
    %210 = arith.addf %208, %209 : vector<2x32xf32>
    %211 = math.tanh %210 : vector<2x32xf32>
    %212 = arith.mulf %207, %211 : vector<2x32xf32>
    %213 = arith.addf %184, %212 : vector<2x32xf32>
    %214 = vector.extract_strided_slice %93 {offsets = [8, 0], sizes = [2, 128], strides = [1, 1]} : vector<32x128xf32> to vector<2x128xf32>
    %cst_81 = arith.constant dense<0.000000e+00> : vector<2x128xf32>
    %215 = tpu.matmul %212, %94, %cst_81 {dimension_numbers = #tpu.dot_dimension_numbers<[1], [0], [0], [1], [0, 0, 1, 1], [], []>} : vector<2x32xf32>, vector<32x128xf32>, vector<2x128xf32> -> vector<2x128xf32>
    %216 = arith.addf %214, %215 : vector<2x128xf32>
    %217 = vector.extract_strided_slice %216 {offsets = [0, 0], sizes = [2, 32], strides = [1, 1]} : vector<2x128xf32> to vector<2x32xf32>
    %218 = arith.negf %217 : vector<2x32xf32>
    %219 = math.exp %218 : vector<2x32xf32>
    %cst_82 = arith.constant 1.000000e+00 : f32
    %220 = vector.broadcast %cst_82 : f32 to vector<2x32xf32>
    %221 = arith.addf %220, %219 : vector<2x32xf32>
    %222 = arith.divf %220, %221 : vector<2x32xf32>
    %223 = vector.extract_strided_slice %216 {offsets = [0, 32], sizes = [2, 32], strides = [1, 1]} : vector<2x128xf32> to vector<2x32xf32>
    %224 = arith.negf %223 : vector<2x32xf32>
    %225 = math.exp %224 : vector<2x32xf32>
    %cst_83 = arith.constant 1.000000e+00 : f32
    %226 = vector.broadcast %cst_83 : f32 to vector<2x32xf32>
    %227 = arith.addf %226, %225 : vector<2x32xf32>
    %228 = arith.divf %226, %227 : vector<2x32xf32>
    %229 = vector.extract_strided_slice %216 {offsets = [0, 64], sizes = [2, 32], strides = [1, 1]} : vector<2x128xf32> to vector<2x32xf32>
    %230 = math.tanh %229 : vector<2x32xf32>
    %231 = vector.extract_strided_slice %216 {offsets = [0, 96], sizes = [2, 32], strides = [1, 1]} : vector<2x128xf32> to vector<2x32xf32>
    %232 = arith.negf %231 : vector<2x32xf32>
    %233 = math.exp %232 : vector<2x32xf32>
    %cst_84 = arith.constant 1.000000e+00 : f32
    %234 = vector.broadcast %cst_84 : f32 to vector<2x32xf32>
    %235 = arith.addf %234, %233 : vector<2x32xf32>
    %236 = arith.divf %234, %235 : vector<2x32xf32>
    %237 = arith.mulf %228, %210 : vector<2x32xf32>
    %238 = arith.mulf %222, %230 : vector<2x32xf32>
    %239 = arith.addf %237, %238 : vector<2x32xf32>
    %240 = math.tanh %239 : vector<2x32xf32>
    %241 = arith.mulf %236, %240 : vector<2x32xf32>
    %242 = arith.addf %213, %241 : vector<2x32xf32>
    %243 = vector.extract_strided_slice %93 {offsets = [10, 0], sizes = [2, 128], strides = [1, 1]} : vector<32x128xf32> to vector<2x128xf32>
    %cst_85 = arith.constant dense<0.000000e+00> : vector<2x128xf32>
    %244 = tpu.matmul %241, %94, %cst_85 {dimension_numbers = #tpu.dot_dimension_numbers<[1], [0], [0], [1], [0, 0, 1, 1], [], []>} : vector<2x32xf32>, vector<32x128xf32>, vector<2x128xf32> -> vector<2x128xf32>
    %245 = arith.addf %243, %244 : vector<2x128xf32>
    %246 = vector.extract_strided_slice %245 {offsets = [0, 0], sizes = [2, 32], strides = [1, 1]} : vector<2x128xf32> to vector<2x32xf32>
    %247 = arith.negf %246 : vector<2x32xf32>
    %248 = math.exp %247 : vector<2x32xf32>
    %cst_86 = arith.constant 1.000000e+00 : f32
    %249 = vector.broadcast %cst_86 : f32 to vector<2x32xf32>
    %250 = arith.addf %249, %248 : vector<2x32xf32>
    %251 = arith.divf %249, %250 : vector<2x32xf32>
    %252 = vector.extract_strided_slice %245 {offsets = [0, 32], sizes = [2, 32], strides = [1, 1]} : vector<2x128xf32> to vector<2x32xf32>
    %253 = arith.negf %252 : vector<2x32xf32>
    %254 = math.exp %253 : vector<2x32xf32>
    %cst_87 = arith.constant 1.000000e+00 : f32
    %255 = vector.broadcast %cst_87 : f32 to vector<2x32xf32>
    %256 = arith.addf %255, %254 : vector<2x32xf32>
    %257 = arith.divf %255, %256 : vector<2x32xf32>
    %258 = vector.extract_strided_slice %245 {offsets = [0, 64], sizes = [2, 32], strides = [1, 1]} : vector<2x128xf32> to vector<2x32xf32>
    %259 = math.tanh %258 : vector<2x32xf32>
    %260 = vector.extract_strided_slice %245 {offsets = [0, 96], sizes = [2, 32], strides = [1, 1]} : vector<2x128xf32> to vector<2x32xf32>
    %261 = arith.negf %260 : vector<2x32xf32>
    %262 = math.exp %261 : vector<2x32xf32>
    %cst_88 = arith.constant 1.000000e+00 : f32
    %263 = vector.broadcast %cst_88 : f32 to vector<2x32xf32>
    %264 = arith.addf %263, %262 : vector<2x32xf32>
    %265 = arith.divf %263, %264 : vector<2x32xf32>
    %266 = arith.mulf %257, %239 : vector<2x32xf32>
    %267 = arith.mulf %251, %259 : vector<2x32xf32>
    %268 = arith.addf %266, %267 : vector<2x32xf32>
    %269 = math.tanh %268 : vector<2x32xf32>
    %270 = arith.mulf %265, %269 : vector<2x32xf32>
    %271 = arith.addf %242, %270 : vector<2x32xf32>
    %272 = vector.extract_strided_slice %93 {offsets = [12, 0], sizes = [2, 128], strides = [1, 1]} : vector<32x128xf32> to vector<2x128xf32>
    %cst_89 = arith.constant dense<0.000000e+00> : vector<2x128xf32>
    %273 = tpu.matmul %270, %94, %cst_89 {dimension_numbers = #tpu.dot_dimension_numbers<[1], [0], [0], [1], [0, 0, 1, 1], [], []>} : vector<2x32xf32>, vector<32x128xf32>, vector<2x128xf32> -> vector<2x128xf32>
    %274 = arith.addf %272, %273 : vector<2x128xf32>
    %275 = vector.extract_strided_slice %274 {offsets = [0, 0], sizes = [2, 32], strides = [1, 1]} : vector<2x128xf32> to vector<2x32xf32>
    %276 = arith.negf %275 : vector<2x32xf32>
    %277 = math.exp %276 : vector<2x32xf32>
    %cst_90 = arith.constant 1.000000e+00 : f32
    %278 = vector.broadcast %cst_90 : f32 to vector<2x32xf32>
    %279 = arith.addf %278, %277 : vector<2x32xf32>
    %280 = arith.divf %278, %279 : vector<2x32xf32>
    %281 = vector.extract_strided_slice %274 {offsets = [0, 32], sizes = [2, 32], strides = [1, 1]} : vector<2x128xf32> to vector<2x32xf32>
    %282 = arith.negf %281 : vector<2x32xf32>
    %283 = math.exp %282 : vector<2x32xf32>
    %cst_91 = arith.constant 1.000000e+00 : f32
    %284 = vector.broadcast %cst_91 : f32 to vector<2x32xf32>
    %285 = arith.addf %284, %283 : vector<2x32xf32>
    %286 = arith.divf %284, %285 : vector<2x32xf32>
    %287 = vector.extract_strided_slice %274 {offsets = [0, 64], sizes = [2, 32], strides = [1, 1]} : vector<2x128xf32> to vector<2x32xf32>
    %288 = math.tanh %287 : vector<2x32xf32>
    %289 = vector.extract_strided_slice %274 {offsets = [0, 96], sizes = [2, 32], strides = [1, 1]} : vector<2x128xf32> to vector<2x32xf32>
    %290 = arith.negf %289 : vector<2x32xf32>
    %291 = math.exp %290 : vector<2x32xf32>
    %cst_92 = arith.constant 1.000000e+00 : f32
    %292 = vector.broadcast %cst_92 : f32 to vector<2x32xf32>
    %293 = arith.addf %292, %291 : vector<2x32xf32>
    %294 = arith.divf %292, %293 : vector<2x32xf32>
    %295 = arith.mulf %286, %268 : vector<2x32xf32>
    %296 = arith.mulf %280, %288 : vector<2x32xf32>
    %297 = arith.addf %295, %296 : vector<2x32xf32>
    %298 = math.tanh %297 : vector<2x32xf32>
    %299 = arith.mulf %294, %298 : vector<2x32xf32>
    %300 = arith.addf %271, %299 : vector<2x32xf32>
    %301 = vector.extract_strided_slice %93 {offsets = [14, 0], sizes = [2, 128], strides = [1, 1]} : vector<32x128xf32> to vector<2x128xf32>
    %cst_93 = arith.constant dense<0.000000e+00> : vector<2x128xf32>
    %302 = tpu.matmul %299, %94, %cst_93 {dimension_numbers = #tpu.dot_dimension_numbers<[1], [0], [0], [1], [0, 0, 1, 1], [], []>} : vector<2x32xf32>, vector<32x128xf32>, vector<2x128xf32> -> vector<2x128xf32>
    %303 = arith.addf %301, %302 : vector<2x128xf32>
    %304 = vector.extract_strided_slice %303 {offsets = [0, 0], sizes = [2, 32], strides = [1, 1]} : vector<2x128xf32> to vector<2x32xf32>
    %305 = arith.negf %304 : vector<2x32xf32>
    %306 = math.exp %305 : vector<2x32xf32>
    %cst_94 = arith.constant 1.000000e+00 : f32
    %307 = vector.broadcast %cst_94 : f32 to vector<2x32xf32>
    %308 = arith.addf %307, %306 : vector<2x32xf32>
    %309 = arith.divf %307, %308 : vector<2x32xf32>
    %310 = vector.extract_strided_slice %303 {offsets = [0, 32], sizes = [2, 32], strides = [1, 1]} : vector<2x128xf32> to vector<2x32xf32>
    %311 = arith.negf %310 : vector<2x32xf32>
    %312 = math.exp %311 : vector<2x32xf32>
    %cst_95 = arith.constant 1.000000e+00 : f32
    %313 = vector.broadcast %cst_95 : f32 to vector<2x32xf32>
    %314 = arith.addf %313, %312 : vector<2x32xf32>
    %315 = arith.divf %313, %314 : vector<2x32xf32>
    %316 = vector.extract_strided_slice %303 {offsets = [0, 64], sizes = [2, 32], strides = [1, 1]} : vector<2x128xf32> to vector<2x32xf32>
    %317 = math.tanh %316 : vector<2x32xf32>
    %318 = vector.extract_strided_slice %303 {offsets = [0, 96], sizes = [2, 32], strides = [1, 1]} : vector<2x128xf32> to vector<2x32xf32>
    %319 = arith.negf %318 : vector<2x32xf32>
    %320 = math.exp %319 : vector<2x32xf32>
    %cst_96 = arith.constant 1.000000e+00 : f32
    %321 = vector.broadcast %cst_96 : f32 to vector<2x32xf32>
    %322 = arith.addf %321, %320 : vector<2x32xf32>
    %323 = arith.divf %321, %322 : vector<2x32xf32>
    %324 = arith.mulf %315, %297 : vector<2x32xf32>
    %325 = arith.mulf %309, %317 : vector<2x32xf32>
    %326 = arith.addf %324, %325 : vector<2x32xf32>
    %327 = math.tanh %326 : vector<2x32xf32>
    %328 = arith.mulf %323, %327 : vector<2x32xf32>
    %329 = arith.addf %300, %328 : vector<2x32xf32>
    %330 = vector.extract_strided_slice %93 {offsets = [16, 0], sizes = [2, 128], strides = [1, 1]} : vector<32x128xf32> to vector<2x128xf32>
    %cst_97 = arith.constant dense<0.000000e+00> : vector<2x128xf32>
    %331 = tpu.matmul %328, %94, %cst_97 {dimension_numbers = #tpu.dot_dimension_numbers<[1], [0], [0], [1], [0, 0, 1, 1], [], []>} : vector<2x32xf32>, vector<32x128xf32>, vector<2x128xf32> -> vector<2x128xf32>
    %332 = arith.addf %330, %331 : vector<2x128xf32>
    %333 = vector.extract_strided_slice %332 {offsets = [0, 0], sizes = [2, 32], strides = [1, 1]} : vector<2x128xf32> to vector<2x32xf32>
    %334 = arith.negf %333 : vector<2x32xf32>
    %335 = math.exp %334 : vector<2x32xf32>
    %cst_98 = arith.constant 1.000000e+00 : f32
    %336 = vector.broadcast %cst_98 : f32 to vector<2x32xf32>
    %337 = arith.addf %336, %335 : vector<2x32xf32>
    %338 = arith.divf %336, %337 : vector<2x32xf32>
    %339 = vector.extract_strided_slice %332 {offsets = [0, 32], sizes = [2, 32], strides = [1, 1]} : vector<2x128xf32> to vector<2x32xf32>
    %340 = arith.negf %339 : vector<2x32xf32>
    %341 = math.exp %340 : vector<2x32xf32>
    %cst_99 = arith.constant 1.000000e+00 : f32
    %342 = vector.broadcast %cst_99 : f32 to vector<2x32xf32>
    %343 = arith.addf %342, %341 : vector<2x32xf32>
    %344 = arith.divf %342, %343 : vector<2x32xf32>
    %345 = vector.extract_strided_slice %332 {offsets = [0, 64], sizes = [2, 32], strides = [1, 1]} : vector<2x128xf32> to vector<2x32xf32>
    %346 = math.tanh %345 : vector<2x32xf32>
    %347 = vector.extract_strided_slice %332 {offsets = [0, 96], sizes = [2, 32], strides = [1, 1]} : vector<2x128xf32> to vector<2x32xf32>
    %348 = arith.negf %347 : vector<2x32xf32>
    %349 = math.exp %348 : vector<2x32xf32>
    %cst_100 = arith.constant 1.000000e+00 : f32
    %350 = vector.broadcast %cst_100 : f32 to vector<2x32xf32>
    %351 = arith.addf %350, %349 : vector<2x32xf32>
    %352 = arith.divf %350, %351 : vector<2x32xf32>
    %353 = arith.mulf %344, %326 : vector<2x32xf32>
    %354 = arith.mulf %338, %346 : vector<2x32xf32>
    %355 = arith.addf %353, %354 : vector<2x32xf32>
    %356 = math.tanh %355 : vector<2x32xf32>
    %357 = arith.mulf %352, %356 : vector<2x32xf32>
    %358 = arith.addf %329, %357 : vector<2x32xf32>
    %359 = vector.extract_strided_slice %93 {offsets = [18, 0], sizes = [2, 128], strides = [1, 1]} : vector<32x128xf32> to vector<2x128xf32>
    %cst_101 = arith.constant dense<0.000000e+00> : vector<2x128xf32>
    %360 = tpu.matmul %357, %94, %cst_101 {dimension_numbers = #tpu.dot_dimension_numbers<[1], [0], [0], [1], [0, 0, 1, 1], [], []>} : vector<2x32xf32>, vector<32x128xf32>, vector<2x128xf32> -> vector<2x128xf32>
    %361 = arith.addf %359, %360 : vector<2x128xf32>
    %362 = vector.extract_strided_slice %361 {offsets = [0, 0], sizes = [2, 32], strides = [1, 1]} : vector<2x128xf32> to vector<2x32xf32>
    %363 = arith.negf %362 : vector<2x32xf32>
    %364 = math.exp %363 : vector<2x32xf32>
    %cst_102 = arith.constant 1.000000e+00 : f32
    %365 = vector.broadcast %cst_102 : f32 to vector<2x32xf32>
    %366 = arith.addf %365, %364 : vector<2x32xf32>
    %367 = arith.divf %365, %366 : vector<2x32xf32>
    %368 = vector.extract_strided_slice %361 {offsets = [0, 32], sizes = [2, 32], strides = [1, 1]} : vector<2x128xf32> to vector<2x32xf32>
    %369 = arith.negf %368 : vector<2x32xf32>
    %370 = math.exp %369 : vector<2x32xf32>
    %cst_103 = arith.constant 1.000000e+00 : f32
    %371 = vector.broadcast %cst_103 : f32 to vector<2x32xf32>
    %372 = arith.addf %371, %370 : vector<2x32xf32>
    %373 = arith.divf %371, %372 : vector<2x32xf32>
    %374 = vector.extract_strided_slice %361 {offsets = [0, 64], sizes = [2, 32], strides = [1, 1]} : vector<2x128xf32> to vector<2x32xf32>
    %375 = math.tanh %374 : vector<2x32xf32>
    %376 = vector.extract_strided_slice %361 {offsets = [0, 96], sizes = [2, 32], strides = [1, 1]} : vector<2x128xf32> to vector<2x32xf32>
    %377 = arith.negf %376 : vector<2x32xf32>
    %378 = math.exp %377 : vector<2x32xf32>
    %cst_104 = arith.constant 1.000000e+00 : f32
    %379 = vector.broadcast %cst_104 : f32 to vector<2x32xf32>
    %380 = arith.addf %379, %378 : vector<2x32xf32>
    %381 = arith.divf %379, %380 : vector<2x32xf32>
    %382 = arith.mulf %373, %355 : vector<2x32xf32>
    %383 = arith.mulf %367, %375 : vector<2x32xf32>
    %384 = arith.addf %382, %383 : vector<2x32xf32>
    %385 = math.tanh %384 : vector<2x32xf32>
    %386 = arith.mulf %381, %385 : vector<2x32xf32>
    %387 = arith.addf %358, %386 : vector<2x32xf32>
    %388 = vector.extract_strided_slice %93 {offsets = [20, 0], sizes = [2, 128], strides = [1, 1]} : vector<32x128xf32> to vector<2x128xf32>
    %cst_105 = arith.constant dense<0.000000e+00> : vector<2x128xf32>
    %389 = tpu.matmul %386, %94, %cst_105 {dimension_numbers = #tpu.dot_dimension_numbers<[1], [0], [0], [1], [0, 0, 1, 1], [], []>} : vector<2x32xf32>, vector<32x128xf32>, vector<2x128xf32> -> vector<2x128xf32>
    %390 = arith.addf %388, %389 : vector<2x128xf32>
    %391 = vector.extract_strided_slice %390 {offsets = [0, 0], sizes = [2, 32], strides = [1, 1]} : vector<2x128xf32> to vector<2x32xf32>
    %392 = arith.negf %391 : vector<2x32xf32>
    %393 = math.exp %392 : vector<2x32xf32>
    %cst_106 = arith.constant 1.000000e+00 : f32
    %394 = vector.broadcast %cst_106 : f32 to vector<2x32xf32>
    %395 = arith.addf %394, %393 : vector<2x32xf32>
    %396 = arith.divf %394, %395 : vector<2x32xf32>
    %397 = vector.extract_strided_slice %390 {offsets = [0, 32], sizes = [2, 32], strides = [1, 1]} : vector<2x128xf32> to vector<2x32xf32>
    %398 = arith.negf %397 : vector<2x32xf32>
    %399 = math.exp %398 : vector<2x32xf32>
    %cst_107 = arith.constant 1.000000e+00 : f32
    %400 = vector.broadcast %cst_107 : f32 to vector<2x32xf32>
    %401 = arith.addf %400, %399 : vector<2x32xf32>
    %402 = arith.divf %400, %401 : vector<2x32xf32>
    %403 = vector.extract_strided_slice %390 {offsets = [0, 64], sizes = [2, 32], strides = [1, 1]} : vector<2x128xf32> to vector<2x32xf32>
    %404 = math.tanh %403 : vector<2x32xf32>
    %405 = vector.extract_strided_slice %390 {offsets = [0, 96], sizes = [2, 32], strides = [1, 1]} : vector<2x128xf32> to vector<2x32xf32>
    %406 = arith.negf %405 : vector<2x32xf32>
    %407 = math.exp %406 : vector<2x32xf32>
    %cst_108 = arith.constant 1.000000e+00 : f32
    %408 = vector.broadcast %cst_108 : f32 to vector<2x32xf32>
    %409 = arith.addf %408, %407 : vector<2x32xf32>
    %410 = arith.divf %408, %409 : vector<2x32xf32>
    %411 = arith.mulf %402, %384 : vector<2x32xf32>
    %412 = arith.mulf %396, %404 : vector<2x32xf32>
    %413 = arith.addf %411, %412 : vector<2x32xf32>
    %414 = math.tanh %413 : vector<2x32xf32>
    %415 = arith.mulf %410, %414 : vector<2x32xf32>
    %416 = arith.addf %387, %415 : vector<2x32xf32>
    %417 = vector.extract_strided_slice %93 {offsets = [22, 0], sizes = [2, 128], strides = [1, 1]} : vector<32x128xf32> to vector<2x128xf32>
    %cst_109 = arith.constant dense<0.000000e+00> : vector<2x128xf32>
    %418 = tpu.matmul %415, %94, %cst_109 {dimension_numbers = #tpu.dot_dimension_numbers<[1], [0], [0], [1], [0, 0, 1, 1], [], []>} : vector<2x32xf32>, vector<32x128xf32>, vector<2x128xf32> -> vector<2x128xf32>
    %419 = arith.addf %417, %418 : vector<2x128xf32>
    %420 = vector.extract_strided_slice %419 {offsets = [0, 0], sizes = [2, 32], strides = [1, 1]} : vector<2x128xf32> to vector<2x32xf32>
    %421 = arith.negf %420 : vector<2x32xf32>
    %422 = math.exp %421 : vector<2x32xf32>
    %cst_110 = arith.constant 1.000000e+00 : f32
    %423 = vector.broadcast %cst_110 : f32 to vector<2x32xf32>
    %424 = arith.addf %423, %422 : vector<2x32xf32>
    %425 = arith.divf %423, %424 : vector<2x32xf32>
    %426 = vector.extract_strided_slice %419 {offsets = [0, 32], sizes = [2, 32], strides = [1, 1]} : vector<2x128xf32> to vector<2x32xf32>
    %427 = arith.negf %426 : vector<2x32xf32>
    %428 = math.exp %427 : vector<2x32xf32>
    %cst_111 = arith.constant 1.000000e+00 : f32
    %429 = vector.broadcast %cst_111 : f32 to vector<2x32xf32>
    %430 = arith.addf %429, %428 : vector<2x32xf32>
    %431 = arith.divf %429, %430 : vector<2x32xf32>
    %432 = vector.extract_strided_slice %419 {offsets = [0, 64], sizes = [2, 32], strides = [1, 1]} : vector<2x128xf32> to vector<2x32xf32>
    %433 = math.tanh %432 : vector<2x32xf32>
    %434 = vector.extract_strided_slice %419 {offsets = [0, 96], sizes = [2, 32], strides = [1, 1]} : vector<2x128xf32> to vector<2x32xf32>
    %435 = arith.negf %434 : vector<2x32xf32>
    %436 = math.exp %435 : vector<2x32xf32>
    %cst_112 = arith.constant 1.000000e+00 : f32
    %437 = vector.broadcast %cst_112 : f32 to vector<2x32xf32>
    %438 = arith.addf %437, %436 : vector<2x32xf32>
    %439 = arith.divf %437, %438 : vector<2x32xf32>
    %440 = arith.mulf %431, %413 : vector<2x32xf32>
    %441 = arith.mulf %425, %433 : vector<2x32xf32>
    %442 = arith.addf %440, %441 : vector<2x32xf32>
    %443 = math.tanh %442 : vector<2x32xf32>
    %444 = arith.mulf %439, %443 : vector<2x32xf32>
    %445 = arith.addf %416, %444 : vector<2x32xf32>
    %446 = vector.extract_strided_slice %93 {offsets = [24, 0], sizes = [2, 128], strides = [1, 1]} : vector<32x128xf32> to vector<2x128xf32>
    %cst_113 = arith.constant dense<0.000000e+00> : vector<2x128xf32>
    %447 = tpu.matmul %444, %94, %cst_113 {dimension_numbers = #tpu.dot_dimension_numbers<[1], [0], [0], [1], [0, 0, 1, 1], [], []>} : vector<2x32xf32>, vector<32x128xf32>, vector<2x128xf32> -> vector<2x128xf32>
    %448 = arith.addf %446, %447 : vector<2x128xf32>
    %449 = vector.extract_strided_slice %448 {offsets = [0, 0], sizes = [2, 32], strides = [1, 1]} : vector<2x128xf32> to vector<2x32xf32>
    %450 = arith.negf %449 : vector<2x32xf32>
    %451 = math.exp %450 : vector<2x32xf32>
    %cst_114 = arith.constant 1.000000e+00 : f32
    %452 = vector.broadcast %cst_114 : f32 to vector<2x32xf32>
    %453 = arith.addf %452, %451 : vector<2x32xf32>
    %454 = arith.divf %452, %453 : vector<2x32xf32>
    %455 = vector.extract_strided_slice %448 {offsets = [0, 32], sizes = [2, 32], strides = [1, 1]} : vector<2x128xf32> to vector<2x32xf32>
    %456 = arith.negf %455 : vector<2x32xf32>
    %457 = math.exp %456 : vector<2x32xf32>
    %cst_115 = arith.constant 1.000000e+00 : f32
    %458 = vector.broadcast %cst_115 : f32 to vector<2x32xf32>
    %459 = arith.addf %458, %457 : vector<2x32xf32>
    %460 = arith.divf %458, %459 : vector<2x32xf32>
    %461 = vector.extract_strided_slice %448 {offsets = [0, 64], sizes = [2, 32], strides = [1, 1]} : vector<2x128xf32> to vector<2x32xf32>
    %462 = math.tanh %461 : vector<2x32xf32>
    %463 = vector.extract_strided_slice %448 {offsets = [0, 96], sizes = [2, 32], strides = [1, 1]} : vector<2x128xf32> to vector<2x32xf32>
    %464 = arith.negf %463 : vector<2x32xf32>
    %465 = math.exp %464 : vector<2x32xf32>
    %cst_116 = arith.constant 1.000000e+00 : f32
    %466 = vector.broadcast %cst_116 : f32 to vector<2x32xf32>
    %467 = arith.addf %466, %465 : vector<2x32xf32>
    %468 = arith.divf %466, %467 : vector<2x32xf32>
    %469 = arith.mulf %460, %442 : vector<2x32xf32>
    %470 = arith.mulf %454, %462 : vector<2x32xf32>
    %471 = arith.addf %469, %470 : vector<2x32xf32>
    %472 = math.tanh %471 : vector<2x32xf32>
    %473 = arith.mulf %468, %472 : vector<2x32xf32>
    %474 = arith.addf %445, %473 : vector<2x32xf32>
    %475 = vector.extract_strided_slice %93 {offsets = [26, 0], sizes = [2, 128], strides = [1, 1]} : vector<32x128xf32> to vector<2x128xf32>
    %cst_117 = arith.constant dense<0.000000e+00> : vector<2x128xf32>
    %476 = tpu.matmul %473, %94, %cst_117 {dimension_numbers = #tpu.dot_dimension_numbers<[1], [0], [0], [1], [0, 0, 1, 1], [], []>} : vector<2x32xf32>, vector<32x128xf32>, vector<2x128xf32> -> vector<2x128xf32>
    %477 = arith.addf %475, %476 : vector<2x128xf32>
    %478 = vector.extract_strided_slice %477 {offsets = [0, 0], sizes = [2, 32], strides = [1, 1]} : vector<2x128xf32> to vector<2x32xf32>
    %479 = arith.negf %478 : vector<2x32xf32>
    %480 = math.exp %479 : vector<2x32xf32>
    %cst_118 = arith.constant 1.000000e+00 : f32
    %481 = vector.broadcast %cst_118 : f32 to vector<2x32xf32>
    %482 = arith.addf %481, %480 : vector<2x32xf32>
    %483 = arith.divf %481, %482 : vector<2x32xf32>
    %484 = vector.extract_strided_slice %477 {offsets = [0, 32], sizes = [2, 32], strides = [1, 1]} : vector<2x128xf32> to vector<2x32xf32>
    %485 = arith.negf %484 : vector<2x32xf32>
    %486 = math.exp %485 : vector<2x32xf32>
    %cst_119 = arith.constant 1.000000e+00 : f32
    %487 = vector.broadcast %cst_119 : f32 to vector<2x32xf32>
    %488 = arith.addf %487, %486 : vector<2x32xf32>
    %489 = arith.divf %487, %488 : vector<2x32xf32>
    %490 = vector.extract_strided_slice %477 {offsets = [0, 64], sizes = [2, 32], strides = [1, 1]} : vector<2x128xf32> to vector<2x32xf32>
    %491 = math.tanh %490 : vector<2x32xf32>
    %492 = vector.extract_strided_slice %477 {offsets = [0, 96], sizes = [2, 32], strides = [1, 1]} : vector<2x128xf32> to vector<2x32xf32>
    %493 = arith.negf %492 : vector<2x32xf32>
    %494 = math.exp %493 : vector<2x32xf32>
    %cst_120 = arith.constant 1.000000e+00 : f32
    %495 = vector.broadcast %cst_120 : f32 to vector<2x32xf32>
    %496 = arith.addf %495, %494 : vector<2x32xf32>
    %497 = arith.divf %495, %496 : vector<2x32xf32>
    %498 = arith.mulf %489, %471 : vector<2x32xf32>
    %499 = arith.mulf %483, %491 : vector<2x32xf32>
    %500 = arith.addf %498, %499 : vector<2x32xf32>
    %501 = math.tanh %500 : vector<2x32xf32>
    %502 = arith.mulf %497, %501 : vector<2x32xf32>
    %503 = arith.addf %474, %502 : vector<2x32xf32>
    %504 = vector.extract_strided_slice %93 {offsets = [28, 0], sizes = [2, 128], strides = [1, 1]} : vector<32x128xf32> to vector<2x128xf32>
    %cst_121 = arith.constant dense<0.000000e+00> : vector<2x128xf32>
    %505 = tpu.matmul %502, %94, %cst_121 {dimension_numbers = #tpu.dot_dimension_numbers<[1], [0], [0], [1], [0, 0, 1, 1], [], []>} : vector<2x32xf32>, vector<32x128xf32>, vector<2x128xf32> -> vector<2x128xf32>
    %506 = arith.addf %504, %505 : vector<2x128xf32>
    %507 = vector.extract_strided_slice %506 {offsets = [0, 0], sizes = [2, 32], strides = [1, 1]} : vector<2x128xf32> to vector<2x32xf32>
    %508 = arith.negf %507 : vector<2x32xf32>
    %509 = math.exp %508 : vector<2x32xf32>
    %cst_122 = arith.constant 1.000000e+00 : f32
    %510 = vector.broadcast %cst_122 : f32 to vector<2x32xf32>
    %511 = arith.addf %510, %509 : vector<2x32xf32>
    %512 = arith.divf %510, %511 : vector<2x32xf32>
    %513 = vector.extract_strided_slice %506 {offsets = [0, 32], sizes = [2, 32], strides = [1, 1]} : vector<2x128xf32> to vector<2x32xf32>
    %514 = arith.negf %513 : vector<2x32xf32>
    %515 = math.exp %514 : vector<2x32xf32>
    %cst_123 = arith.constant 1.000000e+00 : f32
    %516 = vector.broadcast %cst_123 : f32 to vector<2x32xf32>
    %517 = arith.addf %516, %515 : vector<2x32xf32>
    %518 = arith.divf %516, %517 : vector<2x32xf32>
    %519 = vector.extract_strided_slice %506 {offsets = [0, 64], sizes = [2, 32], strides = [1, 1]} : vector<2x128xf32> to vector<2x32xf32>
    %520 = math.tanh %519 : vector<2x32xf32>
    %521 = vector.extract_strided_slice %506 {offsets = [0, 96], sizes = [2, 32], strides = [1, 1]} : vector<2x128xf32> to vector<2x32xf32>
    %522 = arith.negf %521 : vector<2x32xf32>
    %523 = math.exp %522 : vector<2x32xf32>
    %cst_124 = arith.constant 1.000000e+00 : f32
    %524 = vector.broadcast %cst_124 : f32 to vector<2x32xf32>
    %525 = arith.addf %524, %523 : vector<2x32xf32>
    %526 = arith.divf %524, %525 : vector<2x32xf32>
    %527 = arith.mulf %518, %500 : vector<2x32xf32>
    %528 = arith.mulf %512, %520 : vector<2x32xf32>
    %529 = arith.addf %527, %528 : vector<2x32xf32>
    %530 = math.tanh %529 : vector<2x32xf32>
    %531 = arith.mulf %526, %530 : vector<2x32xf32>
    %532 = arith.addf %503, %531 : vector<2x32xf32>
    %533 = vector.extract_strided_slice %93 {offsets = [30, 0], sizes = [2, 128], strides = [1, 1]} : vector<32x128xf32> to vector<2x128xf32>
    %cst_125 = arith.constant dense<0.000000e+00> : vector<2x128xf32>
    %534 = tpu.matmul %531, %94, %cst_125 {dimension_numbers = #tpu.dot_dimension_numbers<[1], [0], [0], [1], [0, 0, 1, 1], [], []>} : vector<2x32xf32>, vector<32x128xf32>, vector<2x128xf32> -> vector<2x128xf32>
    %535 = arith.addf %533, %534 : vector<2x128xf32>
    %536 = vector.extract_strided_slice %535 {offsets = [0, 0], sizes = [2, 32], strides = [1, 1]} : vector<2x128xf32> to vector<2x32xf32>
    %537 = arith.negf %536 : vector<2x32xf32>
    %538 = math.exp %537 : vector<2x32xf32>
    %cst_126 = arith.constant 1.000000e+00 : f32
    %539 = vector.broadcast %cst_126 : f32 to vector<2x32xf32>
    %540 = arith.addf %539, %538 : vector<2x32xf32>
    %541 = arith.divf %539, %540 : vector<2x32xf32>
    %542 = vector.extract_strided_slice %535 {offsets = [0, 32], sizes = [2, 32], strides = [1, 1]} : vector<2x128xf32> to vector<2x32xf32>
    %543 = arith.negf %542 : vector<2x32xf32>
    %544 = math.exp %543 : vector<2x32xf32>
    %cst_127 = arith.constant 1.000000e+00 : f32
    %545 = vector.broadcast %cst_127 : f32 to vector<2x32xf32>
    %546 = arith.addf %545, %544 : vector<2x32xf32>
    %547 = arith.divf %545, %546 : vector<2x32xf32>
    %548 = vector.extract_strided_slice %535 {offsets = [0, 64], sizes = [2, 32], strides = [1, 1]} : vector<2x128xf32> to vector<2x32xf32>
    %549 = math.tanh %548 : vector<2x32xf32>
    %550 = vector.extract_strided_slice %535 {offsets = [0, 96], sizes = [2, 32], strides = [1, 1]} : vector<2x128xf32> to vector<2x32xf32>
    %551 = arith.negf %550 : vector<2x32xf32>
    %552 = math.exp %551 : vector<2x32xf32>
    %cst_128 = arith.constant 1.000000e+00 : f32
    %553 = vector.broadcast %cst_128 : f32 to vector<2x32xf32>
    %554 = arith.addf %553, %552 : vector<2x32xf32>
    %555 = arith.divf %553, %554 : vector<2x32xf32>
    %556 = arith.mulf %547, %529 : vector<2x32xf32>
    %557 = arith.mulf %541, %549 : vector<2x32xf32>
    %558 = arith.addf %556, %557 : vector<2x32xf32>
    %559 = math.tanh %558 : vector<2x32xf32>
    %560 = arith.mulf %555, %559 : vector<2x32xf32>
    %561 = arith.addf %532, %560 : vector<2x32xf32>
    %cst_129 = arith.constant 6.250000e-02 : f32
    %562 = vector.broadcast %cst_129 : f32 to vector<2x32xf32>
    %563 = arith.mulf %561, %562 : vector<2x32xf32>
    %c0_130 = arith.constant 0 : index
    %c0_131 = arith.constant 0 : index
    %564 = vector.load %arg11[%c0_130, %c0_131] : memref<32x16xf32, #tpu.memory_space<vmem>>, vector<32x16xf32>
    %cst_132 = arith.constant dense<0.000000e+00> : vector<2x16xf32>
    %565 = tpu.matmul %563, %564, %cst_132 {dimension_numbers = #tpu.dot_dimension_numbers<[1], [0], [0], [1], [0, 0, 1, 1], [], []>} : vector<2x32xf32>, vector<32x16xf32>, vector<2x16xf32> -> vector<2x16xf32>
    %c0_133 = arith.constant 0 : index
    %c0_134 = arith.constant 0 : index
    %566 = vector.load %arg12[%c0_133, %c0_134] : memref<1x16xf32, #tpu.memory_space<vmem>>, vector<1x16xf32>
    %567 = vector.broadcast %566 : vector<1x16xf32> to vector<2x16xf32>
    %568 = arith.addf %565, %567 : vector<2x16xf32>
    %cst_135 = arith.constant 0.000000e+00 : f32
    %569 = vector.broadcast %cst_135 : f32 to vector<2x16xf32>
    %570 = arith.cmpf ogt, %568, %569 : vector<2x16xf32>
    %cst_136 = arith.constant 3.000000e-01 : f32
    %571 = vector.broadcast %cst_136 : f32 to vector<2x16xf32>
    %572 = arith.mulf %571, %568 : vector<2x16xf32>
    %573 = arith.select %570, %568, %572 : vector<2x16xi1>, vector<2x16xf32>
    %c0_137 = arith.constant 0 : index
    %c0_138 = arith.constant 0 : index
    %574 = vector.load %arg13[%c0_137, %c0_138] : memref<16x1xf32, #tpu.memory_space<vmem>>, vector<16x1xf32>
    %cst_139 = arith.constant dense<0.000000e+00> : vector<2x1xf32>
    %575 = tpu.matmul %573, %574, %cst_139 {dimension_numbers = #tpu.dot_dimension_numbers<[1], [0], [0], [1], [0, 0, 1, 1], [], []>} : vector<2x16xf32>, vector<16x1xf32>, vector<2x1xf32> -> vector<2x1xf32>
    %c0_140 = arith.constant 0 : index
    %c0_141 = arith.constant 0 : index
    %576 = vector.load %arg14[%c0_140, %c0_141] : memref<1x1xf32, #tpu.memory_space<vmem>>, vector<1x1xf32>
    %577 = vector.broadcast %576 : vector<1x1xf32> to vector<2x1xf32>
    %578 = arith.addf %575, %577 : vector<2x1xf32>
    %579 = arith.negf %578 : vector<2x1xf32>
    %580 = math.exp %579 : vector<2x1xf32>
    %cst_142 = arith.constant 1.000000e+00 : f32
    %581 = vector.broadcast %cst_142 : f32 to vector<2x1xf32>
    %582 = arith.addf %581, %580 : vector<2x1xf32>
    %583 = arith.divf %581, %582 : vector<2x1xf32>
    %c0_143 = arith.constant 0 : index
    %c0_144 = arith.constant 0 : index
    %584 = vector.load %arg15[%c0_143, %c0_144] : memref<2x1xf32, #tpu.memory_space<vmem>>, vector<2x1xf32>
    tpu.vector_store %arg15[%c0_143, %c0_144], %583 {strides = array<i32>} : memref<2x1xf32, #tpu.memory_space<vmem>>, vector<2x1xf32>,
    return
  }
}

</mosaic_0001>

<llo_original>
// kernel: tpu_custom_call.1
$region0: #{tpu_custom_call.1}
  #allocation0 [shape = 'u32[]', space=smem, size = 0x4, offset = 0x4, fixed_abs, tag = 'smem constant byte address 0x4 - core index']
  #allocation1 [shape = 'u32[144,128]{1,0:T(1,128)}', space=vmem, size = 0x12000, scoped, tag = 'internal scratch']
  #allocation2 [shape = 'f32[1,1]{1,0:T(1,128)S(1)}', space=vmem, size = 0x200, scoped, tag = 'scoped memory for tpu_custom_call.1']
  %s0 = inlined_call_operand.vmem [shape: f32[32,4], index: 0, kind: input, shape index: {}]
  %s1 = inlined_call_operand.vmem [shape: f32[32,4], index: 1, kind: input, shape index: {}]
  %s2 = inlined_call_operand.hbm [shape: f32[3,4,16], index: 2, kind: input, shape index: {}]
  %s3 = inlined_call_operand.vmem [shape: f32[1,16], index: 3, kind: input, shape index: {}]
  %s4 = inlined_call_operand.vmem [shape: f32[3,16,32], index: 4, kind: input, shape index: {}]
  %s5 = inlined_call_operand.vmem [shape: f32[1,32], index: 5, kind: input, shape index: {}]
  %s6 = inlined_call_operand.vmem [shape: f32[3,32,32], index: 6, kind: input, shape index: {}]
  %s7 = inlined_call_operand.vmem [shape: f32[1,32], index: 7, kind: input, shape index: {}]
  %s8 = inlined_call_operand.hbm [shape: f32[32,128], index: 8, kind: input, shape index: {}]
  %s9 = inlined_call_operand.hbm [shape: f32[32,128], index: 9, kind: input, shape index: {}]
  %s10 = inlined_call_operand.vmem [shape: f32[1,128], index: 10, kind: input, shape index: {}]
  %s11 = inlined_call_operand.vmem [shape: f32[32,16], index: 11, kind: input, shape index: {}]
  %s12 = inlined_call_operand.vmem [shape: f32[1,16], index: 12, kind: input, shape index: {}]
  %s13 = inlined_call_operand.vmem [shape: f32[16,1], index: 13, kind: input, shape index: {}]
  %s14 = inlined_call_operand.<no memory space> [shape: f32[1,1], index: 14, kind: input, shape index: {}]
  %s15 = inlined_call_operand.vmem [shape: f32[2,1], index: 15, kind: output, shape index: {}]
  %s16 = sld [smem:[#allocation0]]
  $region82: #{tpu_custom_call.1} parent=0
    _
  %s18 = ssub.s32 1, %s16
  %s19 = scalar_select 0, %s18, %s16
  %v20 = vstv %s14
  %21 = vst [vmem:[#allocation2] sm:$0x1] %v20
  $region1: #{tpu_custom_call.1} parent=0
    #allocation3 [shape = 'u8[6144]{0}', space=vmem, size = 0x1800, scoped, tag = 'input window, operand 2, single buffered']
    #allocation4 [shape = 's32[1]{0}', space=sflag, size = 0x4, scoped, tag = 'scoped memory for tpu_custom_call.1']
    #allocation5 [shape = 'u8[16384]{0}', space=vmem, size = 0x4000, scoped, tag = 'input window, operand 8, single buffered']
    #allocation6 [shape = 's32[1]{0}', space=sflag, size = 0x4, scoped, tag = 'scoped memory for tpu_custom_call.1']
    #allocation7 [shape = 'u8[16384]{0}', space=vmem, size = 0x4000, scoped, tag = 'input window, operand 9, single buffered']
    %22 = vsyncpa [#allocation4], 0
    %23 = vsyncpa [#allocation6], 0
    // Predicated region
    $region2: #{tpu_custom_call.1} parent=1 // pred_check
      _
    $region3: #{tpu_custom_call.1} parent=1 // pred_check_branch
      %25 = sbr.rel (0) target = $region5
    $region4: #{tpu_custom_call.1} parent=1 // pred_region
      _
    $region5: #{tpu_custom_call.1} parent=1 // pred_fallthru
      _
    // Predicated region
    $region6: #{tpu_custom_call.1} parent=1 // pred_check
      _
    $region7: #{tpu_custom_call.1} parent=1 // pred_check_branch
      %27 = sbr.rel (0) target = $region9
    $region8: #{tpu_custom_call.1} parent=1 // pred_region
      _
    $region9: #{tpu_custom_call.1} parent=1 // pred_fallthru
      _
    // Predicated region
    $region10: #{tpu_custom_call.1} parent=1 // pred_check
      _
    $region11: #{tpu_custom_call.1} parent=1 // pred_check_branch
      %29 = sbr.rel (0) target = $region13
    $region12: #{tpu_custom_call.1} parent=1 // pred_region
      %s31 = ssub.s32 192, 192
      %32 = vsyncadd [#allocation4], %s31
      %s33 = sshll.u32 [#allocation3], 4
      %s34 = int_to_ptr.vmem [resolvable:$true] %s33
      %39 = dma.hbm_to_vmem [thread:$0]  %s2, 192, %s34, [#allocation4], 64, 64, 4
    $region13: #{tpu_custom_call.1} parent=1 // pred_fallthru
      _
    // Predicated region
    $region14: #{tpu_custom_call.1} parent=1 // pred_check
      _
    $region15: #{tpu_custom_call.1} parent=1 // pred_check_branch
      %41 = sbr.rel (0) target = $region17
    $region16: #{tpu_custom_call.1} parent=1 // pred_region
      _
    $region17: #{tpu_custom_call.1} parent=1 // pred_fallthru
      _
    // Predicated region
    $region18: #{tpu_custom_call.1} parent=1 // pred_check
      _
    $region19: #{tpu_custom_call.1} parent=1 // pred_check_branch
      %43 = sbr.rel (0) target = $region21
    $region20: #{tpu_custom_call.1} parent=1 // pred_region
      _
    $region21: #{tpu_custom_call.1} parent=1 // pred_fallthru
      _
    // Predicated region
    $region22: #{tpu_custom_call.1} parent=1 // pred_check
      _
    $region23: #{tpu_custom_call.1} parent=1 // pred_check_branch
      %45 = sbr.rel (0) target = $region25
    $region24: #{tpu_custom_call.1} parent=1 // pred_region
      _
    $region25: #{tpu_custom_call.1} parent=1 // pred_fallthru
      _
    // Predicated region
    $region26: #{tpu_custom_call.1} parent=1 // pred_check
      _
    $region27: #{tpu_custom_call.1} parent=1 // pred_check_branch
      %47 = sbr.rel (0) target = $region29
    $region28: #{tpu_custom_call.1} parent=1 // pred_region
      _
    $region29: #{tpu_custom_call.1} parent=1 // pred_fallthru
      _
    // Predicated region
    $region30: #{tpu_custom_call.1} parent=1 // pred_check
      _
    $region31: #{tpu_custom_call.1} parent=1 // pred_check_branch
      %49 = sbr.rel (0) target = $region33
    $region32: #{tpu_custom_call.1} parent=1 // pred_region
      _
    $region33: #{tpu_custom_call.1} parent=1 // pred_fallthru
      _
    // Predicated region
    $region34: #{tpu_custom_call.1} parent=1 // pred_check
      _
    $region35: #{tpu_custom_call.1} parent=1 // pred_check_branch
      %51 = sbr.rel (0) target = $region37
    $region36: #{tpu_custom_call.1} parent=1 // pred_region
      %s53 = ssub.s32 512, 512
      %54 = vsyncadd [#allocation6], %s53
      %s55 = sshll.u32 [#allocation5], 4
      %s56 = int_to_ptr.vmem [resolvable:$true] %s55
      %61 = dma.hbm_to_vmem [thread:$0]  %s8, 512, %s56, [#allocation6], 128, 128, 8
    $region37: #{tpu_custom_call.1} parent=1 // pred_fallthru
      _
    // Predicated region
    $region38: #{tpu_custom_call.1} parent=1 // pred_check
      _
    $region39: #{tpu_custom_call.1} parent=1 // pred_check_branch
      %63 = sbr.rel (0) target = $region41
    $region40: #{tpu_custom_call.1} parent=1 // pred_region
      %s65 = ssub.s32 512, 512
      %66 = vsyncadd [#allocation6], %s65
      %s67 = sshll.u32 [#allocation7], 4
      %s68 = int_to_ptr.vmem [resolvable:$true] %s67
      %73 = dma.hbm_to_vmem [thread:$0]  %s9, 512, %s68, [#allocation6], 128, 128, 8
    $region41: #{tpu_custom_call.1} parent=1 // pred_fallthru
      _
    // Predicated region
    $region42: #{tpu_custom_call.1} parent=1 // pred_check
      _
    $region43: #{tpu_custom_call.1} parent=1 // pred_check_branch
      %75 = sbr.rel (0) target = $region45
    $region44: #{tpu_custom_call.1} parent=1 // pred_region
      _
    $region45: #{tpu_custom_call.1} parent=1 // pred_fallthru
      _
    // Predicated region
    $region46: #{tpu_custom_call.1} parent=1 // pred_check
      _
    $region47: #{tpu_custom_call.1} parent=1 // pred_check_branch
      %77 = sbr.rel (0) target = $region49
    $region48: #{tpu_custom_call.1} parent=1 // pred_region
      _
    $region49: #{tpu_custom_call.1} parent=1 // pred_fallthru
      _
    // Predicated region
    $region50: #{tpu_custom_call.1} parent=1 // pred_check
      _
    $region51: #{tpu_custom_call.1} parent=1 // pred_check_branch
      %79 = sbr.rel (0) target = $region53
    $region52: #{tpu_custom_call.1} parent=1 // pred_region
      _
    $region53: #{tpu_custom_call.1} parent=1 // pred_fallthru
      _
    // Predicated region
    $region54: #{tpu_custom_call.1} parent=1 // pred_check
      _
    $region55: #{tpu_custom_call.1} parent=1 // pred_check_branch
      %81 = sbr.rel (0) target = $region57
    $region56: #{tpu_custom_call.1} parent=1 // pred_region
      _
    $region57: #{tpu_custom_call.1} parent=1 // pred_fallthru
      _
    // Predicated region
    $region58: #{tpu_custom_call.1} parent=1 // pred_check
      _
    $region59: #{tpu_custom_call.1} parent=1 // pred_check_branch
      %83 = sbr.rel (0) target = $region61
    $region60: #{tpu_custom_call.1} parent=1 // pred_region
      _
    $region61: #{tpu_custom_call.1} parent=1 // pred_fallthru
      _
    // Predicated region
    $region62: #{tpu_custom_call.1} parent=1 // pred_check
      _
    $region63: #{tpu_custom_call.1} parent=1 // pred_check_branch
      %85 = sbr.rel (0) target = $region65
    $region64: #{tpu_custom_call.1} parent=1 // pred_region
      %86 = dma.done [#allocation4], 192
    $region65: #{tpu_custom_call.1} parent=1 // pred_fallthru
      _
    // Predicated region
    $region66: #{tpu_custom_call.1} parent=1 // pred_check
      _
    $region67: #{tpu_custom_call.1} parent=1 // pred_check_branch
      %88 = sbr.rel (0) target = $region69
    $region68: #{tpu_custom_call.1} parent=1 // pred_region
      %89 = dma.done [#allocation6], 512
    $region69: #{tpu_custom_call.1} parent=1 // pred_fallthru
      _
    // Predicated region
    $region70: #{tpu_custom_call.1} parent=1 // pred_check
      _
    $region71: #{tpu_custom_call.1} parent=1 // pred_check_branch
      %91 = sbr.rel (0) target = $region73
    $region72: #{tpu_custom_call.1} parent=1 // pred_region
      %92 = dma.done [#allocation6], 512
    $region73: #{tpu_custom_call.1} parent=1 // pred_fallthru
      _
    %v93 = vlaneseq
    %v94 = vshrl.u32 %v93, 7
    %v95 = vadd.s32 %v94, 8
    %v96 = vadd.s32 %v94, 16
    %v97 = vadd.s32 %v94, 24
    %vm98 = vcmp.ge.s32.totalorder %v94, 2
    %vm99 = vcmp.ge.s32.totalorder %v95, 2
    %vm100 = vcmp.ge.s32.totalorder %v96, 2
    %vm101 = vcmp.ge.s32.totalorder %v97, 2
    %v102 = vsel %vm98, 1, 0
    %v103 = vsel %vm99, 1, 0
    %v104 = vsel %vm100, 1, 0
    %v105 = vsel %vm101, 1, 0
    %v106 = vcvt.s32.f32 %v102
    %v107 = vcvt.s32.f32 %v103
    %v108 = vcvt.s32.f32 %v104
    %v109 = vcvt.s32.f32 %v105
    %vm110 = vcmp.lt.s32.totalorder %v94, 30
    %vm111 = vcmp.lt.s32.totalorder %v95, 30
    %vm112 = vcmp.lt.s32.totalorder %v96, 30
    %vm113 = vcmp.lt.s32.totalorder %v97, 30
    %v114 = vsel %vm110, 1, 0
    %v115 = vsel %vm111, 1, 0
    %v116 = vsel %vm112, 1, 0
    %v117 = vsel %vm113, 1, 0
    %v118 = vcvt.s32.f32 %v114
    %v119 = vcvt.s32.f32 %v115
    %v120 = vcvt.s32.f32 %v116
    %v121 = vcvt.s32.f32 %v117
    %v122 = vld [vmem:[%s0] sm:$0xff]
    %v123 = vld [vmem:[%s0 + $0x8] sm:$0xff]
    %v124 = vld [vmem:[%s0 + $0x10] sm:$0xff]
    %v125 = vld [vmem:[%s0 + $0x18] sm:$0xff]
    %v126 = vld [vmem:[%s1] sm:$0xff]
    %v127 = vld [vmem:[%s1 + $0x8] sm:$0xff]
    %v128 = vld [vmem:[%s1 + $0x10] sm:$0xff]
    %v129 = vld [vmem:[%s1 + $0x18] sm:$0xff]
    %v130 = vmul.f32 %v126, 0.05
    %v131 = vmul.f32 %v127, 0.05
    %v132 = vmul.f32 %v128, 0.05
    %v133 = vmul.f32 %v129, 0.05
    %v134 = vadd.f32 %v122, %v130
    %v135 = vadd.f32 %v123, %v131
    %v136 = vadd.f32 %v124, %v132
    %v137 = vadd.f32 %v125, %v133
    %s138 = scalar_lea.vmem [#allocation3], 4
    %v139 = vld [vmem:[%s138] sm:$0xf]
    %v140 = vld [vmem:[#allocation3] sm:$0xf]
    %vm141 = vcmask 31744
    %v143 = vsel %vm141, %v134, 0
    %v146 = vsel %vm141, %v135, 0
    %v149 = vsel %vm141, %v136, 0
    %v152 = vsel %vm141, %v137, 0
    %vm154 = vcmask 1043456
    %v156 = vsel %vm154, %v140, 0
    %158 = vmatprep.subr.mxu0 0.0
    %159 = vmatpush1.msra.mxu0 0.0
    %160 = vmatprep.subr.mxu0 0.0
    %161 = vmatpush1.msra.mxu0 0.0
    %162 = vmatprep.subr.mxu0 0.0
    %163 = vmatpush1.msra.mxu0 0.0
    %164 = vmatprep.subr.mxu0 0.0
    %165 = vmatpush1.msra.mxu0 0.0
    %166 = vmatprep.subr.mxu0 0.0
    %167 = vmatpush1.msra.mxu0 0.0
    %168 = vmatprep.subr.mxu0 0.0
    %169 = vmatpush1.msra.mxu0 0.0
    %170 = vmatprep.subr.mxu0 0.0
    %171 = vmatpush1.msra.mxu0 0.0
    %172 = vmatprep.subr.mxu0 0.0
    %173 = vmatpush1.msra.mxu0 0.0
    %174 = vmatprep.subr.mxu0 0.0
    %175 = vmatpush1.msra.mxu0 0.0
    %176 = vmatprep.subr.mxu0 0.0
    %177 = vmatpush1.msra.mxu0 0.0
    %178 = vmatprep.subr.mxu0 0.0
    %179 = vmatpush1.msra.mxu0 0.0
    %180 = vmatprep.subr.mxu0 0.0
    %181 = vmatpush1.msra.mxu0 0.0
    %182 = vmatprep.subr.mxu0 0.0
    %183 = vmatpush1.msra.mxu0 0.0
    %184 = vmatprep.subr.mxu0 0.0
    %185 = vmatpush1.msra.mxu0 0.0
    %186 = vmatprep.subr.mxu0 0.0
    %187 = vmatpush1.msra.mxu0 0.0
    %188 = vmatprep.subr.mxu0 0.0
    %189 = vmatpush1.msra.mxu0 %v156
    %190 = vmatprep.subr.mxu0 0.0
    %191 = vmatpush2.msra.mxu0 0.0
    %192 = vmatprep.subr.mxu0 0.0
    %193 = vmatpush2.msra.mxu0 0.0
    %194 = vmatprep.subr.mxu0 0.0
    %195 = vmatpush2.msra.mxu0 0.0
    %196 = vmatprep.subr.mxu0 0.0
    %197 = vmatpush2.msra.mxu0 0.0
    %198 = vmatprep.subr.mxu0 0.0
    %199 = vmatpush2.msra.mxu0 0.0
    %200 = vmatprep.subr.mxu0 0.0
    %201 = vmatpush2.msra.mxu0 0.0
    %202 = vmatprep.subr.mxu0 0.0
    %203 = vmatpush2.msra.mxu0 0.0
    %204 = vmatprep.subr.mxu0 0.0
    %205 = vmatpush2.msra.mxu0 0.0
    %206 = vmatprep.subr.mxu0 0.0
    %207 = vmatpush2.msra.mxu0 0.0
    %208 = vmatprep.subr.mxu0 0.0
    %209 = vmatpush2.msra.mxu0 0.0
    %210 = vmatprep.subr.mxu0 0.0
    %211 = vmatpush2.msra.mxu0 0.0
    %212 = vmatprep.subr.mxu0 0.0
    %213 = vmatpush2.msra.mxu0 0.0
    %214 = vmatprep.subr.mxu0 0.0
    %215 = vmatpush2.msra.mxu0 0.0
    %216 = vmatprep.subr.mxu0 0.0
    %217 = vmatpush2.msra.mxu0 0.0
    %218 = vmatprep.subr.mxu0 0.0
    %219 = vmatpush2.msra.mxu0 0.0
    %220 = vmatprep.subr.mxu0 0.0
    %221 = vmatpush2.msra.mxu0 0.0
    %222 = vmatprep.mubr.f32.mxu0 0.0
    %223 = vmatmul.mubr.f32.gmra.mxu0 %v143
    %v224 = vpop.f32.mrf.mxu0
    %v225 = vadd.f32 0.0, %v224
    %v226 = vpop.f32.mrf.mxu0
    %227 = vmatprep.mubr.f32.mxu0 0.0
    %228 = vmatmul.mubr.f32.gmra.mxu0 %v146
    %v229 = vpop.f32.mrf.mxu0
    %v230 = vadd.f32 0.0, %v229
    %v231 = vpop.f32.mrf.mxu0
    %232 = vmatprep.mubr.f32.mxu0 0.0
    %233 = vmatmul.mubr.f32.gmra.mxu0 %v149
    %v234 = vpop.f32.mrf.mxu0
    %v235 = vadd.f32 0.0, %v234
    %v236 = vpop.f32.mrf.mxu0
    %237 = vmatprep.mubr.f32.mxu0 0.0
    %238 = vmatmul.mubr.f32.gmra.mxu0 %v152
    %v239 = vpop.f32.mrf.mxu0
    %v240 = vadd.f32 0.0, %v239
    %v241 = vpop.f32.mrf.mxu0
    %242 = vdwg.mxu0
    %s243 = scalar_lea.vmem [#allocation3], 8
    %v244 = vld [vmem:[%s243] sm:$0xf]
    %v246 = vsel %vm154, %v244, 0
    %248 = vmatprep.subr.mxu0 0.0
    %249 = vmatpush1.msra.mxu0 0.0
    %250 = vmatprep.subr.mxu0 0.0
    %251 = vmatpush1.msra.mxu0 0.0
    %252 = vmatprep.subr.mxu0 0.0
    %253 = vmatpush1.msra.mxu0 0.0
    %254 = vmatprep.subr.mxu0 0.0
    %255 = vmatpush1.msra.mxu0 0.0
    %256 = vmatprep.subr.mxu0 0.0
    %257 = vmatpush1.msra.mxu0 0.0
    %258 = vmatprep.subr.mxu0 0.0
    %259 = vmatpush1.msra.mxu0 0.0
    %260 = vmatprep.subr.mxu0 0.0
    %261 = vmatpush1.msra.mxu0 0.0
    %262 = vmatprep.subr.mxu0 0.0
    %263 = vmatpush1.msra.mxu0 0.0
    %264 = vmatprep.subr.mxu0 0.0
    %265 = vmatpush1.msra.mxu0 0.0
    %266 = vmatprep.subr.mxu0 0.0
    %267 = vmatpush1.msra.mxu0 0.0
    %268 = vmatprep.subr.mxu0 0.0
    %269 = vmatpush1.msra.mxu0 0.0
    %270 = vmatprep.subr.mxu0 0.0
    %271 = vmatpush1.msra.mxu0 0.0
    %272 = vmatprep.subr.mxu0 0.0
    %273 = vmatpush1.msra.mxu0 0.0
    %274 = vmatprep.subr.mxu0 0.0
    %275 = vmatpush1.msra.mxu0 0.0
    %276 = vmatprep.subr.mxu0 0.0
    %277 = vmatpush1.msra.mxu0 0.0
    %278 = vmatprep.subr.mxu0 0.0
    %279 = vmatpush1.msra.mxu0 %v246
    %280 = vmatprep.subr.mxu0 0.0
    %281 = vmatpush2.msra.mxu0 0.0
    %282 = vmatprep.subr.mxu0 0.0
    %283 = vmatpush2.msra.mxu0 0.0
    %284 = vmatprep.subr.mxu0 0.0
    %285 = vmatpush2.msra.mxu0 0.0
    %286 = vmatprep.subr.mxu0 0.0
    %287 = vmatpush2.msra.mxu0 0.0
    %288 = vmatprep.subr.mxu0 0.0
    %289 = vmatpush2.msra.mxu0 0.0
    %290 = vmatprep.subr.mxu0 0.0
    %291 = vmatpush2.msra.mxu0 0.0
    %292 = vmatprep.subr.mxu0 0.0
    %293 = vmatpush2.msra.mxu0 0.0
    %294 = vmatprep.subr.mxu0 0.0
    %295 = vmatpush2.msra.mxu0 0.0
    %296 = vmatprep.subr.mxu0 0.0
    %297 = vmatpush2.msra.mxu0 0.0
    %298 = vmatprep.subr.mxu0 0.0
    %299 = vmatpush2.msra.mxu0 0.0
    %300 = vmatprep.subr.mxu0 0.0
    %301 = vmatpush2.msra.mxu0 0.0
    %302 = vmatprep.subr.mxu0 0.0
    %303 = vmatpush2.msra.mxu0 0.0
    %304 = vmatprep.subr.mxu0 0.0
    %305 = vmatpush2.msra.mxu0 0.0
    %306 = vmatprep.subr.mxu0 0.0
    %307 = vmatpush2.msra.mxu0 0.0
    %308 = vmatprep.subr.mxu0 0.0
    %309 = vmatpush2.msra.mxu0 0.0
    %310 = vmatprep.subr.mxu0 0.0
    %311 = vmatpush2.msra.mxu0 0.0
    %312 = vmatprep.mubr.f32.mxu0 0.0
    %313 = vmatmul.mubr.f32.gmra.mxu0 %v143
    %v314 = vpop.f32.mrf.mxu0
    %v315 = vadd.f32 0.0, %v314
    %v316 = vpop.f32.mrf.mxu0
    %317 = vmatprep.mubr.f32.mxu0 0.0
    %318 = vmatmul.mubr.f32.gmra.mxu0 %v146
    %v319 = vpop.f32.mrf.mxu0
    %v320 = vadd.f32 0.0, %v319
    %v321 = vpop.f32.mrf.mxu0
    %322 = vmatprep.mubr.f32.mxu0 0.0
    %323 = vmatmul.mubr.f32.gmra.mxu0 %v149
    %v324 = vpop.f32.mrf.mxu0
    %v325 = vadd.f32 0.0, %v324
    %v326 = vpop.f32.mrf.mxu0
    %327 = vmatprep.mubr.f32.mxu0 0.0
    %328 = vmatmul.mubr.f32.gmra.mxu0 %v152
    %v329 = vpop.f32.mrf.mxu0
    %v330 = vadd.f32 0.0, %v329
    %v331 = vpop.f32.mrf.mxu0
    %332 = vdwg.mxu0
    %v333 = vrot.slane %v225, 6
    %v334 = vrot.slane %v230, 6
    %v335 = vrot.slane %v235, 6
    %v336 = vrot.slane %v240, 6
    %vm337 = vcmp.lt.s32.totalorder %v94, 2
    %v338 = vsel %vm337, %v335, %v336
    %v339 = vsel %vm337, %v334, %v335
    %v340 = vsel %vm337, %v333, %v334
    %v341 = vsel %vm337, %v336, %v333
    %v342 = vmul.f32 %v341, %v106
    %v343 = vmul.f32 %v340, %v107
    %v344 = vmul.f32 %v339, %v108
    %v345 = vmul.f32 %v338, %v109
    %v346 = vrot.slane %v315, 2
    %v347 = vrot.slane %v320, 2
    %v348 = vrot.slane %v325, 2
    %v349 = vrot.slane %v330, 2
    %vm350 = vcmp.lt.s32.totalorder %v94, 6
    %v351 = vsel %vm350, %v348, %v349
    %v352 = vsel %vm350, %v347, %v348
    %v353 = vsel %vm350, %v346, %v347
    %v354 = vsel %vm350, %v349, %v346
    %v355 = vmul.f32 %v353, %v118
    %v356 = vmul.f32 %v352, %v119
    %v357 = vmul.f32 %v351, %v120
    %v358 = vmul.f32 %v354, %v121
    %v360 = vsel %vm154, %v139, 0
    %362 = vmatprep.subr.mxu0 0.0
    %363 = vmatpush1.msra.mxu0 0.0
    %364 = vmatprep.subr.mxu0 0.0
    %365 = vmatpush1.msra.mxu0 0.0
    %366 = vmatprep.subr.mxu0 0.0
    %367 = vmatpush1.msra.mxu0 0.0
    %368 = vmatprep.subr.mxu0 0.0
    %369 = vmatpush1.msra.mxu0 0.0
    %370 = vmatprep.subr.mxu0 0.0
    %371 = vmatpush1.msra.mxu0 0.0
    %372 = vmatprep.subr.mxu0 0.0
    %373 = vmatpush1.msra.mxu0 0.0
    %374 = vmatprep.subr.mxu0 0.0
    %375 = vmatpush1.msra.mxu0 0.0
    %376 = vmatprep.subr.mxu0 0.0
    %377 = vmatpush1.msra.mxu0 0.0
    %378 = vmatprep.subr.mxu0 0.0
    %379 = vmatpush1.msra.mxu0 0.0
    %380 = vmatprep.subr.mxu0 0.0
    %381 = vmatpush1.msra.mxu0 0.0
    %382 = vmatprep.subr.mxu0 0.0
    %383 = vmatpush1.msra.mxu0 0.0
    %384 = vmatprep.subr.mxu0 0.0
    %385 = vmatpush1.msra.mxu0 0.0
    %386 = vmatprep.subr.mxu0 0.0
    %387 = vmatpush1.msra.mxu0 0.0
    %388 = vmatprep.subr.mxu0 0.0
    %389 = vmatpush1.msra.mxu0 0.0
    %390 = vmatprep.subr.mxu0 0.0
    %391 = vmatpush1.msra.mxu0 0.0
    %392 = vmatprep.subr.mxu0 0.0
    %393 = vmatpush1.msra.mxu0 %v360
    %394 = vmatprep.subr.mxu0 0.0
    %395 = vmatpush2.msra.mxu0 0.0
    %396 = vmatprep.subr.mxu0 0.0
    %397 = vmatpush2.msra.mxu0 0.0
    %398 = vmatprep.subr.mxu0 0.0
    %399 = vmatpush2.msra.mxu0 0.0
    %400 = vmatprep.subr.mxu0 0.0
    %401 = vmatpush2.msra.mxu0 0.0
    %402 = vmatprep.subr.mxu0 0.0
    %403 = vmatpush2.msra.mxu0 0.0
    %404 = vmatprep.subr.mxu0 0.0
    %405 = vmatpush2.msra.mxu0 0.0
    %406 = vmatprep.subr.mxu0 0.0
    %407 = vmatpush2.msra.mxu0 0.0
    %408 = vmatprep.subr.mxu0 0.0
    %409 = vmatpush2.msra.mxu0 0.0
    %410 = vmatprep.subr.mxu0 0.0
    %411 = vmatpush2.msra.mxu0 0.0
    %412 = vmatprep.subr.mxu0 0.0
    %413 = vmatpush2.msra.mxu0 0.0
    %414 = vmatprep.subr.mxu0 0.0
    %415 = vmatpush2.msra.mxu0 0.0
    %416 = vmatprep.subr.mxu0 0.0
    %417 = vmatpush2.msra.mxu0 0.0
    %418 = vmatprep.subr.mxu0 0.0
    %419 = vmatpush2.msra.mxu0 0.0
    %420 = vmatprep.subr.mxu0 0.0
    %421 = vmatpush2.msra.mxu0 0.0
    %422 = vmatprep.subr.mxu0 0.0
    %423 = vmatpush2.msra.mxu0 0.0
    %424 = vmatprep.subr.mxu0 0.0
    %425 = vmatpush2.msra.mxu0 0.0
    %426 = vmatprep.mubr.f32.mxu0 0.0
    %427 = vmatmul.mubr.f32.gmra.mxu0 %v143
    %v428 = vpop.f32.mrf.mxu0
    %v429 = vadd.f32 %v342, %v428
    %v430 = vpop.f32.mrf.mxu0
    %431 = vmatprep.mubr.f32.mxu0 0.0
    %432 = vmatmul.mubr.f32.gmra.mxu0 %v146
    %v433 = vpop.f32.mrf.mxu0
    %v434 = vadd.f32 %v343, %v433
    %v435 = vpop.f32.mrf.mxu0
    %436 = vmatprep.mubr.f32.mxu0 0.0
    %437 = vmatmul.mubr.f32.gmra.mxu0 %v149
    %v438 = vpop.f32.mrf.mxu0
    %v439 = vadd.f32 %v344, %v438
    %v440 = vpop.f32.mrf.mxu0
    %441 = vmatprep.mubr.f32.mxu0 0.0
    %442 = vmatmul.mubr.f32.gmra.mxu0 %v152
    %v443 = vpop.f32.mrf.mxu0
    %v444 = vadd.f32 %v345, %v443
    %v445 = vpop.f32.mrf.mxu0
    %446 = vdwg.mxu0
    %v447 = vadd.f32 %v429, %v355
    %v448 = vadd.f32 %v434, %v356
    %v449 = vadd.f32 %v439, %v357
    %v450 = vadd.f32 %v444, %v358
    %v451 = vld [vmem:[%s3] sm:$0x1]
    %v453 = vlaneseq
    %v454 = vshrl.u32 %v453, 7
    %v455 = vsub.s32 0, %v454
    %v456 = vrot.slane %v451, %v455
    %v458 = vadd.f32 %v447, %v456
    %v459 = vadd.f32 %v448, %v456
    %v460 = vadd.f32 %v449, %v456
    %v461 = vadd.f32 %v450, %v456
    %vm462 = vcmp.gt.f32.partialorder %v458, 0.0
    %vm463 = vcmp.gt.f32.partialorder %v459, 0.0
    %vm464 = vcmp.gt.f32.partialorder %v460, 0.0
    %vm465 = vcmp.gt.f32.partialorder %v461, 0.0
    %v466 = vmul.f32 %v458, 0.3
    %v467 = vmul.f32 %v459, 0.3
    %v468 = vmul.f32 %v460, 0.3
    %v469 = vmul.f32 %v461, 0.3
    %v470 = vsel %vm462, %v458, %v466
    %v471 = vsel %vm463, %v459, %v467
    %v472 = vsel %vm464, %v460, %v468
    %v473 = vsel %vm465, %v461, %v469
    %s474 = scalar_lea.vmem %s4, 16
    %v475 = vld [vmem:[%s474] sm:$0xff]
    %v476 = vld [vmem:[%s474 + $0x8] sm:$0xff]
    %v477 = vld [vmem:[%s4] sm:$0xff]
    %v478 = vld [vmem:[%s4 + $0x8] sm:$0xff]
    %vm479 = vcmask 130048
    %v481 = vsel %vm479, %v470, 0
    %v484 = vsel %vm479, %v471, 0
    %v487 = vsel %vm479, %v472, 0
    %v490 = vsel %vm479, %v473, 0
    %492 = vmatprep.subr.mxu0 0.0
    %493 = vmatpush1.msra.mxu0 0.0
    %494 = vmatprep.subr.mxu0 0.0
    %495 = vmatpush1.msra.mxu0 0.0
    %496 = vmatprep.subr.mxu0 0.0
    %497 = vmatpush1.msra.mxu0 0.0
    %498 = vmatprep.subr.mxu0 0.0
    %499 = vmatpush1.msra.mxu0 0.0
    %500 = vmatprep.subr.mxu0 0.0
    %501 = vmatpush1.msra.mxu0 0.0
    %502 = vmatprep.subr.mxu0 0.0
    %503 = vmatpush1.msra.mxu0 0.0
    %504 = vmatprep.subr.mxu0 0.0
    %505 = vmatpush1.msra.mxu0 0.0
    %506 = vmatprep.subr.mxu0 0.0
    %507 = vmatpush1.msra.mxu0 0.0
    %508 = vmatprep.subr.mxu0 0.0
    %509 = vmatpush1.msra.mxu0 0.0
    %510 = vmatprep.subr.mxu0 0.0
    %511 = vmatpush1.msra.mxu0 0.0
    %512 = vmatprep.subr.mxu0 0.0
    %513 = vmatpush1.msra.mxu0 0.0
    %514 = vmatprep.subr.mxu0 0.0
    %515 = vmatpush1.msra.mxu0 0.0
    %516 = vmatprep.subr.mxu0 0.0
    %517 = vmatpush1.msra.mxu0 0.0
    %518 = vmatprep.subr.mxu0 0.0
    %519 = vmatpush1.msra.mxu0 0.0
    %520 = vmatprep.subr.mxu0 0.0
    %521 = vmatpush1.msra.mxu0 %v478
    %522 = vmatprep.subr.mxu0 0.0
    %523 = vmatpush1.msra.mxu0 %v477
    %524 = vmatprep.subr.mxu0 0.0
    %525 = vmatpush2.msra.mxu0 0.0
    %526 = vmatprep.subr.mxu0 0.0
    %527 = vmatpush2.msra.mxu0 0.0
    %528 = vmatprep.subr.mxu0 0.0
    %529 = vmatpush2.msra.mxu0 0.0
    %530 = vmatprep.subr.mxu0 0.0
    %531 = vmatpush2.msra.mxu0 0.0
    %532 = vmatprep.subr.mxu0 0.0
    %533 = vmatpush2.msra.mxu0 0.0
    %534 = vmatprep.subr.mxu0 0.0
    %535 = vmatpush2.msra.mxu0 0.0
    %536 = vmatprep.subr.mxu0 0.0
    %537 = vmatpush2.msra.mxu0 0.0
    %538 = vmatprep.subr.mxu0 0.0
    %539 = vmatpush2.msra.mxu0 0.0
    %540 = vmatprep.subr.mxu0 0.0
    %541 = vmatpush2.msra.mxu0 0.0
    %542 = vmatprep.subr.mxu0 0.0
    %543 = vmatpush2.msra.mxu0 0.0
    %544 = vmatprep.subr.mxu0 0.0
    %545 = vmatpush2.msra.mxu0 0.0
    %546 = vmatprep.subr.mxu0 0.0
    %547 = vmatpush2.msra.mxu0 0.0
    %548 = vmatprep.subr.mxu0 0.0
    %549 = vmatpush2.msra.mxu0 0.0
    %550 = vmatprep.subr.mxu0 0.0
    %551 = vmatpush2.msra.mxu0 0.0
    %552 = vmatprep.subr.mxu0 0.0
    %553 = vmatpush2.msra.mxu0 0.0
    %554 = vmatprep.subr.mxu0 0.0
    %555 = vmatpush2.msra.mxu0 0.0
    %556 = vmatprep.mubr.f32.mxu0 0.0
    %557 = vmatmul.mubr.f32.gmra.mxu0 %v481
    %v558 = vpop.f32.mrf.mxu0
    %v559 = vadd.f32 0.0, %v558
    %v560 = vpop.f32.mrf.mxu0
    %561 = vmatprep.mubr.f32.mxu0 0.0
    %562 = vmatmul.mubr.f32.gmra.mxu0 %v484
    %v563 = vpop.f32.mrf.mxu0
    %v564 = vadd.f32 0.0, %v563
    %v565 = vpop.f32.mrf.mxu0
    %566 = vmatprep.mubr.f32.mxu0 0.0
    %567 = vmatmul.mubr.f32.gmra.mxu0 %v487
    %v568 = vpop.f32.mrf.mxu0
    %v569 = vadd.f32 0.0, %v568
    %v570 = vpop.f32.mrf.mxu0
    %571 = vmatprep.mubr.f32.mxu0 0.0
    %572 = vmatmul.mubr.f32.gmra.mxu0 %v490
    %v573 = vpop.f32.mrf.mxu0
    %v574 = vadd.f32 0.0, %v573
    %v575 = vpop.f32.mrf.mxu0
    %576 = vdwg.mxu0
    %s577 = scalar_lea.vmem %s4, 32
    %v578 = vld [vmem:[%s577] sm:$0xff]
    %v579 = vld [vmem:[%s577 + $0x8] sm:$0xff]
    %580 = vmatprep.subr.mxu0 0.0
    %581 = vmatpush1.msra.mxu0 0.0
    %582 = vmatprep.subr.mxu0 0.0
    %583 = vmatpush1.msra.mxu0 0.0
    %584 = vmatprep.subr.mxu0 0.0
    %585 = vmatpush1.msra.mxu0 0.0
    %586 = vmatprep.subr.mxu0 0.0
    %587 = vmatpush1.msra.mxu0 0.0
    %588 = vmatprep.subr.mxu0 0.0
    %589 = vmatpush1.msra.mxu0 0.0
    %590 = vmatprep.subr.mxu0 0.0
    %591 = vmatpush1.msra.mxu0 0.0
    %592 = vmatprep.subr.mxu0 0.0
    %593 = vmatpush1.msra.mxu0 0.0
    %594 = vmatprep.subr.mxu0 0.0
    %595 = vmatpush1.msra.mxu0 0.0
    %596 = vmatprep.subr.mxu0 0.0
    %597 = vmatpush1.msra.mxu0 0.0
    %598 = vmatprep.subr.mxu0 0.0
    %599 = vmatpush1.msra.mxu0 0.0
    %600 = vmatprep.subr.mxu0 0.0
    %601 = vmatpush1.msra.mxu0 0.0
    %602 = vmatprep.subr.mxu0 0.0
    %603 = vmatpush1.msra.mxu0 0.0
    %604 = vmatprep.subr.mxu0 0.0
    %605 = vmatpush1.msra.mxu0 0.0
    %606 = vmatprep.subr.mxu0 0.0
    %607 = vmatpush1.msra.mxu0 0.0
    %608 = vmatprep.subr.mxu0 0.0
    %609 = vmatpush1.msra.mxu0 %v579
    %610 = vmatprep.subr.mxu0 0.0
    %611 = vmatpush1.msra.mxu0 %v578
    %612 = vmatprep.subr.mxu0 0.0
    %613 = vmatpush2.msra.mxu0 0.0
    %614 = vmatprep.subr.mxu0 0.0
    %615 = vmatpush2.msra.mxu0 0.0
    %616 = vmatprep.subr.mxu0 0.0
    %617 = vmatpush2.msra.mxu0 0.0
    %618 = vmatprep.subr.mxu0 0.0
    %619 = vmatpush2.msra.mxu0 0.0
    %620 = vmatprep.subr.mxu0 0.0
    %621 = vmatpush2.msra.mxu0 0.0
    %622 = vmatprep.subr.mxu0 0.0
    %623 = vmatpush2.msra.mxu0 0.0
    %624 = vmatprep.subr.mxu0 0.0
    %625 = vmatpush2.msra.mxu0 0.0
    %626 = vmatprep.subr.mxu0 0.0
    %627 = vmatpush2.msra.mxu0 0.0
    %628 = vmatprep.subr.mxu0 0.0
    %629 = vmatpush2.msra.mxu0 0.0
    %630 = vmatprep.subr.mxu0 0.0
    %631 = vmatpush2.msra.mxu0 0.0
    %632 = vmatprep.subr.mxu0 0.0
    %633 = vmatpush2.msra.mxu0 0.0
    %634 = vmatprep.subr.mxu0 0.0
    %635 = vmatpush2.msra.mxu0 0.0
    %636 = vmatprep.subr.mxu0 0.0
    %637 = vmatpush2.msra.mxu0 0.0
    %638 = vmatprep.subr.mxu0 0.0
    %639 = vmatpush2.msra.mxu0 0.0
    %640 = vmatprep.subr.mxu0 0.0
    %641 = vmatpush2.msra.mxu0 0.0
    %642 = vmatprep.subr.mxu0 0.0
    %643 = vmatpush2.msra.mxu0 0.0
    %644 = vmatprep.mubr.f32.mxu0 0.0
    %645 = vmatmul.mubr.f32.gmra.mxu0 %v481
    %v646 = vpop.f32.mrf.mxu0
    %v647 = vadd.f32 0.0, %v646
    %v648 = vpop.f32.mrf.mxu0
    %649 = vmatprep.mubr.f32.mxu0 0.0
    %650 = vmatmul.mubr.f32.gmra.mxu0 %v484
    %v651 = vpop.f32.mrf.mxu0
    %v652 = vadd.f32 0.0, %v651
    %v653 = vpop.f32.mrf.mxu0
    %654 = vmatprep.mubr.f32.mxu0 0.0
    %655 = vmatmul.mubr.f32.gmra.mxu0 %v487
    %v656 = vpop.f32.mrf.mxu0
    %v657 = vadd.f32 0.0, %v656
    %v658 = vpop.f32.mrf.mxu0
    %659 = vmatprep.mubr.f32.mxu0 0.0
    %660 = vmatmul.mubr.f32.gmra.mxu0 %v490
    %v661 = vpop.f32.mrf.mxu0
    %v662 = vadd.f32 0.0, %v661
    %v663 = vpop.f32.mrf.mxu0
    %664 = vdwg.mxu0
    %v665 = vrot.slane %v559, 6
    %v666 = vrot.slane %v564, 6
    %v667 = vrot.slane %v569, 6
    %v668 = vrot.slane %v574, 6
    %v669 = vsel %vm337, %v667, %v668
    %v670 = vsel %vm337, %v666, %v667
    %v671 = vsel %vm337, %v665, %v666
    %v672 = vsel %vm337, %v668, %v665
    %v673 = vmul.f32 %v672, %v106
    %v674 = vmul.f32 %v671, %v107
    %v675 = vmul.f32 %v670, %v108
    %v676 = vmul.f32 %v669, %v109
    %v677 = vrot.slane %v647, 2
    %v678 = vrot.slane %v652, 2
    %v679 = vrot.slane %v657, 2
    %v680 = vrot.slane %v662, 2
    %v681 = vsel %vm350, %v679, %v680
    %v682 = vsel %vm350, %v678, %v679
    %v683 = vsel %vm350, %v677, %v678
    %v684 = vsel %vm350, %v680, %v677
    %v685 = vmul.f32 %v683, %v118
    %v686 = vmul.f32 %v682, %v119
    %v687 = vmul.f32 %v681, %v120
    %v688 = vmul.f32 %v684, %v121
    %689 = vmatprep.subr.mxu0 0.0
    %690 = vmatpush1.msra.mxu0 0.0
    %691 = vmatprep.subr.mxu0 0.0
    %692 = vmatpush1.msra.mxu0 0.0
    %693 = vmatprep.subr.mxu0 0.0
    %694 = vmatpush1.msra.mxu0 0.0
    %695 = vmatprep.subr.mxu0 0.0
    %696 = vmatpush1.msra.mxu0 0.0
    %697 = vmatprep.subr.mxu0 0.0
    %698 = vmatpush1.msra.mxu0 0.0
    %699 = vmatprep.subr.mxu0 0.0
    %700 = vmatpush1.msra.mxu0 0.0
    %701 = vmatprep.subr.mxu0 0.0
    %702 = vmatpush1.msra.mxu0 0.0
    %703 = vmatprep.subr.mxu0 0.0
    %704 = vmatpush1.msra.mxu0 0.0
    %705 = vmatprep.subr.mxu0 0.0
    %706 = vmatpush1.msra.mxu0 0.0
    %707 = vmatprep.subr.mxu0 0.0
    %708 = vmatpush1.msra.mxu0 0.0
    %709 = vmatprep.subr.mxu0 0.0
    %710 = vmatpush1.msra.mxu0 0.0
    %711 = vmatprep.subr.mxu0 0.0
    %712 = vmatpush1.msra.mxu0 0.0
    %713 = vmatprep.subr.mxu0 0.0
    %714 = vmatpush1.msra.mxu0 0.0
    %715 = vmatprep.subr.mxu0 0.0
    %716 = vmatpush1.msra.mxu0 0.0
    %717 = vmatprep.subr.mxu0 0.0
    %718 = vmatpush1.msra.mxu0 %v476
    %719 = vmatprep.subr.mxu0 0.0
    %720 = vmatpush1.msra.mxu0 %v475
    %721 = vmatprep.subr.mxu0 0.0
    %722 = vmatpush2.msra.mxu0 0.0
    %723 = vmatprep.subr.mxu0 0.0
    %724 = vmatpush2.msra.mxu0 0.0
    %725 = vmatprep.subr.mxu0 0.0
    %726 = vmatpush2.msra.mxu0 0.0
    %727 = vmatprep.subr.mxu0 0.0
    %728 = vmatpush2.msra.mxu0 0.0
    %729 = vmatprep.subr.mxu0 0.0
    %730 = vmatpush2.msra.mxu0 0.0
    %731 = vmatprep.subr.mxu0 0.0
    %732 = vmatpush2.msra.mxu0 0.0
    %733 = vmatprep.subr.mxu0 0.0
    %734 = vmatpush2.msra.mxu0 0.0
    %735 = vmatprep.subr.mxu0 0.0
    %736 = vmatpush2.msra.mxu0 0.0
    %737 = vmatprep.subr.mxu0 0.0
    %738 = vmatpush2.msra.mxu0 0.0
    %739 = vmatprep.subr.mxu0 0.0
    %740 = vmatpush2.msra.mxu0 0.0
    %741 = vmatprep.subr.mxu0 0.0
    %742 = vmatpush2.msra.mxu0 0.0
    %743 = vmatprep.subr.mxu0 0.0
    %744 = vmatpush2.msra.mxu0 0.0
    %745 = vmatprep.subr.mxu0 0.0
    %746 = vmatpush2.msra.mxu0 0.0
    %747 = vmatprep.subr.mxu0 0.0
    %748 = vmatpush2.msra.mxu0 0.0
    %749 = vmatprep.subr.mxu0 0.0
    %750 = vmatpush2.msra.mxu0 0.0
    %751 = vmatprep.subr.mxu0 0.0
    %752 = vmatpush2.msra.mxu0 0.0
    %753 = vmatprep.mubr.f32.mxu0 0.0
    %754 = vmatmul.mubr.f32.gmra.mxu0 %v481
    %v755 = vpop.f32.mrf.mxu0
    %v756 = vadd.f32 %v673, %v755
    %v757 = vpop.f32.mrf.mxu0
    %758 = vmatprep.mubr.f32.mxu0 0.0
    %759 = vmatmul.mubr.f32.gmra.mxu0 %v484
    %v760 = vpop.f32.mrf.mxu0
    %v761 = vadd.f32 %v674, %v760
    %v762 = vpop.f32.mrf.mxu0
    %763 = vmatprep.mubr.f32.mxu0 0.0
    %764 = vmatmul.mubr.f32.gmra.mxu0 %v487
    %v765 = vpop.f32.mrf.mxu0
    %v766 = vadd.f32 %v675, %v765
    %v767 = vpop.f32.mrf.mxu0
    %768 = vmatprep.mubr.f32.mxu0 0.0
    %769 = vmatmul.mubr.f32.gmra.mxu0 %v490
    %v770 = vpop.f32.mrf.mxu0
    %v771 = vadd.f32 %v676, %v770
    %v772 = vpop.f32.mrf.mxu0
    %773 = vdwg.mxu0
    %v774 = vadd.f32 %v756, %v685
    %v775 = vadd.f32 %v761, %v686
    %v776 = vadd.f32 %v766, %v687
    %v777 = vadd.f32 %v771, %v688
    %v778 = vld [vmem:[%s5] sm:$0x1]
    %v780 = vlaneseq
    %v781 = vshrl.u32 %v780, 7
    %v782 = vsub.s32 0, %v781
    %v783 = vrot.slane %v778, %v782
    %v785 = vadd.f32 %v774, %v783
    %v786 = vadd.f32 %v775, %v783
    %v787 = vadd.f32 %v776, %v783
    %v788 = vadd.f32 %v777, %v783
    %vm789 = vcmp.gt.f32.partialorder %v785, 0.0
    %vm790 = vcmp.gt.f32.partialorder %v786, 0.0
    %vm791 = vcmp.gt.f32.partialorder %v787, 0.0
    %vm792 = vcmp.gt.f32.partialorder %v788, 0.0
    %v793 = vmul.f32 %v785, 0.3
    %v794 = vmul.f32 %v786, 0.3
    %v795 = vmul.f32 %v787, 0.3
    %v796 = vmul.f32 %v788, 0.3
    %v797 = vsel %vm789, %v785, %v793
    %v798 = vsel %vm790, %v786, %v794
    %v799 = vsel %vm791, %v787, %v795
    %v800 = vsel %vm792, %v788, %v796
    %s801 = scalar_lea.vmem %s6, 32
    %v802 = vld [vmem:[%s801] sm:$0xff]
    %v803 = vld [vmem:[%s801 + $0x8] sm:$0xff]
    %v804 = vld [vmem:[%s801 + $0x10] sm:$0xff]
    %v805 = vld [vmem:[%s801 + $0x18] sm:$0xff]
    %v806 = vld [vmem:[%s6] sm:$0xff]
    %v807 = vld [vmem:[%s6 + $0x8] sm:$0xff]
    %v808 = vld [vmem:[%s6 + $0x10] sm:$0xff]
    %v809 = vld [vmem:[%s6 + $0x18] sm:$0xff]
    %vm810 = vcmask 261120
    %v812 = vsel %vm810, %v797, 0
    %v815 = vsel %vm810, %v798, 0
    %v818 = vsel %vm810, %v799, 0
    %v821 = vsel %vm810, %v800, 0
    %823 = vmatprep.subr.mxu0 0.0
    %824 = vmatpush1.msra.mxu0 0.0
    %825 = vmatprep.subr.mxu0 0.0
    %826 = vmatpush1.msra.mxu0 0.0
    %827 = vmatprep.subr.mxu0 0.0
    %828 = vmatpush1.msra.mxu0 0.0
    %829 = vmatprep.subr.mxu0 0.0
    %830 = vmatpush1.msra.mxu0 0.0
    %831 = vmatprep.subr.mxu0 0.0
    %832 = vmatpush1.msra.mxu0 0.0
    %833 = vmatprep.subr.mxu0 0.0
    %834 = vmatpush1.msra.mxu0 0.0
    %835 = vmatprep.subr.mxu0 0.0
    %836 = vmatpush1.msra.mxu0 0.0
    %837 = vmatprep.subr.mxu0 0.0
    %838 = vmatpush1.msra.mxu0 0.0
    %839 = vmatprep.subr.mxu0 0.0
    %840 = vmatpush1.msra.mxu0 0.0
    %841 = vmatprep.subr.mxu0 0.0
    %842 = vmatpush1.msra.mxu0 0.0
    %843 = vmatprep.subr.mxu0 0.0
    %844 = vmatpush1.msra.mxu0 0.0
    %845 = vmatprep.subr.mxu0 0.0
    %846 = vmatpush1.msra.mxu0 0.0
    %847 = vmatprep.subr.mxu0 0.0
    %848 = vmatpush1.msra.mxu0 %v809
    %849 = vmatprep.subr.mxu0 0.0
    %850 = vmatpush1.msra.mxu0 %v808
    %851 = vmatprep.subr.mxu0 0.0
    %852 = vmatpush1.msra.mxu0 %v807
    %853 = vmatprep.subr.mxu0 0.0
    %854 = vmatpush1.msra.mxu0 %v806
    %855 = vmatprep.subr.mxu0 0.0
    %856 = vmatpush2.msra.mxu0 0.0
    %857 = vmatprep.subr.mxu0 0.0
    %858 = vmatpush2.msra.mxu0 0.0
    %859 = vmatprep.subr.mxu0 0.0
    %860 = vmatpush2.msra.mxu0 0.0
    %861 = vmatprep.subr.mxu0 0.0
    %862 = vmatpush2.msra.mxu0 0.0
    %863 = vmatprep.subr.mxu0 0.0
    %864 = vmatpush2.msra.mxu0 0.0
    %865 = vmatprep.subr.mxu0 0.0
    %866 = vmatpush2.msra.mxu0 0.0
    %867 = vmatprep.subr.mxu0 0.0
    %868 = vmatpush2.msra.mxu0 0.0
    %869 = vmatprep.subr.mxu0 0.0
    %870 = vmatpush2.msra.mxu0 0.0
    %871 = vmatprep.subr.mxu0 0.0
    %872 = vmatpush2.msra.mxu0 0.0
    %873 = vmatprep.subr.mxu0 0.0
    %874 = vmatpush2.msra.mxu0 0.0
    %875 = vmatprep.subr.mxu0 0.0
    %876 = vmatpush2.msra.mxu0 0.0
    %877 = vmatprep.subr.mxu0 0.0
    %878 = vmatpush2.msra.mxu0 0.0
    %879 = vmatprep.subr.mxu0 0.0
    %880 = vmatpush2.msra.mxu0 0.0
    %881 = vmatprep.subr.mxu0 0.0
    %882 = vmatpush2.msra.mxu0 0.0
    %883 = vmatprep.subr.mxu0 0.0
    %884 = vmatpush2.msra.mxu0 0.0
    %885 = vmatprep.subr.mxu0 0.0
    %886 = vmatpush2.msra.mxu0 0.0
    %887 = vmatprep.mubr.f32.mxu0 0.0
    %888 = vmatmul.mubr.f32.gmra.mxu0 %v812
    %v889 = vpop.f32.mrf.mxu0
    %v890 = vadd.f32 0.0, %v889
    %v891 = vpop.f32.mrf.mxu0
    %892 = vmatprep.mubr.f32.mxu0 0.0
    %893 = vmatmul.mubr.f32.gmra.mxu0 %v815
    %v894 = vpop.f32.mrf.mxu0
    %v895 = vadd.f32 0.0, %v894
    %v896 = vpop.f32.mrf.mxu0
    %897 = vmatprep.mubr.f32.mxu0 0.0
    %898 = vmatmul.mubr.f32.gmra.mxu0 %v818
    %v899 = vpop.f32.mrf.mxu0
    %v900 = vadd.f32 0.0, %v899
    %v901 = vpop.f32.mrf.mxu0
    %902 = vmatprep.mubr.f32.mxu0 0.0
    %903 = vmatmul.mubr.f32.gmra.mxu0 %v821
    %v904 = vpop.f32.mrf.mxu0
    %v905 = vadd.f32 0.0, %v904
    %v906 = vpop.f32.mrf.mxu0
    %907 = vdwg.mxu0
    %s908 = scalar_lea.vmem %s6, 64
    %v909 = vld [vmem:[%s908] sm:$0xff]
    %v910 = vld [vmem:[%s908 + $0x8] sm:$0xff]
    %v911 = vld [vmem:[%s908 + $0x10] sm:$0xff]
    %v912 = vld [vmem:[%s908 + $0x18] sm:$0xff]
    %913 = vmatprep.subr.mxu0 0.0
    %914 = vmatpush1.msra.mxu0 0.0
    %915 = vmatprep.subr.mxu0 0.0
    %916 = vmatpush1.msra.mxu0 0.0
    %917 = vmatprep.subr.mxu0 0.0
    %918 = vmatpush1.msra.mxu0 0.0
    %919 = vmatprep.subr.mxu0 0.0
    %920 = vmatpush1.msra.mxu0 0.0
    %921 = vmatprep.subr.mxu0 0.0
    %922 = vmatpush1.msra.mxu0 0.0
    %923 = vmatprep.subr.mxu0 0.0
    %924 = vmatpush1.msra.mxu0 0.0
    %925 = vmatprep.subr.mxu0 0.0
    %926 = vmatpush1.msra.mxu0 0.0
    %927 = vmatprep.subr.mxu0 0.0
    %928 = vmatpush1.msra.mxu0 0.0
    %929 = vmatprep.subr.mxu0 0.0
    %930 = vmatpush1.msra.mxu0 0.0
    %931 = vmatprep.subr.mxu0 0.0
    %932 = vmatpush1.msra.mxu0 0.0
    %933 = vmatprep.subr.mxu0 0.0
    %934 = vmatpush1.msra.mxu0 0.0
    %935 = vmatprep.subr.mxu0 0.0
    %936 = vmatpush1.msra.mxu0 0.0
    %937 = vmatprep.subr.mxu0 0.0
    %938 = vmatpush1.msra.mxu0 %v912
    %939 = vmatprep.subr.mxu0 0.0
    %940 = vmatpush1.msra.mxu0 %v911
    %941 = vmatprep.subr.mxu0 0.0
    %942 = vmatpush1.msra.mxu0 %v910
    %943 = vmatprep.subr.mxu0 0.0
    %944 = vmatpush1.msra.mxu0 %v909
    %945 = vmatprep.subr.mxu0 0.0
    %946 = vmatpush2.msra.mxu0 0.0
    %947 = vmatprep.subr.mxu0 0.0
    %948 = vmatpush2.msra.mxu0 0.0
    %949 = vmatprep.subr.mxu0 0.0
    %950 = vmatpush2.msra.mxu0 0.0
    %951 = vmatprep.subr.mxu0 0.0
    %952 = vmatpush2.msra.mxu0 0.0
    %953 = vmatprep.subr.mxu0 0.0
    %954 = vmatpush2.msra.mxu0 0.0
    %955 = vmatprep.subr.mxu0 0.0
    %956 = vmatpush2.msra.mxu0 0.0
    %957 = vmatprep.subr.mxu0 0.0
    %958 = vmatpush2.msra.mxu0 0.0
    %959 = vmatprep.subr.mxu0 0.0
    %960 = vmatpush2.msra.mxu0 0.0
    %961 = vmatprep.subr.mxu0 0.0
    %962 = vmatpush2.msra.mxu0 0.0
    %963 = vmatprep.subr.mxu0 0.0
    %964 = vmatpush2.msra.mxu0 0.0
    %965 = vmatprep.subr.mxu0 0.0
    %966 = vmatpush2.msra.mxu0 0.0
    %967 = vmatprep.subr.mxu0 0.0
    %968 = vmatpush2.msra.mxu0 0.0
    %969 = vmatprep.subr.mxu0 0.0
    %970 = vmatpush2.msra.mxu0 0.0
    %971 = vmatprep.subr.mxu0 0.0
    %972 = vmatpush2.msra.mxu0 0.0
    %973 = vmatprep.subr.mxu0 0.0
    %974 = vmatpush2.msra.mxu0 0.0
    %975 = vmatprep.subr.mxu0 0.0
    %976 = vmatpush2.msra.mxu0 0.0
    %977 = vmatprep.mubr.f32.mxu0 0.0
    %978 = vmatmul.mubr.f32.gmra.mxu0 %v812
    %v979 = vpop.f32.mrf.mxu0
    %v980 = vadd.f32 0.0, %v979
    %v981 = vpop.f32.mrf.mxu0
    %982 = vmatprep.mubr.f32.mxu0 0.0
    %983 = vmatmul.mubr.f32.gmra.mxu0 %v815
    %v984 = vpop.f32.mrf.mxu0
    %v985 = vadd.f32 0.0, %v984
    %v986 = vpop.f32.mrf.mxu0
    %987 = vmatprep.mubr.f32.mxu0 0.0
    %988 = vmatmul.mubr.f32.gmra.mxu0 %v818
    %v989 = vpop.f32.mrf.mxu0
    %v990 = vadd.f32 0.0, %v989
    %v991 = vpop.f32.mrf.mxu0
    %992 = vmatprep.mubr.f32.mxu0 0.0
    %993 = vmatmul.mubr.f32.gmra.mxu0 %v821
    %v994 = vpop.f32.mrf.mxu0
    %v995 = vadd.f32 0.0, %v994
    %v996 = vpop.f32.mrf.mxu0
    %997 = vdwg.mxu0
    %v998 = vrot.slane %v890, 6
    %v999 = vrot.slane %v895, 6
    %v1000 = vrot.slane %v900, 6
    %v1001 = vrot.slane %v905, 6
    %v1002 = vsel %vm337, %v1000, %v1001
    %v1003 = vsel %vm337, %v999, %v1000
    %v1004 = vsel %vm337, %v998, %v999
    %v1005 = vsel %vm337, %v1001, %v998
    %v1006 = vmul.f32 %v1005, %v106
    %v1007 = vmul.f32 %v1004, %v107
    %v1008 = vmul.f32 %v1003, %v108
    %v1009 = vmul.f32 %v1002, %v109
    %v1010 = vrot.slane %v980, 2
    %v1011 = vrot.slane %v985, 2
    %v1012 = vrot.slane %v990, 2
    %v1013 = vrot.slane %v995, 2
    %v1014 = vsel %vm350, %v1012, %v1013
    %v1015 = vsel %vm350, %v1011, %v1012
    %v1016 = vsel %vm350, %v1010, %v1011
    %v1017 = vsel %vm350, %v1013, %v1010
    %v1018 = vmul.f32 %v1016, %v118
    %v1019 = vmul.f32 %v1015, %v119
    %v1020 = vmul.f32 %v1014, %v120
    %v1021 = vmul.f32 %v1017, %v121
    %1022 = vmatprep.subr.mxu0 0.0
    %1023 = vmatpush1.msra.mxu0 0.0
    %1024 = vmatprep.subr.mxu0 0.0
    %1025 = vmatpush1.msra.mxu0 0.0
    %1026 = vmatprep.subr.mxu0 0.0
    %1027 = vmatpush1.msra.mxu0 0.0
    %1028 = vmatprep.subr.mxu0 0.0
    %1029 = vmatpush1.msra.mxu0 0.0
    %1030 = vmatprep.subr.mxu0 0.0
    %1031 = vmatpush1.msra.mxu0 0.0
    %1032 = vmatprep.subr.mxu0 0.0
    %1033 = vmatpush1.msra.mxu0 0.0
    %1034 = vmatprep.subr.mxu0 0.0
    %1035 = vmatpush1.msra.mxu0 0.0
    %1036 = vmatprep.subr.mxu0 0.0
    %1037 = vmatpush1.msra.mxu0 0.0
    %1038 = vmatprep.subr.mxu0 0.0
    %1039 = vmatpush1.msra.mxu0 0.0
    %1040 = vmatprep.subr.mxu0 0.0
    %1041 = vmatpush1.msra.mxu0 0.0
    %1042 = vmatprep.subr.mxu0 0.0
    %1043 = vmatpush1.msra.mxu0 0.0
    %1044 = vmatprep.subr.mxu0 0.0
    %1045 = vmatpush1.msra.mxu0 0.0
    %1046 = vmatprep.subr.mxu0 0.0
    %1047 = vmatpush1.msra.mxu0 %v805
    %1048 = vmatprep.subr.mxu0 0.0
    %1049 = vmatpush1.msra.mxu0 %v804
    %1050 = vmatprep.subr.mxu0 0.0
    %1051 = vmatpush1.msra.mxu0 %v803
    %1052 = vmatprep.subr.mxu0 0.0
    %1053 = vmatpush1.msra.mxu0 %v802
    %1054 = vmatprep.subr.mxu0 0.0
    %1055 = vmatpush2.msra.mxu0 0.0
    %1056 = vmatprep.subr.mxu0 0.0
    %1057 = vmatpush2.msra.mxu0 0.0
    %1058 = vmatprep.subr.mxu0 0.0
    %1059 = vmatpush2.msra.mxu0 0.0
    %1060 = vmatprep.subr.mxu0 0.0
    %1061 = vmatpush2.msra.mxu0 0.0
    %1062 = vmatprep.subr.mxu0 0.0
    %1063 = vmatpush2.msra.mxu0 0.0
    %1064 = vmatprep.subr.mxu0 0.0
    %1065 = vmatpush2.msra.mxu0 0.0
    %1066 = vmatprep.subr.mxu0 0.0
    %1067 = vmatpush2.msra.mxu0 0.0
    %1068 = vmatprep.subr.mxu0 0.0
    %1069 = vmatpush2.msra.mxu0 0.0
    %1070 = vmatprep.subr.mxu0 0.0
    %1071 = vmatpush2.msra.mxu0 0.0
    %1072 = vmatprep.subr.mxu0 0.0
    %1073 = vmatpush2.msra.mxu0 0.0
    %1074 = vmatprep.subr.mxu0 0.0
    %1075 = vmatpush2.msra.mxu0 0.0
    %1076 = vmatprep.subr.mxu0 0.0
    %1077 = vmatpush2.msra.mxu0 0.0
    %1078 = vmatprep.subr.mxu0 0.0
    %1079 = vmatpush2.msra.mxu0 0.0
    %1080 = vmatprep.subr.mxu0 0.0
    %1081 = vmatpush2.msra.mxu0 0.0
    %1082 = vmatprep.subr.mxu0 0.0
    %1083 = vmatpush2.msra.mxu0 0.0
    %1084 = vmatprep.subr.mxu0 0.0
    %1085 = vmatpush2.msra.mxu0 0.0
    %1086 = vmatprep.mubr.f32.mxu0 0.0
    %1087 = vmatmul.mubr.f32.gmra.mxu0 %v812
    %v1088 = vpop.f32.mrf.mxu0
    %v1089 = vadd.f32 %v1006, %v1088
    %v1090 = vpop.f32.mrf.mxu0
    %1091 = vmatprep.mubr.f32.mxu0 0.0
    %1092 = vmatmul.mubr.f32.gmra.mxu0 %v815
    %v1093 = vpop.f32.mrf.mxu0
    %v1094 = vadd.f32 %v1007, %v1093
    %v1095 = vpop.f32.mrf.mxu0
    %1096 = vmatprep.mubr.f32.mxu0 0.0
    %1097 = vmatmul.mubr.f32.gmra.mxu0 %v818
    %v1098 = vpop.f32.mrf.mxu0
    %v1099 = vadd.f32 %v1008, %v1098
    %v1100 = vpop.f32.mrf.mxu0
    %1101 = vmatprep.mubr.f32.mxu0 0.0
    %1102 = vmatmul.mubr.f32.gmra.mxu0 %v821
    %v1103 = vpop.f32.mrf.mxu0
    %v1104 = vadd.f32 %v1009, %v1103
    %v1105 = vpop.f32.mrf.mxu0
    %1106 = vdwg.mxu0
    %v1107 = vadd.f32 %v1089, %v1018
    %v1108 = vadd.f32 %v1094, %v1019
    %v1109 = vadd.f32 %v1099, %v1020
    %v1110 = vadd.f32 %v1104, %v1021
    %v1111 = vld [vmem:[%s7] sm:$0x1]
    %v1113 = vlaneseq
    %v1114 = vshrl.u32 %v1113, 7
    %v1115 = vsub.s32 0, %v1114
    %v1116 = vrot.slane %v1111, %v1115
    %v1118 = vadd.f32 %v1107, %v1116
    %v1119 = vadd.f32 %v1108, %v1116
    %v1120 = vadd.f32 %v1109, %v1116
    %v1121 = vadd.f32 %v1110, %v1116
    %vm1122 = vcmp.gt.f32.partialorder %v1118, 0.0
    %vm1123 = vcmp.gt.f32.partialorder %v1119, 0.0
    %vm1124 = vcmp.gt.f32.partialorder %v1120, 0.0
    %vm1125 = vcmp.gt.f32.partialorder %v1121, 0.0
    %v1126 = vmul.f32 %v1118, 0.3
    %v1127 = vmul.f32 %v1119, 0.3
    %v1128 = vmul.f32 %v1120, 0.3
    %v1129 = vmul.f32 %v1121, 0.3
    %v1130 = vsel %vm1122, %v1118, %v1126
    %v1131 = vsel %vm1123, %v1119, %v1127
    %v1132 = vsel %vm1124, %v1120, %v1128
    %v1133 = vsel %vm1125, %v1121, %v1129
    %v1134 = vld [vmem:[#allocation5] sm:$0xff]
    %v1135 = vld [vmem:[#allocation5 + $0x8] sm:$0xff]
    %v1136 = vld [vmem:[#allocation5 + $0x10] sm:$0xff]
    %v1137 = vld [vmem:[#allocation5 + $0x18] sm:$0xff]
    %v1138 = vld [vmem:[%s10] sm:$0x1]
    %v1140 = vlaneseq
    %v1141 = vshrl.u32 %v1140, 7
    %v1142 = vsub.s32 0, %v1141
    %v1143 = vrot.slane %v1138, %v1142
    %v1146 = vsel %vm810, %v1130, 0
    %v1149 = vsel %vm810, %v1131, 0
    %v1152 = vsel %vm810, %v1132, 0
    %v1155 = vsel %vm810, %v1133, 0
    %1157 = vmatprep.subr.mxu0 0.0
    %1158 = vmatpush1.msra.mxu0 0.0
    %1159 = vmatprep.subr.mxu0 0.0
    %1160 = vmatpush1.msra.mxu0 0.0
    %1161 = vmatprep.subr.mxu0 0.0
    %1162 = vmatpush1.msra.mxu0 0.0
    %1163 = vmatprep.subr.mxu0 0.0
    %1164 = vmatpush1.msra.mxu0 0.0
    %1165 = vmatprep.subr.mxu0 0.0
    %1166 = vmatpush1.msra.mxu0 0.0
    %1167 = vmatprep.subr.mxu0 0.0
    %1168 = vmatpush1.msra.mxu0 0.0
    %1169 = vmatprep.subr.mxu0 0.0
    %1170 = vmatpush1.msra.mxu0 0.0
    %1171 = vmatprep.subr.mxu0 0.0
    %1172 = vmatpush1.msra.mxu0 0.0
    %1173 = vmatprep.subr.mxu0 0.0
    %1174 = vmatpush1.msra.mxu0 0.0
    %1175 = vmatprep.subr.mxu0 0.0
    %1176 = vmatpush1.msra.mxu0 0.0
    %1177 = vmatprep.subr.mxu0 0.0
    %1178 = vmatpush1.msra.mxu0 0.0
    %1179 = vmatprep.subr.mxu0 0.0
    %1180 = vmatpush1.msra.mxu0 0.0
    %1181 = vmatprep.subr.mxu0 0.0
    %1182 = vmatpush1.msra.mxu0 %v1137
    %1183 = vmatprep.subr.mxu0 0.0
    %1184 = vmatpush1.msra.mxu0 %v1136
    %1185 = vmatprep.subr.mxu0 0.0
    %1186 = vmatpush1.msra.mxu0 %v1135
    %1187 = vmatprep.subr.mxu0 0.0
    %1188 = vmatpush1.msra.mxu0 %v1134
    %1189 = vmatprep.subr.mxu0 0.0
    %1190 = vmatpush2.msra.mxu0 0.0
    %1191 = vmatprep.subr.mxu0 0.0
    %1192 = vmatpush2.msra.mxu0 0.0
    %1193 = vmatprep.subr.mxu0 0.0
    %1194 = vmatpush2.msra.mxu0 0.0
    %1195 = vmatprep.subr.mxu0 0.0
    %1196 = vmatpush2.msra.mxu0 0.0
    %1197 = vmatprep.subr.mxu0 0.0
    %1198 = vmatpush2.msra.mxu0 0.0
    %1199 = vmatprep.subr.mxu0 0.0
    %1200 = vmatpush2.msra.mxu0 0.0
    %1201 = vmatprep.subr.mxu0 0.0
    %1202 = vmatpush2.msra.mxu0 0.0
    %1203 = vmatprep.subr.mxu0 0.0
    %1204 = vmatpush2.msra.mxu0 0.0
    %1205 = vmatprep.subr.mxu0 0.0
    %1206 = vmatpush2.msra.mxu0 0.0
    %1207 = vmatprep.subr.mxu0 0.0
    %1208 = vmatpush2.msra.mxu0 0.0
    %1209 = vmatprep.subr.mxu0 0.0
    %1210 = vmatpush2.msra.mxu0 0.0
    %1211 = vmatprep.subr.mxu0 0.0
    %1212 = vmatpush2.msra.mxu0 0.0
    %1213 = vmatprep.subr.mxu0 0.0
    %1214 = vmatpush2.msra.mxu0 0.0
    %1215 = vmatprep.subr.mxu0 0.0
    %1216 = vmatpush2.msra.mxu0 0.0
    %1217 = vmatprep.subr.mxu0 0.0
    %1218 = vmatpush2.msra.mxu0 0.0
    %1219 = vmatprep.subr.mxu0 0.0
    %1220 = vmatpush2.msra.mxu0 0.0
    %1221 = vmatprep.mubr.f32.mxu0 0.0
    %1222 = vmatmul.mubr.f32.gmra.mxu0 %v1146
    %v1223 = vpop.f32.mrf.mxu0
    %v1224 = vadd.f32 %v1143, %v1223
    %v1225 = vpop.f32.mrf.mxu0
    %1226 = vmatprep.mubr.f32.mxu0 0.0
    %1227 = vmatmul.mubr.f32.gmra.mxu0 %v1149
    %v1228 = vpop.f32.mrf.mxu0
    %v1229 = vadd.f32 %v1143, %v1228
    %v1230 = vpop.f32.mrf.mxu0
    %1231 = vmatprep.mubr.f32.mxu0 0.0
    %1232 = vmatmul.mubr.f32.gmra.mxu0 %v1152
    %v1233 = vpop.f32.mrf.mxu0
    %v1234 = vadd.f32 %v1143, %v1233
    %v1235 = vpop.f32.mrf.mxu0
    %1236 = vmatprep.mubr.f32.mxu0 0.0
    %1237 = vmatmul.mubr.f32.gmra.mxu0 %v1155
    %v1238 = vpop.f32.mrf.mxu0
    %v1239 = vadd.f32 %v1143, %v1238
    %v1240 = vpop.f32.mrf.mxu0
    %1241 = vdwg.mxu0
    %v1242 = vld [vmem:[#allocation7] sm:$0xff]
    %v1243 = vld [vmem:[#allocation7 + $0x8] sm:$0xff]
    %v1244 = vld [vmem:[#allocation7 + $0x10] sm:$0xff]
    %v1245 = vld [vmem:[#allocation7 + $0x18] sm:$0xff]
    %v1247 = vsel %vm810, 0.0, 0
    %1249 = vmatprep.subr.mxu0 0.0
    %1250 = vmatpush1.msra.mxu0 0.0
    %1251 = vmatprep.subr.mxu0 0.0
    %1252 = vmatpush1.msra.mxu0 0.0
    %1253 = vmatprep.subr.mxu0 0.0
    %1254 = vmatpush1.msra.mxu0 0.0
    %1255 = vmatprep.subr.mxu0 0.0
    %1256 = vmatpush1.msra.mxu0 0.0
    %1257 = vmatprep.subr.mxu0 0.0
    %1258 = vmatpush1.msra.mxu0 0.0
    %1259 = vmatprep.subr.mxu0 0.0
    %1260 = vmatpush1.msra.mxu0 0.0
    %1261 = vmatprep.subr.mxu0 0.0
    %1262 = vmatpush1.msra.mxu0 0.0
    %1263 = vmatprep.subr.mxu0 0.0
    %1264 = vmatpush1.msra.mxu0 0.0
    %1265 = vmatprep.subr.mxu0 0.0
    %1266 = vmatpush1.msra.mxu0 0.0
    %1267 = vmatprep.subr.mxu0 0.0
    %1268 = vmatpush1.msra.mxu0 0.0
    %1269 = vmatprep.subr.mxu0 0.0
    %1270 = vmatpush1.msra.mxu0 0.0
    %1271 = vmatprep.subr.mxu0 0.0
    %1272 = vmatpush1.msra.mxu0 0.0
    %1273 = vmatprep.subr.mxu0 0.0
    %1274 = vmatpush1.msra.mxu0 %v1245
    %1275 = vmatprep.subr.mxu0 0.0
    %1276 = vmatpush1.msra.mxu0 %v1244
    %1277 = vmatprep.subr.mxu0 0.0
    %1278 = vmatpush1.msra.mxu0 %v1243
    %1279 = vmatprep.subr.mxu0 0.0
    %1280 = vmatpush1.msra.mxu0 %v1242
    %1281 = vmatprep.subr.mxu0 0.0
    %1282 = vmatpush2.msra.mxu0 0.0
    %1283 = vmatprep.subr.mxu0 0.0
    %1284 = vmatpush2.msra.mxu0 0.0
    %1285 = vmatprep.subr.mxu0 0.0
    %1286 = vmatpush2.msra.mxu0 0.0
    %1287 = vmatprep.subr.mxu0 0.0
    %1288 = vmatpush2.msra.mxu0 0.0
    %1289 = vmatprep.subr.mxu0 0.0
    %1290 = vmatpush2.msra.mxu0 0.0
    %1291 = vmatprep.subr.mxu0 0.0
    %1292 = vmatpush2.msra.mxu0 0.0
    %1293 = vmatprep.subr.mxu0 0.0
    %1294 = vmatpush2.msra.mxu0 0.0
    %1295 = vmatprep.subr.mxu0 0.0
    %1296 = vmatpush2.msra.mxu0 0.0
    %1297 = vmatprep.subr.mxu0 0.0
    %1298 = vmatpush2.msra.mxu0 0.0
    %1299 = vmatprep.subr.mxu0 0.0
    %1300 = vmatpush2.msra.mxu0 0.0
    %1301 = vmatprep.subr.mxu0 0.0
    %1302 = vmatpush2.msra.mxu0 0.0
    %1303 = vmatprep.subr.mxu0 0.0
    %1304 = vmatpush2.msra.mxu0 0.0
    %1305 = vmatprep.subr.mxu0 0.0
    %1306 = vmatpush2.msra.mxu0 0.0
    %1307 = vmatprep.subr.mxu0 0.0
    %1308 = vmatpush2.msra.mxu0 0.0
    %1309 = vmatprep.subr.mxu0 0.0
    %1310 = vmatpush2.msra.mxu0 0.0
    %1311 = vmatprep.subr.mxu0 0.0
    %1312 = vmatpush2.msra.mxu0 0.0
    %1313 = vmatprep.mubr.f32.mxu0 0.0
    %1314 = vmatmul.mubr.f32.gmra.mxu0 %v1247
    %v1315 = vpop.f32.mrf.mxu0
    %v1316 = vadd.f32 0.0, %v1315
    %v1317 = vpop.f32.mrf.mxu0
    %1318 = vdwg.mxu0
    %v1319 = vadd.f32 %v1224, %v1316
    %v1320 = vxor.u32 %v1319, 2147483648
    %v1321 = vmul.f32 %v1320, 1.442695
    %v1322 = vpow.pop %v1321
    %v1323 = vadd.f32 %v1322, 1.0
    %v1324 = vrcp.pop %v1323
    %v1325 = vmul.f32 1.0, %v1324
    %v1326 = vtanh.pop %v1319
    %v1327 = vmul.f32 %v1325, 0.0
    %1329 = vrot.lane.b32.xlu0 %v1326, 64
    %v1330 = vpop.permute.xlu0 %1329
    %v1332 = vmul.f32 %v1325, %v1330
    %1334 = vrot.lane.b32.xlu0 %v1332, 32
    %v1335 = vpop.permute.xlu0 %1334
    %v1337 = vadd.f32 %v1327, %v1335
    %v1338 = vtanh.pop %v1337
    %1340 = vrot.lane.b32.xlu0 %v1338, 64
    %v1341 = vpop.permute.xlu0 %1340
    %v1343 = vmul.f32 %v1325, %v1341
    %v1344 = vadd.f32 %v1343, 0.0
    %1346 = vrot.lane.b32.xlu0 %v1343, 32
    %v1347 = vpop.permute.xlu0 %1346
    %v1348 = vsel %vm810, %v1347, 0
    %1350 = vmatprep.subr.mxu0 0.0
    %1351 = vmatpush1.msra.mxu0 0.0
    %1352 = vmatprep.subr.mxu0 0.0
    %1353 = vmatpush1.msra.mxu0 0.0
    %1354 = vmatprep.subr.mxu0 0.0
    %1355 = vmatpush1.msra.mxu0 0.0
    %1356 = vmatprep.subr.mxu0 0.0
    %1357 = vmatpush1.msra.mxu0 0.0
    %1358 = vmatprep.subr.mxu0 0.0
    %1359 = vmatpush1.msra.mxu0 0.0
    %1360 = vmatprep.subr.mxu0 0.0
    %1361 = vmatpush1.msra.mxu0 0.0
    %1362 = vmatprep.subr.mxu0 0.0
    %1363 = vmatpush1.msra.mxu0 0.0
    %1364 = vmatprep.subr.mxu0 0.0
    %1365 = vmatpush1.msra.mxu0 0.0
    %1366 = vmatprep.subr.mxu0 0.0
    %1367 = vmatpush1.msra.mxu0 0.0
    %1368 = vmatprep.subr.mxu0 0.0
    %1369 = vmatpush1.msra.mxu0 0.0
    %1370 = vmatprep.subr.mxu0 0.0
    %1371 = vmatpush1.msra.mxu0 0.0
    %1372 = vmatprep.subr.mxu0 0.0
    %1373 = vmatpush1.msra.mxu0 0.0
    %1374 = vmatprep.subr.mxu0 0.0
    %1375 = vmatpush1.msra.mxu0 %v1245
    %1376 = vmatprep.subr.mxu0 0.0
    %1377 = vmatpush1.msra.mxu0 %v1244
    %1378 = vmatprep.subr.mxu0 0.0
    %1379 = vmatpush1.msra.mxu0 %v1243
    %1380 = vmatprep.subr.mxu0 0.0
    %1381 = vmatpush1.msra.mxu0 %v1242
    %1382 = vmatprep.subr.mxu0 0.0
    %1383 = vmatpush2.msra.mxu0 0.0
    %1384 = vmatprep.subr.mxu0 0.0
    %1385 = vmatpush2.msra.mxu0 0.0
    %1386 = vmatprep.subr.mxu0 0.0
    %1387 = vmatpush2.msra.mxu0 0.0
    %1388 = vmatprep.subr.mxu0 0.0
    %1389 = vmatpush2.msra.mxu0 0.0
    %1390 = vmatprep.subr.mxu0 0.0
    %1391 = vmatpush2.msra.mxu0 0.0
    %1392 = vmatprep.subr.mxu0 0.0
    %1393 = vmatpush2.msra.mxu0 0.0
    %1394 = vmatprep.subr.mxu0 0.0
    %1395 = vmatpush2.msra.mxu0 0.0
    %1396 = vmatprep.subr.mxu0 0.0
    %1397 = vmatpush2.msra.mxu0 0.0
    %1398 = vmatprep.subr.mxu0 0.0
    %1399 = vmatpush2.msra.mxu0 0.0
    %1400 = vmatprep.subr.mxu0 0.0
    %1401 = vmatpush2.msra.mxu0 0.0
    %1402 = vmatprep.subr.mxu0 0.0
    %1403 = vmatpush2.msra.mxu0 0.0
    %1404 = vmatprep.subr.mxu0 0.0
    %1405 = vmatpush2.msra.mxu0 0.0
    %1406 = vmatprep.subr.mxu0 0.0
    %1407 = vmatpush2.msra.mxu0 0.0
    %1408 = vmatprep.subr.mxu0 0.0
    %1409 = vmatpush2.msra.mxu0 0.0
    %1410 = vmatprep.subr.mxu0 0.0
    %1411 = vmatpush2.msra.mxu0 0.0
    %1412 = vmatprep.subr.mxu0 0.0
    %1413 = vmatpush2.msra.mxu0 0.0
    %1414 = vmatprep.mubr.f32.mxu0 0.0
    %1415 = vmatmul.mubr.f32.gmra.mxu0 %v1348
    %v1416 = vpop.f32.mrf.mxu0
    %v1417 = vadd.f32 0.0, %v1416
    %v1418 = vpop.f32.mrf.mxu0
    %1419 = vdwg.mxu0
    %v1421 = vrot.slane %v1417, 6
    %v1423 = vadd.f32 %v1224, %v1421
    %v1424 = vxor.u32 %v1423, 2147483648
    %v1425 = vmul.f32 %v1424, 1.442695
    %v1426 = vpow.pop %v1425
    %v1427 = vadd.f32 %v1426, 1.0
    %v1428 = vrcp.pop %v1427
    %v1429 = vmul.f32 1.0, %v1428
    %v1430 = vtanh.pop %v1423
    %v1432 = vrot.slane %v1337, 6
    %v1434 = vmul.f32 %v1429, %v1432
    %1436 = vrot.lane.b32.xlu0 %v1430, 64
    %v1437 = vpop.permute.xlu0 %1436
    %v1439 = vmul.f32 %v1429, %v1437
    %1441 = vrot.lane.b32.xlu0 %v1439, 32
    %v1442 = vpop.permute.xlu0 %1441
    %v1444 = vadd.f32 %v1434, %v1442
    %v1445 = vtanh.pop %v1444
    %1447 = vrot.lane.b32.xlu0 %v1445, 64
    %v1448 = vpop.permute.xlu0 %1447
    %v1450 = vmul.f32 %v1429, %v1448
    %v1452 = vrot.slane %v1450, 2
    %v1454 = vadd.f32 %v1344, %v1452
    %1455 = vrot.lane.b32.xlu0 %v1452, 32
    %v1456 = vpop.permute.xlu0 %1455
    %v1457 = vsel %vm810, %v1456, 0
    %1459 = vmatprep.subr.mxu0 0.0
    %1460 = vmatpush1.msra.mxu0 0.0
    %1461 = vmatprep.subr.mxu0 0.0
    %1462 = vmatpush1.msra.mxu0 0.0
    %1463 = vmatprep.subr.mxu0 0.0
    %1464 = vmatpush1.msra.mxu0 0.0
    %1465 = vmatprep.subr.mxu0 0.0
    %1466 = vmatpush1.msra.mxu0 0.0
    %1467 = vmatprep.subr.mxu0 0.0
    %1468 = vmatpush1.msra.mxu0 0.0
    %1469 = vmatprep.subr.mxu0 0.0
    %1470 = vmatpush1.msra.mxu0 0.0
    %1471 = vmatprep.subr.mxu0 0.0
    %1472 = vmatpush1.msra.mxu0 0.0
    %1473 = vmatprep.subr.mxu0 0.0
    %1474 = vmatpush1.msra.mxu0 0.0
    %1475 = vmatprep.subr.mxu0 0.0
    %1476 = vmatpush1.msra.mxu0 0.0
    %1477 = vmatprep.subr.mxu0 0.0
    %1478 = vmatpush1.msra.mxu0 0.0
    %1479 = vmatprep.subr.mxu0 0.0
    %1480 = vmatpush1.msra.mxu0 0.0
    %1481 = vmatprep.subr.mxu0 0.0
    %1482 = vmatpush1.msra.mxu0 0.0
    %1483 = vmatprep.subr.mxu0 0.0
    %1484 = vmatpush1.msra.mxu0 %v1245
    %1485 = vmatprep.subr.mxu0 0.0
    %1486 = vmatpush1.msra.mxu0 %v1244
    %1487 = vmatprep.subr.mxu0 0.0
    %1488 = vmatpush1.msra.mxu0 %v1243
    %1489 = vmatprep.subr.mxu0 0.0
    %1490 = vmatpush1.msra.mxu0 %v1242
    %1491 = vmatprep.subr.mxu0 0.0
    %1492 = vmatpush2.msra.mxu0 0.0
    %1493 = vmatprep.subr.mxu0 0.0
    %1494 = vmatpush2.msra.mxu0 0.0
    %1495 = vmatprep.subr.mxu0 0.0
    %1496 = vmatpush2.msra.mxu0 0.0
    %1497 = vmatprep.subr.mxu0 0.0
    %1498 = vmatpush2.msra.mxu0 0.0
    %1499 = vmatprep.subr.mxu0 0.0
    %1500 = vmatpush2.msra.mxu0 0.0
    %1501 = vmatprep.subr.mxu0 0.0
    %1502 = vmatpush2.msra.mxu0 0.0
    %1503 = vmatprep.subr.mxu0 0.0
    %1504 = vmatpush2.msra.mxu0 0.0
    %1505 = vmatprep.subr.mxu0 0.0
    %1506 = vmatpush2.msra.mxu0 0.0
    %1507 = vmatprep.subr.mxu0 0.0
    %1508 = vmatpush2.msra.mxu0 0.0
    %1509 = vmatprep.subr.mxu0 0.0
    %1510 = vmatpush2.msra.mxu0 0.0
    %1511 = vmatprep.subr.mxu0 0.0
    %1512 = vmatpush2.msra.mxu0 0.0
    %1513 = vmatprep.subr.mxu0 0.0
    %1514 = vmatpush2.msra.mxu0 0.0
    %1515 = vmatprep.subr.mxu0 0.0
    %1516 = vmatpush2.msra.mxu0 0.0
    %1517 = vmatprep.subr.mxu0 0.0
    %1518 = vmatpush2.msra.mxu0 0.0
    %1519 = vmatprep.subr.mxu0 0.0
    %1520 = vmatpush2.msra.mxu0 0.0
    %1521 = vmatprep.subr.mxu0 0.0
    %1522 = vmatpush2.msra.mxu0 0.0
    %1523 = vmatprep.mubr.f32.mxu0 0.0
    %1524 = vmatmul.mubr.f32.gmra.mxu0 %v1457
    %v1525 = vpop.f32.mrf.mxu0
    %v1526 = vadd.f32 0.0, %v1525
    %v1527 = vpop.f32.mrf.mxu0
    %1528 = vdwg.mxu0
    %v1530 = vrot.slane %v1526, 4
    %v1532 = vadd.f32 %v1224, %v1530
    %v1533 = vxor.u32 %v1532, 2147483648
    %v1534 = vmul.f32 %v1533, 1.442695
    %v1535 = vpow.pop %v1534
    %v1536 = vadd.f32 %v1535, 1.0
    %v1537 = vrcp.pop %v1536
    %v1538 = vmul.f32 1.0, %v1537
    %v1539 = vtanh.pop %v1532
    %v1541 = vrot.slane %v1444, 6
    %v1543 = vmul.f32 %v1538, %v1541
    %1545 = vrot.lane.b32.xlu0 %v1539, 64
    %v1546 = vpop.permute.xlu0 %1545
    %v1548 = vmul.f32 %v1538, %v1546
    %1550 = vrot.lane.b32.xlu0 %v1548, 32
    %v1551 = vpop.permute.xlu0 %1550
    %v1553 = vadd.f32 %v1543, %v1551
    %v1554 = vtanh.pop %v1553
    %1556 = vrot.lane.b32.xlu0 %v1554, 64
    %v1557 = vpop.permute.xlu0 %1556
    %v1559 = vmul.f32 %v1538, %v1557
    %v1561 = vrot.slane %v1559, 4
    %v1563 = vadd.f32 %v1454, %v1561
    %1564 = vrot.lane.b32.xlu0 %v1561, 32
    %v1565 = vpop.permute.xlu0 %1564
    %v1566 = vsel %vm810, %v1565, 0
    %1568 = vmatprep.subr.mxu0 0.0
    %1569 = vmatpush1.msra.mxu0 0.0
    %1570 = vmatprep.subr.mxu0 0.0
    %1571 = vmatpush1.msra.mxu0 0.0
    %1572 = vmatprep.subr.mxu0 0.0
    %1573 = vmatpush1.msra.mxu0 0.0
    %1574 = vmatprep.subr.mxu0 0.0
    %1575 = vmatpush1.msra.mxu0 0.0
    %1576 = vmatprep.subr.mxu0 0.0
    %1577 = vmatpush1.msra.mxu0 0.0
    %1578 = vmatprep.subr.mxu0 0.0
    %1579 = vmatpush1.msra.mxu0 0.0
    %1580 = vmatprep.subr.mxu0 0.0
    %1581 = vmatpush1.msra.mxu0 0.0
    %1582 = vmatprep.subr.mxu0 0.0
    %1583 = vmatpush1.msra.mxu0 0.0
    %1584 = vmatprep.subr.mxu0 0.0
    %1585 = vmatpush1.msra.mxu0 0.0
    %1586 = vmatprep.subr.mxu0 0.0
    %1587 = vmatpush1.msra.mxu0 0.0
    %1588 = vmatprep.subr.mxu0 0.0
    %1589 = vmatpush1.msra.mxu0 0.0
    %1590 = vmatprep.subr.mxu0 0.0
    %1591 = vmatpush1.msra.mxu0 0.0
    %1592 = vmatprep.subr.mxu0 0.0
    %1593 = vmatpush1.msra.mxu0 %v1245
    %1594 = vmatprep.subr.mxu0 0.0
    %1595 = vmatpush1.msra.mxu0 %v1244
    %1596 = vmatprep.subr.mxu0 0.0
    %1597 = vmatpush1.msra.mxu0 %v1243
    %1598 = vmatprep.subr.mxu0 0.0
    %1599 = vmatpush1.msra.mxu0 %v1242
    %1600 = vmatprep.subr.mxu0 0.0
    %1601 = vmatpush2.msra.mxu0 0.0
    %1602 = vmatprep.subr.mxu0 0.0
    %1603 = vmatpush2.msra.mxu0 0.0
    %1604 = vmatprep.subr.mxu0 0.0
    %1605 = vmatpush2.msra.mxu0 0.0
    %1606 = vmatprep.subr.mxu0 0.0
    %1607 = vmatpush2.msra.mxu0 0.0
    %1608 = vmatprep.subr.mxu0 0.0
    %1609 = vmatpush2.msra.mxu0 0.0
    %1610 = vmatprep.subr.mxu0 0.0
    %1611 = vmatpush2.msra.mxu0 0.0
    %1612 = vmatprep.subr.mxu0 0.0
    %1613 = vmatpush2.msra.mxu0 0.0
    %1614 = vmatprep.subr.mxu0 0.0
    %1615 = vmatpush2.msra.mxu0 0.0
    %1616 = vmatprep.subr.mxu0 0.0
    %1617 = vmatpush2.msra.mxu0 0.0
    %1618 = vmatprep.subr.mxu0 0.0
    %1619 = vmatpush2.msra.mxu0 0.0
    %1620 = vmatprep.subr.mxu0 0.0
    %1621 = vmatpush2.msra.mxu0 0.0
    %1622 = vmatprep.subr.mxu0 0.0
    %1623 = vmatpush2.msra.mxu0 0.0
    %1624 = vmatprep.subr.mxu0 0.0
    %1625 = vmatpush2.msra.mxu0 0.0
    %1626 = vmatprep.subr.mxu0 0.0
    %1627 = vmatpush2.msra.mxu0 0.0
    %1628 = vmatprep.subr.mxu0 0.0
    %1629 = vmatpush2.msra.mxu0 0.0
    %1630 = vmatprep.subr.mxu0 0.0
    %1631 = vmatpush2.msra.mxu0 0.0
    %1632 = vmatprep.mubr.f32.mxu0 0.0
    %1633 = vmatmul.mubr.f32.gmra.mxu0 %v1566
    %v1634 = vpop.f32.mrf.mxu0
    %v1635 = vadd.f32 0.0, %v1634
    %v1636 = vpop.f32.mrf.mxu0
    %1637 = vdwg.mxu0
    %v1639 = vrot.slane %v1635, 2
    %v1641 = vadd.f32 %v1224, %v1639
    %v1642 = vxor.u32 %v1641, 2147483648
    %v1643 = vmul.f32 %v1642, 1.442695
    %v1644 = vpow.pop %v1643
    %v1645 = vadd.f32 %v1644, 1.0
    %v1646 = vrcp.pop %v1645
    %v1647 = vmul.f32 1.0, %v1646
    %v1648 = vtanh.pop %v1641
    %v1650 = vrot.slane %v1553, 6
    %v1652 = vmul.f32 %v1647, %v1650
    %1654 = vrot.lane.b32.xlu0 %v1648, 64
    %v1655 = vpop.permute.xlu0 %1654
    %v1657 = vmul.f32 %v1647, %v1655
    %1659 = vrot.lane.b32.xlu0 %v1657, 32
    %v1660 = vpop.permute.xlu0 %1659
    %v1662 = vadd.f32 %v1652, %v1660
    %v1663 = vtanh.pop %v1662
    %1665 = vrot.lane.b32.xlu0 %v1663, 64
    %v1666 = vpop.permute.xlu0 %1665
    %v1668 = vmul.f32 %v1647, %v1666
    %v1670 = vrot.slane %v1668, 6
    %v1672 = vadd.f32 %v1563, %v1670
    %1673 = vrot.lane.b32.xlu0 %v1670, 32
    %v1674 = vpop.permute.xlu0 %1673
    %v1675 = vsel %vm810, %v1674, 0
    %1677 = vmatprep.subr.mxu0 0.0
    %1678 = vmatpush1.msra.mxu0 0.0
    %1679 = vmatprep.subr.mxu0 0.0
    %1680 = vmatpush1.msra.mxu0 0.0
    %1681 = vmatprep.subr.mxu0 0.0
    %1682 = vmatpush1.msra.mxu0 0.0
    %1683 = vmatprep.subr.mxu0 0.0
    %1684 = vmatpush1.msra.mxu0 0.0
    %1685 = vmatprep.subr.mxu0 0.0
    %1686 = vmatpush1.msra.mxu0 0.0
    %1687 = vmatprep.subr.mxu0 0.0
    %1688 = vmatpush1.msra.mxu0 0.0
    %1689 = vmatprep.subr.mxu0 0.0
    %1690 = vmatpush1.msra.mxu0 0.0
    %1691 = vmatprep.subr.mxu0 0.0
    %1692 = vmatpush1.msra.mxu0 0.0
    %1693 = vmatprep.subr.mxu0 0.0
    %1694 = vmatpush1.msra.mxu0 0.0
    %1695 = vmatprep.subr.mxu0 0.0
    %1696 = vmatpush1.msra.mxu0 0.0
    %1697 = vmatprep.subr.mxu0 0.0
    %1698 = vmatpush1.msra.mxu0 0.0
    %1699 = vmatprep.subr.mxu0 0.0
    %1700 = vmatpush1.msra.mxu0 0.0
    %1701 = vmatprep.subr.mxu0 0.0
    %1702 = vmatpush1.msra.mxu0 %v1245
    %1703 = vmatprep.subr.mxu0 0.0
    %1704 = vmatpush1.msra.mxu0 %v1244
    %1705 = vmatprep.subr.mxu0 0.0
    %1706 = vmatpush1.msra.mxu0 %v1243
    %1707 = vmatprep.subr.mxu0 0.0
    %1708 = vmatpush1.msra.mxu0 %v1242
    %1709 = vmatprep.subr.mxu0 0.0
    %1710 = vmatpush2.msra.mxu0 0.0
    %1711 = vmatprep.subr.mxu0 0.0
    %1712 = vmatpush2.msra.mxu0 0.0
    %1713 = vmatprep.subr.mxu0 0.0
    %1714 = vmatpush2.msra.mxu0 0.0
    %1715 = vmatprep.subr.mxu0 0.0
    %1716 = vmatpush2.msra.mxu0 0.0
    %1717 = vmatprep.subr.mxu0 0.0
    %1718 = vmatpush2.msra.mxu0 0.0
    %1719 = vmatprep.subr.mxu0 0.0
    %1720 = vmatpush2.msra.mxu0 0.0
    %1721 = vmatprep.subr.mxu0 0.0
    %1722 = vmatpush2.msra.mxu0 0.0
    %1723 = vmatprep.subr.mxu0 0.0
    %1724 = vmatpush2.msra.mxu0 0.0
    %1725 = vmatprep.subr.mxu0 0.0
    %1726 = vmatpush2.msra.mxu0 0.0
    %1727 = vmatprep.subr.mxu0 0.0
    %1728 = vmatpush2.msra.mxu0 0.0
    %1729 = vmatprep.subr.mxu0 0.0
    %1730 = vmatpush2.msra.mxu0 0.0
    %1731 = vmatprep.subr.mxu0 0.0
    %1732 = vmatpush2.msra.mxu0 0.0
    %1733 = vmatprep.subr.mxu0 0.0
    %1734 = vmatpush2.msra.mxu0 0.0
    %1735 = vmatprep.subr.mxu0 0.0
    %1736 = vmatpush2.msra.mxu0 0.0
    %1737 = vmatprep.subr.mxu0 0.0
    %1738 = vmatpush2.msra.mxu0 0.0
    %1739 = vmatprep.subr.mxu0 0.0
    %1740 = vmatpush2.msra.mxu0 0.0
    %1741 = vmatprep.mubr.f32.mxu0 0.0
    %1742 = vmatmul.mubr.f32.gmra.mxu0 %v1675
    %v1743 = vpop.f32.mrf.mxu0
    %v1744 = vadd.f32 0.0, %v1743
    %v1745 = vpop.f32.mrf.mxu0
    %1746 = vdwg.mxu0
    %v1747 = vadd.f32 %v1229, %v1744
    %v1748 = vxor.u32 %v1747, 2147483648
    %v1749 = vmul.f32 %v1748, 1.442695
    %v1750 = vpow.pop %v1749
    %v1751 = vadd.f32 %v1750, 1.0
    %v1752 = vrcp.pop %v1751
    %v1753 = vmul.f32 1.0, %v1752
    %v1754 = vtanh.pop %v1747
    %v1756 = vrot.slane %v1662, 6
    %v1758 = vmul.f32 %v1753, %v1756
    %1760 = vrot.lane.b32.xlu0 %v1754, 64
    %v1761 = vpop.permute.xlu0 %1760
    %v1763 = vmul.f32 %v1753, %v1761
    %1765 = vrot.lane.b32.xlu0 %v1763, 32
    %v1766 = vpop.permute.xlu0 %1765
    %v1768 = vadd.f32 %v1758, %v1766
    %v1769 = vtanh.pop %v1768
    %1771 = vrot.lane.b32.xlu0 %v1769, 64
    %v1772 = vpop.permute.xlu0 %1771
    %v1774 = vmul.f32 %v1753, %v1772
    %v1775 = vadd.f32 %v1672, %v1774
    %1777 = vrot.lane.b32.xlu0 %v1774, 32
    %v1778 = vpop.permute.xlu0 %1777
    %v1779 = vsel %vm810, %v1778, 0
    %1781 = vmatprep.subr.mxu0 0.0
    %1782 = vmatpush1.msra.mxu0 0.0
    %1783 = vmatprep.subr.mxu0 0.0
    %1784 = vmatpush1.msra.mxu0 0.0
    %1785 = vmatprep.subr.mxu0 0.0
    %1786 = vmatpush1.msra.mxu0 0.0
    %1787 = vmatprep.subr.mxu0 0.0
    %1788 = vmatpush1.msra.mxu0 0.0
    %1789 = vmatprep.subr.mxu0 0.0
    %1790 = vmatpush1.msra.mxu0 0.0
    %1791 = vmatprep.subr.mxu0 0.0
    %1792 = vmatpush1.msra.mxu0 0.0
    %1793 = vmatprep.subr.mxu0 0.0
    %1794 = vmatpush1.msra.mxu0 0.0
    %1795 = vmatprep.subr.mxu0 0.0
    %1796 = vmatpush1.msra.mxu0 0.0
    %1797 = vmatprep.subr.mxu0 0.0
    %1798 = vmatpush1.msra.mxu0 0.0
    %1799 = vmatprep.subr.mxu0 0.0
    %1800 = vmatpush1.msra.mxu0 0.0
    %1801 = vmatprep.subr.mxu0 0.0
    %1802 = vmatpush1.msra.mxu0 0.0
    %1803 = vmatprep.subr.mxu0 0.0
    %1804 = vmatpush1.msra.mxu0 0.0
    %1805 = vmatprep.subr.mxu0 0.0
    %1806 = vmatpush1.msra.mxu0 %v1245
    %1807 = vmatprep.subr.mxu0 0.0
    %1808 = vmatpush1.msra.mxu0 %v1244
    %1809 = vmatprep.subr.mxu0 0.0
    %1810 = vmatpush1.msra.mxu0 %v1243
    %1811 = vmatprep.subr.mxu0 0.0
    %1812 = vmatpush1.msra.mxu0 %v1242
    %1813 = vmatprep.subr.mxu0 0.0
    %1814 = vmatpush2.msra.mxu0 0.0
    %1815 = vmatprep.subr.mxu0 0.0
    %1816 = vmatpush2.msra.mxu0 0.0
    %1817 = vmatprep.subr.mxu0 0.0
    %1818 = vmatpush2.msra.mxu0 0.0
    %1819 = vmatprep.subr.mxu0 0.0
    %1820 = vmatpush2.msra.mxu0 0.0
    %1821 = vmatprep.subr.mxu0 0.0
    %1822 = vmatpush2.msra.mxu0 0.0
    %1823 = vmatprep.subr.mxu0 0.0
    %1824 = vmatpush2.msra.mxu0 0.0
    %1825 = vmatprep.subr.mxu0 0.0
    %1826 = vmatpush2.msra.mxu0 0.0
    %1827 = vmatprep.subr.mxu0 0.0
    %1828 = vmatpush2.msra.mxu0 0.0
    %1829 = vmatprep.subr.mxu0 0.0
    %1830 = vmatpush2.msra.mxu0 0.0
    %1831 = vmatprep.subr.mxu0 0.0
    %1832 = vmatpush2.msra.mxu0 0.0
    %1833 = vmatprep.subr.mxu0 0.0
    %1834 = vmatpush2.msra.mxu0 0.0
    %1835 = vmatprep.subr.mxu0 0.0
    %1836 = vmatpush2.msra.mxu0 0.0
    %1837 = vmatprep.subr.mxu0 0.0
    %1838 = vmatpush2.msra.mxu0 0.0
    %1839 = vmatprep.subr.mxu0 0.0
    %1840 = vmatpush2.msra.mxu0 0.0
    %1841 = vmatprep.subr.mxu0 0.0
    %1842 = vmatpush2.msra.mxu0 0.0
    %1843 = vmatprep.subr.mxu0 0.0
    %1844 = vmatpush2.msra.mxu0 0.0
    %1845 = vmatprep.mubr.f32.mxu0 0.0
    %1846 = vmatmul.mubr.f32.gmra.mxu0 %v1779
    %v1847 = vpop.f32.mrf.mxu0
    %v1848 = vadd.f32 0.0, %v1847
    %v1849 = vpop.f32.mrf.mxu0
    %1850 = vdwg.mxu0
    %v1852 = vrot.slane %v1848, 6
    %v1854 = vadd.f32 %v1229, %v1852
    %v1855 = vxor.u32 %v1854, 2147483648
    %v1856 = vmul.f32 %v1855, 1.442695
    %v1857 = vpow.pop %v1856
    %v1858 = vadd.f32 %v1857, 1.0
    %v1859 = vrcp.pop %v1858
    %v1860 = vmul.f32 1.0, %v1859
    %v1861 = vtanh.pop %v1854
    %v1863 = vrot.slane %v1768, 6
    %v1865 = vmul.f32 %v1860, %v1863
    %1867 = vrot.lane.b32.xlu0 %v1861, 64
    %v1868 = vpop.permute.xlu0 %1867
    %v1870 = vmul.f32 %v1860, %v1868
    %1872 = vrot.lane.b32.xlu0 %v1870, 32
    %v1873 = vpop.permute.xlu0 %1872
    %v1875 = vadd.f32 %v1865, %v1873
    %v1876 = vtanh.pop %v1875
    %1878 = vrot.lane.b32.xlu0 %v1876, 64
    %v1879 = vpop.permute.xlu0 %1878
    %v1881 = vmul.f32 %v1860, %v1879
    %v1883 = vrot.slane %v1881, 2
    %v1885 = vadd.f32 %v1775, %v1883
    %1886 = vrot.lane.b32.xlu0 %v1883, 32
    %v1887 = vpop.permute.xlu0 %1886
    %v1888 = vsel %vm810, %v1887, 0
    %1890 = vmatprep.subr.mxu0 0.0
    %1891 = vmatpush1.msra.mxu0 0.0
    %1892 = vmatprep.subr.mxu0 0.0
    %1893 = vmatpush1.msra.mxu0 0.0
    %1894 = vmatprep.subr.mxu0 0.0
    %1895 = vmatpush1.msra.mxu0 0.0
    %1896 = vmatprep.subr.mxu0 0.0
    %1897 = vmatpush1.msra.mxu0 0.0
    %1898 = vmatprep.subr.mxu0 0.0
    %1899 = vmatpush1.msra.mxu0 0.0
    %1900 = vmatprep.subr.mxu0 0.0
    %1901 = vmatpush1.msra.mxu0 0.0
    %1902 = vmatprep.subr.mxu0 0.0
    %1903 = vmatpush1.msra.mxu0 0.0
    %1904 = vmatprep.subr.mxu0 0.0
    %1905 = vmatpush1.msra.mxu0 0.0
    %1906 = vmatprep.subr.mxu0 0.0
    %1907 = vmatpush1.msra.mxu0 0.0
    %1908 = vmatprep.subr.mxu0 0.0
    %1909 = vmatpush1.msra.mxu0 0.0
    %1910 = vmatprep.subr.mxu0 0.0
    %1911 = vmatpush1.msra.mxu0 0.0
    %1912 = vmatprep.subr.mxu0 0.0
    %1913 = vmatpush1.msra.mxu0 0.0
    %1914 = vmatprep.subr.mxu0 0.0
    %1915 = vmatpush1.msra.mxu0 %v1245
    %1916 = vmatprep.subr.mxu0 0.0
    %1917 = vmatpush1.msra.mxu0 %v1244
    %1918 = vmatprep.subr.mxu0 0.0
    %1919 = vmatpush1.msra.mxu0 %v1243
    %1920 = vmatprep.subr.mxu0 0.0
    %1921 = vmatpush1.msra.mxu0 %v1242
    %1922 = vmatprep.subr.mxu0 0.0
    %1923 = vmatpush2.msra.mxu0 0.0
    %1924 = vmatprep.subr.mxu0 0.0
    %1925 = vmatpush2.msra.mxu0 0.0
    %1926 = vmatprep.subr.mxu0 0.0
    %1927 = vmatpush2.msra.mxu0 0.0
    %1928 = vmatprep.subr.mxu0 0.0
    %1929 = vmatpush2.msra.mxu0 0.0
    %1930 = vmatprep.subr.mxu0 0.0
    %1931 = vmatpush2.msra.mxu0 0.0
    %1932 = vmatprep.subr.mxu0 0.0
    %1933 = vmatpush2.msra.mxu0 0.0
    %1934 = vmatprep.subr.mxu0 0.0
    %1935 = vmatpush2.msra.mxu0 0.0
    %1936 = vmatprep.subr.mxu0 0.0
    %1937 = vmatpush2.msra.mxu0 0.0
    %1938 = vmatprep.subr.mxu0 0.0
    %1939 = vmatpush2.msra.mxu0 0.0
    %1940 = vmatprep.subr.mxu0 0.0
    %1941 = vmatpush2.msra.mxu0 0.0
    %1942 = vmatprep.subr.mxu0 0.0
    %1943 = vmatpush2.msra.mxu0 0.0
    %1944 = vmatprep.subr.mxu0 0.0
    %1945 = vmatpush2.msra.mxu0 0.0
    %1946 = vmatprep.subr.mxu0 0.0
    %1947 = vmatpush2.msra.mxu0 0.0
    %1948 = vmatprep.subr.mxu0 0.0
    %1949 = vmatpush2.msra.mxu0 0.0
    %1950 = vmatprep.subr.mxu0 0.0
    %1951 = vmatpush2.msra.mxu0 0.0
    %1952 = vmatprep.subr.mxu0 0.0
    %1953 = vmatpush2.msra.mxu0 0.0
    %1954 = vmatprep.mubr.f32.mxu0 0.0
    %1955 = vmatmul.mubr.f32.gmra.mxu0 %v1888
    %v1956 = vpop.f32.mrf.mxu0
    %v1957 = vadd.f32 0.0, %v1956
    %v1958 = vpop.f32.mrf.mxu0
    %1959 = vdwg.mxu0
    %v1961 = vrot.slane %v1957, 4
    %v1963 = vadd.f32 %v1229, %v1961
    %v1964 = vxor.u32 %v1963, 2147483648
    %v1965 = vmul.f32 %v1964, 1.442695
    %v1966 = vpow.pop %v1965
    %v1967 = vadd.f32 %v1966, 1.0
    %v1968 = vrcp.pop %v1967
    %v1969 = vmul.f32 1.0, %v1968
    %v1970 = vtanh.pop %v1963
    %v1972 = vrot.slane %v1875, 6
    %v1974 = vmul.f32 %v1969, %v1972
    %1976 = vrot.lane.b32.xlu0 %v1970, 64
    %v1977 = vpop.permute.xlu0 %1976
    %v1979 = vmul.f32 %v1969, %v1977
    %1981 = vrot.lane.b32.xlu0 %v1979, 32
    %v1982 = vpop.permute.xlu0 %1981
    %v1984 = vadd.f32 %v1974, %v1982
    %v1985 = vtanh.pop %v1984
    %1987 = vrot.lane.b32.xlu0 %v1985, 64
    %v1988 = vpop.permute.xlu0 %1987
    %v1990 = vmul.f32 %v1969, %v1988
    %v1992 = vrot.slane %v1990, 4
    %v1994 = vadd.f32 %v1885, %v1992
    %1995 = vrot.lane.b32.xlu0 %v1992, 32
    %v1996 = vpop.permute.xlu0 %1995
    %v1997 = vsel %vm810, %v1996, 0
    %1999 = vmatprep.subr.mxu0 0.0
    %2000 = vmatpush1.msra.mxu0 0.0
    %2001 = vmatprep.subr.mxu0 0.0
    %2002 = vmatpush1.msra.mxu0 0.0
    %2003 = vmatprep.subr.mxu0 0.0
    %2004 = vmatpush1.msra.mxu0 0.0
    %2005 = vmatprep.subr.mxu0 0.0
    %2006 = vmatpush1.msra.mxu0 0.0
    %2007 = vmatprep.subr.mxu0 0.0
    %2008 = vmatpush1.msra.mxu0 0.0
    %2009 = vmatprep.subr.mxu0 0.0
    %2010 = vmatpush1.msra.mxu0 0.0
    %2011 = vmatprep.subr.mxu0 0.0
    %2012 = vmatpush1.msra.mxu0 0.0
    %2013 = vmatprep.subr.mxu0 0.0
    %2014 = vmatpush1.msra.mxu0 0.0
    %2015 = vmatprep.subr.mxu0 0.0
    %2016 = vmatpush1.msra.mxu0 0.0
    %2017 = vmatprep.subr.mxu0 0.0
    %2018 = vmatpush1.msra.mxu0 0.0
    %2019 = vmatprep.subr.mxu0 0.0
    %2020 = vmatpush1.msra.mxu0 0.0
    %2021 = vmatprep.subr.mxu0 0.0
    %2022 = vmatpush1.msra.mxu0 0.0
    %2023 = vmatprep.subr.mxu0 0.0
    %2024 = vmatpush1.msra.mxu0 %v1245
    %2025 = vmatprep.subr.mxu0 0.0
    %2026 = vmatpush1.msra.mxu0 %v1244
    %2027 = vmatprep.subr.mxu0 0.0
    %2028 = vmatpush1.msra.mxu0 %v1243
    %2029 = vmatprep.subr.mxu0 0.0
    %2030 = vmatpush1.msra.mxu0 %v1242
    %2031 = vmatprep.subr.mxu0 0.0
    %2032 = vmatpush2.msra.mxu0 0.0
    %2033 = vmatprep.subr.mxu0 0.0
    %2034 = vmatpush2.msra.mxu0 0.0
    %2035 = vmatprep.subr.mxu0 0.0
    %2036 = vmatpush2.msra.mxu0 0.0
    %2037 = vmatprep.subr.mxu0 0.0
    %2038 = vmatpush2.msra.mxu0 0.0
    %2039 = vmatprep.subr.mxu0 0.0
    %2040 = vmatpush2.msra.mxu0 0.0
    %2041 = vmatprep.subr.mxu0 0.0
    %2042 = vmatpush2.msra.mxu0 0.0
    %2043 = vmatprep.subr.mxu0 0.0
    %2044 = vmatpush2.msra.mxu0 0.0
    %2045 = vmatprep.subr.mxu0 0.0
    %2046 = vmatpush2.msra.mxu0 0.0
    %2047 = vmatprep.subr.mxu0 0.0
    %2048 = vmatpush2.msra.mxu0 0.0
    %2049 = vmatprep.subr.mxu0 0.0
    %2050 = vmatpush2.msra.mxu0 0.0
    %2051 = vmatprep.subr.mxu0 0.0
    %2052 = vmatpush2.msra.mxu0 0.0
    %2053 = vmatprep.subr.mxu0 0.0
    %2054 = vmatpush2.msra.mxu0 0.0
    %2055 = vmatprep.subr.mxu0 0.0
    %2056 = vmatpush2.msra.mxu0 0.0
    %2057 = vmatprep.subr.mxu0 0.0
    %2058 = vmatpush2.msra.mxu0 0.0
    %2059 = vmatprep.subr.mxu0 0.0
    %2060 = vmatpush2.msra.mxu0 0.0
    %2061 = vmatprep.subr.mxu0 0.0
    %2062 = vmatpush2.msra.mxu0 0.0
    %2063 = vmatprep.mubr.f32.mxu0 0.0
    %2064 = vmatmul.mubr.f32.gmra.mxu0 %v1997
    %v2065 = vpop.f32.mrf.mxu0
    %v2066 = vadd.f32 0.0, %v2065
    %v2067 = vpop.f32.mrf.mxu0
    %2068 = vdwg.mxu0
    %v2070 = vrot.slane %v2066, 2
    %v2072 = vadd.f32 %v1229, %v2070
    %v2073 = vxor.u32 %v2072, 2147483648
    %v2074 = vmul.f32 %v2073, 1.442695
    %v2075 = vpow.pop %v2074
    %v2076 = vadd.f32 %v2075, 1.0
    %v2077 = vrcp.pop %v2076
    %v2078 = vmul.f32 1.0, %v2077
    %v2079 = vtanh.pop %v2072
    %v2081 = vrot.slane %v1984, 6
    %v2083 = vmul.f32 %v2078, %v2081
    %2085 = vrot.lane.b32.xlu0 %v2079, 64
    %v2086 = vpop.permute.xlu0 %2085
    %v2088 = vmul.f32 %v2078, %v2086
    %2090 = vrot.lane.b32.xlu0 %v2088, 32
    %v2091 = vpop.permute.xlu0 %2090
    %v2093 = vadd.f32 %v2083, %v2091
    %v2094 = vtanh.pop %v2093
    %2096 = vrot.lane.b32.xlu0 %v2094, 64
    %v2097 = vpop.permute.xlu0 %2096
    %v2099 = vmul.f32 %v2078, %v2097
    %v2101 = vrot.slane %v2099, 6
    %v2103 = vadd.f32 %v1994, %v2101
    %2104 = vrot.lane.b32.xlu0 %v2101, 32
    %v2105 = vpop.permute.xlu0 %2104
    %v2106 = vsel %vm810, %v2105, 0
    %2108 = vmatprep.subr.mxu0 0.0
    %2109 = vmatpush1.msra.mxu0 0.0
    %2110 = vmatprep.subr.mxu0 0.0
    %2111 = vmatpush1.msra.mxu0 0.0
    %2112 = vmatprep.subr.mxu0 0.0
    %2113 = vmatpush1.msra.mxu0 0.0
    %2114 = vmatprep.subr.mxu0 0.0
    %2115 = vmatpush1.msra.mxu0 0.0
    %2116 = vmatprep.subr.mxu0 0.0
    %2117 = vmatpush1.msra.mxu0 0.0
    %2118 = vmatprep.subr.mxu0 0.0
    %2119 = vmatpush1.msra.mxu0 0.0
    %2120 = vmatprep.subr.mxu0 0.0
    %2121 = vmatpush1.msra.mxu0 0.0
    %2122 = vmatprep.subr.mxu0 0.0
    %2123 = vmatpush1.msra.mxu0 0.0
    %2124 = vmatprep.subr.mxu0 0.0
    %2125 = vmatpush1.msra.mxu0 0.0
    %2126 = vmatprep.subr.mxu0 0.0
    %2127 = vmatpush1.msra.mxu0 0.0
    %2128 = vmatprep.subr.mxu0 0.0
    %2129 = vmatpush1.msra.mxu0 0.0
    %2130 = vmatprep.subr.mxu0 0.0
    %2131 = vmatpush1.msra.mxu0 0.0
    %2132 = vmatprep.subr.mxu0 0.0
    %2133 = vmatpush1.msra.mxu0 %v1245
    %2134 = vmatprep.subr.mxu0 0.0
    %2135 = vmatpush1.msra.mxu0 %v1244
    %2136 = vmatprep.subr.mxu0 0.0
    %2137 = vmatpush1.msra.mxu0 %v1243
    %2138 = vmatprep.subr.mxu0 0.0
    %2139 = vmatpush1.msra.mxu0 %v1242
    %2140 = vmatprep.subr.mxu0 0.0
    %2141 = vmatpush2.msra.mxu0 0.0
    %2142 = vmatprep.subr.mxu0 0.0
    %2143 = vmatpush2.msra.mxu0 0.0
    %2144 = vmatprep.subr.mxu0 0.0
    %2145 = vmatpush2.msra.mxu0 0.0
    %2146 = vmatprep.subr.mxu0 0.0
    %2147 = vmatpush2.msra.mxu0 0.0
    %2148 = vmatprep.subr.mxu0 0.0
    %2149 = vmatpush2.msra.mxu0 0.0
    %2150 = vmatprep.subr.mxu0 0.0
    %2151 = vmatpush2.msra.mxu0 0.0
    %2152 = vmatprep.subr.mxu0 0.0
    %2153 = vmatpush2.msra.mxu0 0.0
    %2154 = vmatprep.subr.mxu0 0.0
    %2155 = vmatpush2.msra.mxu0 0.0
    %2156 = vmatprep.subr.mxu0 0.0
    %2157 = vmatpush2.msra.mxu0 0.0
    %2158 = vmatprep.subr.mxu0 0.0
    %2159 = vmatpush2.msra.mxu0 0.0
    %2160 = vmatprep.subr.mxu0 0.0
    %2161 = vmatpush2.msra.mxu0 0.0
    %2162 = vmatprep.subr.mxu0 0.0
    %2163 = vmatpush2.msra.mxu0 0.0
    %2164 = vmatprep.subr.mxu0 0.0
    %2165 = vmatpush2.msra.mxu0 0.0
    %2166 = vmatprep.subr.mxu0 0.0
    %2167 = vmatpush2.msra.mxu0 0.0
    %2168 = vmatprep.subr.mxu0 0.0
    %2169 = vmatpush2.msra.mxu0 0.0
    %2170 = vmatprep.subr.mxu0 0.0
    %2171 = vmatpush2.msra.mxu0 0.0
    %2172 = vmatprep.mubr.f32.mxu0 0.0
    %2173 = vmatmul.mubr.f32.gmra.mxu0 %v2106
    %v2174 = vpop.f32.mrf.mxu0
    %v2175 = vadd.f32 0.0, %v2174
    %v2176 = vpop.f32.mrf.mxu0
    %2177 = vdwg.mxu0
    %v2178 = vadd.f32 %v1234, %v2175
    %v2179 = vxor.u32 %v2178, 2147483648
    %v2180 = vmul.f32 %v2179, 1.442695
    %v2181 = vpow.pop %v2180
    %v2182 = vadd.f32 %v2181, 1.0
    %v2183 = vrcp.pop %v2182
    %v2184 = vmul.f32 1.0, %v2183
    %v2185 = vtanh.pop %v2178
    %v2187 = vrot.slane %v2093, 6
    %v2189 = vmul.f32 %v2184, %v2187
    %2191 = vrot.lane.b32.xlu0 %v2185, 64
    %v2192 = vpop.permute.xlu0 %2191
    %v2194 = vmul.f32 %v2184, %v2192
    %2196 = vrot.lane.b32.xlu0 %v2194, 32
    %v2197 = vpop.permute.xlu0 %2196
    %v2199 = vadd.f32 %v2189, %v2197
    %v2200 = vtanh.pop %v2199
    %2202 = vrot.lane.b32.xlu0 %v2200, 64
    %v2203 = vpop.permute.xlu0 %2202
    %v2205 = vmul.f32 %v2184, %v2203
    %v2206 = vadd.f32 %v2103, %v2205
    %2208 = vrot.lane.b32.xlu0 %v2205, 32
    %v2209 = vpop.permute.xlu0 %2208
    %v2210 = vsel %vm810, %v2209, 0
    %2212 = vmatprep.subr.mxu0 0.0
    %2213 = vmatpush1.msra.mxu0 0.0
    %2214 = vmatprep.subr.mxu0 0.0
    %2215 = vmatpush1.msra.mxu0 0.0
    %2216 = vmatprep.subr.mxu0 0.0
    %2217 = vmatpush1.msra.mxu0 0.0
    %2218 = vmatprep.subr.mxu0 0.0
    %2219 = vmatpush1.msra.mxu0 0.0
    %2220 = vmatprep.subr.mxu0 0.0
    %2221 = vmatpush1.msra.mxu0 0.0
    %2222 = vmatprep.subr.mxu0 0.0
    %2223 = vmatpush1.msra.mxu0 0.0
    %2224 = vmatprep.subr.mxu0 0.0
    %2225 = vmatpush1.msra.mxu0 0.0
    %2226 = vmatprep.subr.mxu0 0.0
    %2227 = vmatpush1.msra.mxu0 0.0
    %2228 = vmatprep.subr.mxu0 0.0
    %2229 = vmatpush1.msra.mxu0 0.0
    %2230 = vmatprep.subr.mxu0 0.0
    %2231 = vmatpush1.msra.mxu0 0.0
    %2232 = vmatprep.subr.mxu0 0.0
    %2233 = vmatpush1.msra.mxu0 0.0
    %2234 = vmatprep.subr.mxu0 0.0
    %2235 = vmatpush1.msra.mxu0 0.0
    %2236 = vmatprep.subr.mxu0 0.0
    %2237 = vmatpush1.msra.mxu0 %v1245
    %2238 = vmatprep.subr.mxu0 0.0
    %2239 = vmatpush1.msra.mxu0 %v1244
    %2240 = vmatprep.subr.mxu0 0.0
    %2241 = vmatpush1.msra.mxu0 %v1243
    %2242 = vmatprep.subr.mxu0 0.0
    %2243 = vmatpush1.msra.mxu0 %v1242
    %2244 = vmatprep.subr.mxu0 0.0
    %2245 = vmatpush2.msra.mxu0 0.0
    %2246 = vmatprep.subr.mxu0 0.0
    %2247 = vmatpush2.msra.mxu0 0.0
    %2248 = vmatprep.subr.mxu0 0.0
    %2249 = vmatpush2.msra.mxu0 0.0
    %2250 = vmatprep.subr.mxu0 0.0
    %2251 = vmatpush2.msra.mxu0 0.0
    %2252 = vmatprep.subr.mxu0 0.0
    %2253 = vmatpush2.msra.mxu0 0.0
    %2254 = vmatprep.subr.mxu0 0.0
    %2255 = vmatpush2.msra.mxu0 0.0
    %2256 = vmatprep.subr.mxu0 0.0
    %2257 = vmatpush2.msra.mxu0 0.0
    %2258 = vmatprep.subr.mxu0 0.0
    %2259 = vmatpush2.msra.mxu0 0.0
    %2260 = vmatprep.subr.mxu0 0.0
    %2261 = vmatpush2.msra.mxu0 0.0
    %2262 = vmatprep.subr.mxu0 0.0
    %2263 = vmatpush2.msra.mxu0 0.0
    %2264 = vmatprep.subr.mxu0 0.0
    %2265 = vmatpush2.msra.mxu0 0.0
    %2266 = vmatprep.subr.mxu0 0.0
    %2267 = vmatpush2.msra.mxu0 0.0
    %2268 = vmatprep.subr.mxu0 0.0
    %2269 = vmatpush2.msra.mxu0 0.0
    %2270 = vmatprep.subr.mxu0 0.0
    %2271 = vmatpush2.msra.mxu0 0.0
    %2272 = vmatprep.subr.mxu0 0.0
    %2273 = vmatpush2.msra.mxu0 0.0
    %2274 = vmatprep.subr.mxu0 0.0
    %2275 = vmatpush2.msra.mxu0 0.0
    %2276 = vmatprep.mubr.f32.mxu0 0.0
    %2277 = vmatmul.mubr.f32.gmra.mxu0 %v2210
    %v2278 = vpop.f32.mrf.mxu0
    %v2279 = vadd.f32 0.0, %v2278
    %v2280 = vpop.f32.mrf.mxu0
    %2281 = vdwg.mxu0
    %v2283 = vrot.slane %v2279, 6
    %v2285 = vadd.f32 %v1234, %v2283
    %v2286 = vxor.u32 %v2285, 2147483648
    %v2287 = vmul.f32 %v2286, 1.442695
    %v2288 = vpow.pop %v2287
    %v2289 = vadd.f32 %v2288, 1.0
    %v2290 = vrcp.pop %v2289
    %v2291 = vmul.f32 1.0, %v2290
    %v2292 = vtanh.pop %v2285
    %v2294 = vrot.slane %v2199, 6
    %v2296 = vmul.f32 %v2291, %v2294
    %2298 = vrot.lane.b32.xlu0 %v2292, 64
    %v2299 = vpop.permute.xlu0 %2298
    %v2301 = vmul.f32 %v2291, %v2299
    %2303 = vrot.lane.b32.xlu0 %v2301, 32
    %v2304 = vpop.permute.xlu0 %2303
    %v2306 = vadd.f32 %v2296, %v2304
    %v2307 = vtanh.pop %v2306
    %2309 = vrot.lane.b32.xlu0 %v2307, 64
    %v2310 = vpop.permute.xlu0 %2309
    %v2312 = vmul.f32 %v2291, %v2310
    %v2314 = vrot.slane %v2312, 2
    %v2316 = vadd.f32 %v2206, %v2314
    %2317 = vrot.lane.b32.xlu0 %v2314, 32
    %v2318 = vpop.permute.xlu0 %2317
    %v2319 = vsel %vm810, %v2318, 0
    %2321 = vmatprep.subr.mxu0 0.0
    %2322 = vmatpush1.msra.mxu0 0.0
    %2323 = vmatprep.subr.mxu0 0.0
    %2324 = vmatpush1.msra.mxu0 0.0
    %2325 = vmatprep.subr.mxu0 0.0
    %2326 = vmatpush1.msra.mxu0 0.0
    %2327 = vmatprep.subr.mxu0 0.0
    %2328 = vmatpush1.msra.mxu0 0.0
    %2329 = vmatprep.subr.mxu0 0.0
    %2330 = vmatpush1.msra.mxu0 0.0
    %2331 = vmatprep.subr.mxu0 0.0
    %2332 = vmatpush1.msra.mxu0 0.0
    %2333 = vmatprep.subr.mxu0 0.0
    %2334 = vmatpush1.msra.mxu0 0.0
    %2335 = vmatprep.subr.mxu0 0.0
    %2336 = vmatpush1.msra.mxu0 0.0
    %2337 = vmatprep.subr.mxu0 0.0
    %2338 = vmatpush1.msra.mxu0 0.0
    %2339 = vmatprep.subr.mxu0 0.0
    %2340 = vmatpush1.msra.mxu0 0.0
    %2341 = vmatprep.subr.mxu0 0.0
    %2342 = vmatpush1.msra.mxu0 0.0
    %2343 = vmatprep.subr.mxu0 0.0
    %2344 = vmatpush1.msra.mxu0 0.0
    %2345 = vmatprep.subr.mxu0 0.0
    %2346 = vmatpush1.msra.mxu0 %v1245
    %2347 = vmatprep.subr.mxu0 0.0
    %2348 = vmatpush1.msra.mxu0 %v1244
    %2349 = vmatprep.subr.mxu0 0.0
    %2350 = vmatpush1.msra.mxu0 %v1243
    %2351 = vmatprep.subr.mxu0 0.0
    %2352 = vmatpush1.msra.mxu0 %v1242
    %2353 = vmatprep.subr.mxu0 0.0
    %2354 = vmatpush2.msra.mxu0 0.0
    %2355 = vmatprep.subr.mxu0 0.0
    %2356 = vmatpush2.msra.mxu0 0.0
    %2357 = vmatprep.subr.mxu0 0.0
    %2358 = vmatpush2.msra.mxu0 0.0
    %2359 = vmatprep.subr.mxu0 0.0
    %2360 = vmatpush2.msra.mxu0 0.0
    %2361 = vmatprep.subr.mxu0 0.0
    %2362 = vmatpush2.msra.mxu0 0.0
    %2363 = vmatprep.subr.mxu0 0.0
    %2364 = vmatpush2.msra.mxu0 0.0
    %2365 = vmatprep.subr.mxu0 0.0
    %2366 = vmatpush2.msra.mxu0 0.0
    %2367 = vmatprep.subr.mxu0 0.0
    %2368 = vmatpush2.msra.mxu0 0.0
    %2369 = vmatprep.subr.mxu0 0.0
    %2370 = vmatpush2.msra.mxu0 0.0
    %2371 = vmatprep.subr.mxu0 0.0
    %2372 = vmatpush2.msra.mxu0 0.0
    %2373 = vmatprep.subr.mxu0 0.0
    %2374 = vmatpush2.msra.mxu0 0.0
    %2375 = vmatprep.subr.mxu0 0.0
    %2376 = vmatpush2.msra.mxu0 0.0
    %2377 = vmatprep.subr.mxu0 0.0
    %2378 = vmatpush2.msra.mxu0 0.0
    %2379 = vmatprep.subr.mxu0 0.0
    %2380 = vmatpush2.msra.mxu0 0.0
    %2381 = vmatprep.subr.mxu0 0.0
    %2382 = vmatpush2.msra.mxu0 0.0
    %2383 = vmatprep.subr.mxu0 0.0
    %2384 = vmatpush2.msra.mxu0 0.0
    %2385 = vmatprep.mubr.f32.mxu0 0.0
    %2386 = vmatmul.mubr.f32.gmra.mxu0 %v2319
    %v2387 = vpop.f32.mrf.mxu0
    %v2388 = vadd.f32 0.0, %v2387
    %v2389 = vpop.f32.mrf.mxu0
    %2390 = vdwg.mxu0
    %v2392 = vrot.slane %v2388, 4
    %v2394 = vadd.f32 %v1234, %v2392
    %v2395 = vxor.u32 %v2394, 2147483648
    %v2396 = vmul.f32 %v2395, 1.442695
    %v2397 = vpow.pop %v2396
    %v2398 = vadd.f32 %v2397, 1.0
    %v2399 = vrcp.pop %v2398
    %v2400 = vmul.f32 1.0, %v2399
    %v2401 = vtanh.pop %v2394
    %v2403 = vrot.slane %v2306, 6
    %v2405 = vmul.f32 %v2400, %v2403
    %2407 = vrot.lane.b32.xlu0 %v2401, 64
    %v2408 = vpop.permute.xlu0 %2407
    %v2410 = vmul.f32 %v2400, %v2408
    %2412 = vrot.lane.b32.xlu0 %v2410, 32
    %v2413 = vpop.permute.xlu0 %2412
    %v2415 = vadd.f32 %v2405, %v2413
    %v2416 = vtanh.pop %v2415
    %2418 = vrot.lane.b32.xlu0 %v2416, 64
    %v2419 = vpop.permute.xlu0 %2418
    %v2421 = vmul.f32 %v2400, %v2419
    %v2423 = vrot.slane %v2421, 4
    %v2425 = vadd.f32 %v2316, %v2423
    %2426 = vrot.lane.b32.xlu0 %v2423, 32
    %v2427 = vpop.permute.xlu0 %2426
    %v2428 = vsel %vm810, %v2427, 0
    %2430 = vmatprep.subr.mxu0 0.0
    %2431 = vmatpush1.msra.mxu0 0.0
    %2432 = vmatprep.subr.mxu0 0.0
    %2433 = vmatpush1.msra.mxu0 0.0
    %2434 = vmatprep.subr.mxu0 0.0
    %2435 = vmatpush1.msra.mxu0 0.0
    %2436 = vmatprep.subr.mxu0 0.0
    %2437 = vmatpush1.msra.mxu0 0.0
    %2438 = vmatprep.subr.mxu0 0.0
    %2439 = vmatpush1.msra.mxu0 0.0
    %2440 = vmatprep.subr.mxu0 0.0
    %2441 = vmatpush1.msra.mxu0 0.0
    %2442 = vmatprep.subr.mxu0 0.0
    %2443 = vmatpush1.msra.mxu0 0.0
    %2444 = vmatprep.subr.mxu0 0.0
    %2445 = vmatpush1.msra.mxu0 0.0
    %2446 = vmatprep.subr.mxu0 0.0
    %2447 = vmatpush1.msra.mxu0 0.0
    %2448 = vmatprep.subr.mxu0 0.0
    %2449 = vmatpush1.msra.mxu0 0.0
    %2450 = vmatprep.subr.mxu0 0.0
    %2451 = vmatpush1.msra.mxu0 0.0
    %2452 = vmatprep.subr.mxu0 0.0
    %2453 = vmatpush1.msra.mxu0 0.0
    %2454 = vmatprep.subr.mxu0 0.0
    %2455 = vmatpush1.msra.mxu0 %v1245
    %2456 = vmatprep.subr.mxu0 0.0
    %2457 = vmatpush1.msra.mxu0 %v1244
    %2458 = vmatprep.subr.mxu0 0.0
    %2459 = vmatpush1.msra.mxu0 %v1243
    %2460 = vmatprep.subr.mxu0 0.0
    %2461 = vmatpush1.msra.mxu0 %v1242
    %2462 = vmatprep.subr.mxu0 0.0
    %2463 = vmatpush2.msra.mxu0 0.0
    %2464 = vmatprep.subr.mxu0 0.0
    %2465 = vmatpush2.msra.mxu0 0.0
    %2466 = vmatprep.subr.mxu0 0.0
    %2467 = vmatpush2.msra.mxu0 0.0
    %2468 = vmatprep.subr.mxu0 0.0
    %2469 = vmatpush2.msra.mxu0 0.0
    %2470 = vmatprep.subr.mxu0 0.0
    %2471 = vmatpush2.msra.mxu0 0.0
    %2472 = vmatprep.subr.mxu0 0.0
    %2473 = vmatpush2.msra.mxu0 0.0
    %2474 = vmatprep.subr.mxu0 0.0
    %2475 = vmatpush2.msra.mxu0 0.0
    %2476 = vmatprep.subr.mxu0 0.0
    %2477 = vmatpush2.msra.mxu0 0.0
    %2478 = vmatprep.subr.mxu0 0.0
    %2479 = vmatpush2.msra.mxu0 0.0
    %2480 = vmatprep.subr.mxu0 0.0
    %2481 = vmatpush2.msra.mxu0 0.0
    %2482 = vmatprep.subr.mxu0 0.0
    %2483 = vmatpush2.msra.mxu0 0.0
    %2484 = vmatprep.subr.mxu0 0.0
    %2485 = vmatpush2.msra.mxu0 0.0
    %2486 = vmatprep.subr.mxu0 0.0
    %2487 = vmatpush2.msra.mxu0 0.0
    %2488 = vmatprep.subr.mxu0 0.0
    %2489 = vmatpush2.msra.mxu0 0.0
    %2490 = vmatprep.subr.mxu0 0.0
    %2491 = vmatpush2.msra.mxu0 0.0
    %2492 = vmatprep.subr.mxu0 0.0
    %2493 = vmatpush2.msra.mxu0 0.0
    %2494 = vmatprep.mubr.f32.mxu0 0.0
    %2495 = vmatmul.mubr.f32.gmra.mxu0 %v2428
    %v2496 = vpop.f32.mrf.mxu0
    %v2497 = vadd.f32 0.0, %v2496
    %v2498 = vpop.f32.mrf.mxu0
    %2499 = vdwg.mxu0
    %v2501 = vrot.slane %v2497, 2
    %v2503 = vadd.f32 %v1234, %v2501
    %v2504 = vxor.u32 %v2503, 2147483648
    %v2505 = vmul.f32 %v2504, 1.442695
    %v2506 = vpow.pop %v2505
    %v2507 = vadd.f32 %v2506, 1.0
    %v2508 = vrcp.pop %v2507
    %v2509 = vmul.f32 1.0, %v2508
    %v2510 = vtanh.pop %v2503
    %v2512 = vrot.slane %v2415, 6
    %v2514 = vmul.f32 %v2509, %v2512
    %2516 = vrot.lane.b32.xlu0 %v2510, 64
    %v2517 = vpop.permute.xlu0 %2516
    %v2519 = vmul.f32 %v2509, %v2517
    %2521 = vrot.lane.b32.xlu0 %v2519, 32
    %v2522 = vpop.permute.xlu0 %2521
    %v2524 = vadd.f32 %v2514, %v2522
    %v2525 = vtanh.pop %v2524
    %2527 = vrot.lane.b32.xlu0 %v2525, 64
    %v2528 = vpop.permute.xlu0 %2527
    %v2530 = vmul.f32 %v2509, %v2528
    %v2532 = vrot.slane %v2530, 6
    %v2534 = vadd.f32 %v2425, %v2532
    %2535 = vrot.lane.b32.xlu0 %v2532, 32
    %v2536 = vpop.permute.xlu0 %2535
    %v2537 = vsel %vm810, %v2536, 0
    %2539 = vmatprep.subr.mxu0 0.0
    %2540 = vmatpush1.msra.mxu0 0.0
    %2541 = vmatprep.subr.mxu0 0.0
    %2542 = vmatpush1.msra.mxu0 0.0
    %2543 = vmatprep.subr.mxu0 0.0
    %2544 = vmatpush1.msra.mxu0 0.0
    %2545 = vmatprep.subr.mxu0 0.0
    %2546 = vmatpush1.msra.mxu0 0.0
    %2547 = vmatprep.subr.mxu0 0.0
    %2548 = vmatpush1.msra.mxu0 0.0
    %2549 = vmatprep.subr.mxu0 0.0
    %2550 = vmatpush1.msra.mxu0 0.0
    %2551 = vmatprep.subr.mxu0 0.0
    %2552 = vmatpush1.msra.mxu0 0.0
    %2553 = vmatprep.subr.mxu0 0.0
    %2554 = vmatpush1.msra.mxu0 0.0
    %2555 = vmatprep.subr.mxu0 0.0
    %2556 = vmatpush1.msra.mxu0 0.0
    %2557 = vmatprep.subr.mxu0 0.0
    %2558 = vmatpush1.msra.mxu0 0.0
    %2559 = vmatprep.subr.mxu0 0.0
    %2560 = vmatpush1.msra.mxu0 0.0
    %2561 = vmatprep.subr.mxu0 0.0
    %2562 = vmatpush1.msra.mxu0 0.0
    %2563 = vmatprep.subr.mxu0 0.0
    %2564 = vmatpush1.msra.mxu0 %v1245
    %2565 = vmatprep.subr.mxu0 0.0
    %2566 = vmatpush1.msra.mxu0 %v1244
    %2567 = vmatprep.subr.mxu0 0.0
    %2568 = vmatpush1.msra.mxu0 %v1243
    %2569 = vmatprep.subr.mxu0 0.0
    %2570 = vmatpush1.msra.mxu0 %v1242
    %2571 = vmatprep.subr.mxu0 0.0
    %2572 = vmatpush2.msra.mxu0 0.0
    %2573 = vmatprep.subr.mxu0 0.0
    %2574 = vmatpush2.msra.mxu0 0.0
    %2575 = vmatprep.subr.mxu0 0.0
    %2576 = vmatpush2.msra.mxu0 0.0
    %2577 = vmatprep.subr.mxu0 0.0
    %2578 = vmatpush2.msra.mxu0 0.0
    %2579 = vmatprep.subr.mxu0 0.0
    %2580 = vmatpush2.msra.mxu0 0.0
    %2581 = vmatprep.subr.mxu0 0.0
    %2582 = vmatpush2.msra.mxu0 0.0
    %2583 = vmatprep.subr.mxu0 0.0
    %2584 = vmatpush2.msra.mxu0 0.0
    %2585 = vmatprep.subr.mxu0 0.0
    %2586 = vmatpush2.msra.mxu0 0.0
    %2587 = vmatprep.subr.mxu0 0.0
    %2588 = vmatpush2.msra.mxu0 0.0
    %2589 = vmatprep.subr.mxu0 0.0
    %2590 = vmatpush2.msra.mxu0 0.0
    %2591 = vmatprep.subr.mxu0 0.0
    %2592 = vmatpush2.msra.mxu0 0.0
    %2593 = vmatprep.subr.mxu0 0.0
    %2594 = vmatpush2.msra.mxu0 0.0
    %2595 = vmatprep.subr.mxu0 0.0
    %2596 = vmatpush2.msra.mxu0 0.0
    %2597 = vmatprep.subr.mxu0 0.0
    %2598 = vmatpush2.msra.mxu0 0.0
    %2599 = vmatprep.subr.mxu0 0.0
    %2600 = vmatpush2.msra.mxu0 0.0
    %2601 = vmatprep.subr.mxu0 0.0
    %2602 = vmatpush2.msra.mxu0 0.0
    %2603 = vmatprep.mubr.f32.mxu0 0.0
    %2604 = vmatmul.mubr.f32.gmra.mxu0 %v2537
    %v2605 = vpop.f32.mrf.mxu0
    %v2606 = vadd.f32 0.0, %v2605
    %v2607 = vpop.f32.mrf.mxu0
    %2608 = vdwg.mxu0
    %v2609 = vadd.f32 %v1239, %v2606
    %v2610 = vxor.u32 %v2609, 2147483648
    %v2611 = vmul.f32 %v2610, 1.442695
    %v2612 = vpow.pop %v2611
    %v2613 = vadd.f32 %v2612, 1.0
    %v2614 = vrcp.pop %v2613
    %v2615 = vmul.f32 1.0, %v2614
    %v2616 = vtanh.pop %v2609
    %v2618 = vrot.slane %v2524, 6
    %v2620 = vmul.f32 %v2615, %v2618
    %2622 = vrot.lane.b32.xlu0 %v2616, 64
    %v2623 = vpop.permute.xlu0 %2622
    %v2625 = vmul.f32 %v2615, %v2623
    %2627 = vrot.lane.b32.xlu0 %v2625, 32
    %v2628 = vpop.permute.xlu0 %2627
    %v2630 = vadd.f32 %v2620, %v2628
    %v2631 = vtanh.pop %v2630
    %2633 = vrot.lane.b32.xlu0 %v2631, 64
    %v2634 = vpop.permute.xlu0 %2633
    %v2636 = vmul.f32 %v2615, %v2634
    %v2637 = vadd.f32 %v2534, %v2636
    %2639 = vrot.lane.b32.xlu0 %v2636, 32
    %v2640 = vpop.permute.xlu0 %2639
    %v2641 = vsel %vm810, %v2640, 0
    %2643 = vmatprep.subr.mxu0 0.0
    %2644 = vmatpush1.msra.mxu0 0.0
    %2645 = vmatprep.subr.mxu0 0.0
    %2646 = vmatpush1.msra.mxu0 0.0
    %2647 = vmatprep.subr.mxu0 0.0
    %2648 = vmatpush1.msra.mxu0 0.0
    %2649 = vmatprep.subr.mxu0 0.0
    %2650 = vmatpush1.msra.mxu0 0.0
    %2651 = vmatprep.subr.mxu0 0.0
    %2652 = vmatpush1.msra.mxu0 0.0
    %2653 = vmatprep.subr.mxu0 0.0
    %2654 = vmatpush1.msra.mxu0 0.0
    %2655 = vmatprep.subr.mxu0 0.0
    %2656 = vmatpush1.msra.mxu0 0.0
    %2657 = vmatprep.subr.mxu0 0.0
    %2658 = vmatpush1.msra.mxu0 0.0
    %2659 = vmatprep.subr.mxu0 0.0
    %2660 = vmatpush1.msra.mxu0 0.0
    %2661 = vmatprep.subr.mxu0 0.0
    %2662 = vmatpush1.msra.mxu0 0.0
    %2663 = vmatprep.subr.mxu0 0.0
    %2664 = vmatpush1.msra.mxu0 0.0
    %2665 = vmatprep.subr.mxu0 0.0
    %2666 = vmatpush1.msra.mxu0 0.0
    %2667 = vmatprep.subr.mxu0 0.0
    %2668 = vmatpush1.msra.mxu0 %v1245
    %2669 = vmatprep.subr.mxu0 0.0
    %2670 = vmatpush1.msra.mxu0 %v1244
    %2671 = vmatprep.subr.mxu0 0.0
    %2672 = vmatpush1.msra.mxu0 %v1243
    %2673 = vmatprep.subr.mxu0 0.0
    %2674 = vmatpush1.msra.mxu0 %v1242
    %2675 = vmatprep.subr.mxu0 0.0
    %2676 = vmatpush2.msra.mxu0 0.0
    %2677 = vmatprep.subr.mxu0 0.0
    %2678 = vmatpush2.msra.mxu0 0.0
    %2679 = vmatprep.subr.mxu0 0.0
    %2680 = vmatpush2.msra.mxu0 0.0
    %2681 = vmatprep.subr.mxu0 0.0
    %2682 = vmatpush2.msra.mxu0 0.0
    %2683 = vmatprep.subr.mxu0 0.0
    %2684 = vmatpush2.msra.mxu0 0.0
    %2685 = vmatprep.subr.mxu0 0.0
    %2686 = vmatpush2.msra.mxu0 0.0
    %2687 = vmatprep.subr.mxu0 0.0
    %2688 = vmatpush2.msra.mxu0 0.0
    %2689 = vmatprep.subr.mxu0 0.0
    %2690 = vmatpush2.msra.mxu0 0.0
    %2691 = vmatprep.subr.mxu0 0.0
    %2692 = vmatpush2.msra.mxu0 0.0
    %2693 = vmatprep.subr.mxu0 0.0
    %2694 = vmatpush2.msra.mxu0 0.0
    %2695 = vmatprep.subr.mxu0 0.0
    %2696 = vmatpush2.msra.mxu0 0.0
    %2697 = vmatprep.subr.mxu0 0.0
    %2698 = vmatpush2.msra.mxu0 0.0
    %2699 = vmatprep.subr.mxu0 0.0
    %2700 = vmatpush2.msra.mxu0 0.0
    %2701 = vmatprep.subr.mxu0 0.0
    %2702 = vmatpush2.msra.mxu0 0.0
    %2703 = vmatprep.subr.mxu0 0.0
    %2704 = vmatpush2.msra.mxu0 0.0
    %2705 = vmatprep.subr.mxu0 0.0
    %2706 = vmatpush2.msra.mxu0 0.0
    %2707 = vmatprep.mubr.f32.mxu0 0.0
    %2708 = vmatmul.mubr.f32.gmra.mxu0 %v2641
    %v2709 = vpop.f32.mrf.mxu0
    %v2710 = vadd.f32 0.0, %v2709
    %v2711 = vpop.f32.mrf.mxu0
    %2712 = vdwg.mxu0
    %v2714 = vrot.slane %v2710, 6
    %v2716 = vadd.f32 %v1239, %v2714
    %v2717 = vxor.u32 %v2716, 2147483648
    %v2718 = vmul.f32 %v2717, 1.442695
    %v2719 = vpow.pop %v2718
    %v2720 = vadd.f32 %v2719, 1.0
    %v2721 = vrcp.pop %v2720
    %v2722 = vmul.f32 1.0, %v2721
    %v2723 = vtanh.pop %v2716
    %v2725 = vrot.slane %v2630, 6
    %v2727 = vmul.f32 %v2722, %v2725
    %2729 = vrot.lane.b32.xlu0 %v2723, 64
    %v2730 = vpop.permute.xlu0 %2729
    %v2732 = vmul.f32 %v2722, %v2730
    %2734 = vrot.lane.b32.xlu0 %v2732, 32
    %v2735 = vpop.permute.xlu0 %2734
    %v2737 = vadd.f32 %v2727, %v2735
    %v2738 = vtanh.pop %v2737
    %2740 = vrot.lane.b32.xlu0 %v2738, 64
    %v2741 = vpop.permute.xlu0 %2740
    %v2743 = vmul.f32 %v2722, %v2741
    %v2745 = vrot.slane %v2743, 2
    %v2747 = vadd.f32 %v2637, %v2745
    %2748 = vrot.lane.b32.xlu0 %v2745, 32
    %v2749 = vpop.permute.xlu0 %2748
    %v2750 = vsel %vm810, %v2749, 0
    %2752 = vmatprep.subr.mxu0 0.0
    %2753 = vmatpush1.msra.mxu0 0.0
    %2754 = vmatprep.subr.mxu0 0.0
    %2755 = vmatpush1.msra.mxu0 0.0
    %2756 = vmatprep.subr.mxu0 0.0
    %2757 = vmatpush1.msra.mxu0 0.0
    %2758 = vmatprep.subr.mxu0 0.0
    %2759 = vmatpush1.msra.mxu0 0.0
    %2760 = vmatprep.subr.mxu0 0.0
    %2761 = vmatpush1.msra.mxu0 0.0
    %2762 = vmatprep.subr.mxu0 0.0
    %2763 = vmatpush1.msra.mxu0 0.0
    %2764 = vmatprep.subr.mxu0 0.0
    %2765 = vmatpush1.msra.mxu0 0.0
    %2766 = vmatprep.subr.mxu0 0.0
    %2767 = vmatpush1.msra.mxu0 0.0
    %2768 = vmatprep.subr.mxu0 0.0
    %2769 = vmatpush1.msra.mxu0 0.0
    %2770 = vmatprep.subr.mxu0 0.0
    %2771 = vmatpush1.msra.mxu0 0.0
    %2772 = vmatprep.subr.mxu0 0.0
    %2773 = vmatpush1.msra.mxu0 0.0
    %2774 = vmatprep.subr.mxu0 0.0
    %2775 = vmatpush1.msra.mxu0 0.0
    %2776 = vmatprep.subr.mxu0 0.0
    %2777 = vmatpush1.msra.mxu0 %v1245
    %2778 = vmatprep.subr.mxu0 0.0
    %2779 = vmatpush1.msra.mxu0 %v1244
    %2780 = vmatprep.subr.mxu0 0.0
    %2781 = vmatpush1.msra.mxu0 %v1243
    %2782 = vmatprep.subr.mxu0 0.0
    %2783 = vmatpush1.msra.mxu0 %v1242
    %2784 = vmatprep.subr.mxu0 0.0
    %2785 = vmatpush2.msra.mxu0 0.0
    %2786 = vmatprep.subr.mxu0 0.0
    %2787 = vmatpush2.msra.mxu0 0.0
    %2788 = vmatprep.subr.mxu0 0.0
    %2789 = vmatpush2.msra.mxu0 0.0
    %2790 = vmatprep.subr.mxu0 0.0
    %2791 = vmatpush2.msra.mxu0 0.0
    %2792 = vmatprep.subr.mxu0 0.0
    %2793 = vmatpush2.msra.mxu0 0.0
    %2794 = vmatprep.subr.mxu0 0.0
    %2795 = vmatpush2.msra.mxu0 0.0
    %2796 = vmatprep.subr.mxu0 0.0
    %2797 = vmatpush2.msra.mxu0 0.0
    %2798 = vmatprep.subr.mxu0 0.0
    %2799 = vmatpush2.msra.mxu0 0.0
    %2800 = vmatprep.subr.mxu0 0.0
    %2801 = vmatpush2.msra.mxu0 0.0
    %2802 = vmatprep.subr.mxu0 0.0
    %2803 = vmatpush2.msra.mxu0 0.0
    %2804 = vmatprep.subr.mxu0 0.0
    %2805 = vmatpush2.msra.mxu0 0.0
    %2806 = vmatprep.subr.mxu0 0.0
    %2807 = vmatpush2.msra.mxu0 0.0
    %2808 = vmatprep.subr.mxu0 0.0
    %2809 = vmatpush2.msra.mxu0 0.0
    %2810 = vmatprep.subr.mxu0 0.0
    %2811 = vmatpush2.msra.mxu0 0.0
    %2812 = vmatprep.subr.mxu0 0.0
    %2813 = vmatpush2.msra.mxu0 0.0
    %2814 = vmatprep.subr.mxu0 0.0
    %2815 = vmatpush2.msra.mxu0 0.0
    %2816 = vmatprep.mubr.f32.mxu0 0.0
    %2817 = vmatmul.mubr.f32.gmra.mxu0 %v2750
    %v2818 = vpop.f32.mrf.mxu0
    %v2819 = vadd.f32 0.0, %v2818
    %v2820 = vpop.f32.mrf.mxu0
    %2821 = vdwg.mxu0
    %v2823 = vrot.slane %v2819, 4
    %v2825 = vadd.f32 %v1239, %v2823
    %v2826 = vxor.u32 %v2825, 2147483648
    %v2827 = vmul.f32 %v2826, 1.442695
    %v2828 = vpow.pop %v2827
    %v2829 = vadd.f32 %v2828, 1.0
    %v2830 = vrcp.pop %v2829
    %v2831 = vmul.f32 1.0, %v2830
    %v2832 = vtanh.pop %v2825
    %v2834 = vrot.slane %v2737, 6
    %v2836 = vmul.f32 %v2831, %v2834
    %2838 = vrot.lane.b32.xlu0 %v2832, 64
    %v2839 = vpop.permute.xlu0 %2838
    %v2841 = vmul.f32 %v2831, %v2839
    %2843 = vrot.lane.b32.xlu0 %v2841, 32
    %v2844 = vpop.permute.xlu0 %2843
    %v2846 = vadd.f32 %v2836, %v2844
    %v2847 = vtanh.pop %v2846
    %2849 = vrot.lane.b32.xlu0 %v2847, 64
    %v2850 = vpop.permute.xlu0 %2849
    %v2852 = vmul.f32 %v2831, %v2850
    %v2854 = vrot.slane %v2852, 4
    %v2856 = vadd.f32 %v2747, %v2854
    %2857 = vrot.lane.b32.xlu0 %v2854, 32
    %v2858 = vpop.permute.xlu0 %2857
    %v2859 = vsel %vm810, %v2858, 0
    %2861 = vmatprep.subr.mxu0 0.0
    %2862 = vmatpush1.msra.mxu0 0.0
    %2863 = vmatprep.subr.mxu0 0.0
    %2864 = vmatpush1.msra.mxu0 0.0
    %2865 = vmatprep.subr.mxu0 0.0
    %2866 = vmatpush1.msra.mxu0 0.0
    %2867 = vmatprep.subr.mxu0 0.0
    %2868 = vmatpush1.msra.mxu0 0.0
    %2869 = vmatprep.subr.mxu0 0.0
    %2870 = vmatpush1.msra.mxu0 0.0
    %2871 = vmatprep.subr.mxu0 0.0
    %2872 = vmatpush1.msra.mxu0 0.0
    %2873 = vmatprep.subr.mxu0 0.0
    %2874 = vmatpush1.msra.mxu0 0.0
    %2875 = vmatprep.subr.mxu0 0.0
    %2876 = vmatpush1.msra.mxu0 0.0
    %2877 = vmatprep.subr.mxu0 0.0
    %2878 = vmatpush1.msra.mxu0 0.0
    %2879 = vmatprep.subr.mxu0 0.0
    %2880 = vmatpush1.msra.mxu0 0.0
    %2881 = vmatprep.subr.mxu0 0.0
    %2882 = vmatpush1.msra.mxu0 0.0
    %2883 = vmatprep.subr.mxu0 0.0
    %2884 = vmatpush1.msra.mxu0 0.0
    %2885 = vmatprep.subr.mxu0 0.0
    %2886 = vmatpush1.msra.mxu0 %v1245
    %2887 = vmatprep.subr.mxu0 0.0
    %2888 = vmatpush1.msra.mxu0 %v1244
    %2889 = vmatprep.subr.mxu0 0.0
    %2890 = vmatpush1.msra.mxu0 %v1243
    %2891 = vmatprep.subr.mxu0 0.0
    %2892 = vmatpush1.msra.mxu0 %v1242
    %2893 = vmatprep.subr.mxu0 0.0
    %2894 = vmatpush2.msra.mxu0 0.0
    %2895 = vmatprep.subr.mxu0 0.0
    %2896 = vmatpush2.msra.mxu0 0.0
    %2897 = vmatprep.subr.mxu0 0.0
    %2898 = vmatpush2.msra.mxu0 0.0
    %2899 = vmatprep.subr.mxu0 0.0
    %2900 = vmatpush2.msra.mxu0 0.0
    %2901 = vmatprep.subr.mxu0 0.0
    %2902 = vmatpush2.msra.mxu0 0.0
    %2903 = vmatprep.subr.mxu0 0.0
    %2904 = vmatpush2.msra.mxu0 0.0
    %2905 = vmatprep.subr.mxu0 0.0
    %2906 = vmatpush2.msra.mxu0 0.0
    %2907 = vmatprep.subr.mxu0 0.0
    %2908 = vmatpush2.msra.mxu0 0.0
    %2909 = vmatprep.subr.mxu0 0.0
    %2910 = vmatpush2.msra.mxu0 0.0
    %2911 = vmatprep.subr.mxu0 0.0
    %2912 = vmatpush2.msra.mxu0 0.0
    %2913 = vmatprep.subr.mxu0 0.0
    %2914 = vmatpush2.msra.mxu0 0.0
    %2915 = vmatprep.subr.mxu0 0.0
    %2916 = vmatpush2.msra.mxu0 0.0
    %2917 = vmatprep.subr.mxu0 0.0
    %2918 = vmatpush2.msra.mxu0 0.0
    %2919 = vmatprep.subr.mxu0 0.0
    %2920 = vmatpush2.msra.mxu0 0.0
    %2921 = vmatprep.subr.mxu0 0.0
    %2922 = vmatpush2.msra.mxu0 0.0
    %2923 = vmatprep.subr.mxu0 0.0
    %2924 = vmatpush2.msra.mxu0 0.0
    %2925 = vmatprep.mubr.f32.mxu0 0.0
    %2926 = vmatmul.mubr.f32.gmra.mxu0 %v2859
    %v2927 = vpop.f32.mrf.mxu0
    %v2928 = vadd.f32 0.0, %v2927
    %v2929 = vpop.f32.mrf.mxu0
    %2930 = vdwg.mxu0
    %v2932 = vrot.slane %v2928, 2
    %v2934 = vadd.f32 %v1239, %v2932
    %v2935 = vxor.u32 %v2934, 2147483648
    %v2936 = vmul.f32 %v2935, 1.442695
    %v2937 = vpow.pop %v2936
    %v2938 = vadd.f32 %v2937, 1.0
    %v2939 = vrcp.pop %v2938
    %v2940 = vmul.f32 1.0, %v2939
    %v2941 = vtanh.pop %v2934
    %v2943 = vrot.slane %v2846, 6
    %v2945 = vmul.f32 %v2940, %v2943
    %2947 = vrot.lane.b32.xlu0 %v2941, 64
    %v2948 = vpop.permute.xlu0 %2947
    %v2950 = vmul.f32 %v2940, %v2948
    %2952 = vrot.lane.b32.xlu0 %v2950, 32
    %v2953 = vpop.permute.xlu0 %2952
    %v2955 = vadd.f32 %v2945, %v2953
    %v2956 = vtanh.pop %v2955
    %2958 = vrot.lane.b32.xlu0 %v2956, 64
    %v2959 = vpop.permute.xlu0 %2958
    %v2961 = vmul.f32 %v2940, %v2959
    %v2963 = vrot.slane %v2961, 6
    %v2965 = vadd.f32 %v2856, %v2963
    %v2966 = vmul.f32 %v2965, 0.0625
    %v2967 = vld [vmem:[%s11] sm:$0xff]
    %v2968 = vld [vmem:[%s11 + $0x8] sm:$0xff]
    %v2969 = vld [vmem:[%s11 + $0x10] sm:$0xff]
    %v2970 = vld [vmem:[%s11 + $0x18] sm:$0xff]
    %v2971 = vld [vmem:[%s12] sm:$0x1]
    %v2973 = vlaneseq
    %v2974 = vshrl.u32 %v2973, 7
    %v2975 = vsub.s32 0, %v2974
    %v2976 = vrot.slane %v2971, %v2975
    %2979 = vrot.lane.b32.xlu0 %v2966, 32
    %v2980 = vpop.permute.xlu0 %2979
    %v2981 = vsel %vm810, %v2980, 0
    %2983 = vmatprep.subr.mxu0 0.0
    %2984 = vmatpush1.msra.mxu0 0.0
    %2985 = vmatprep.subr.mxu0 0.0
    %2986 = vmatpush1.msra.mxu0 0.0
    %2987 = vmatprep.subr.mxu0 0.0
    %2988 = vmatpush1.msra.mxu0 0.0
    %2989 = vmatprep.subr.mxu0 0.0
    %2990 = vmatpush1.msra.mxu0 0.0
    %2991 = vmatprep.subr.mxu0 0.0
    %2992 = vmatpush1.msra.mxu0 0.0
    %2993 = vmatprep.subr.mxu0 0.0
    %2994 = vmatpush1.msra.mxu0 0.0
    %2995 = vmatprep.subr.mxu0 0.0
    %2996 = vmatpush1.msra.mxu0 0.0
    %2997 = vmatprep.subr.mxu0 0.0
    %2998 = vmatpush1.msra.mxu0 0.0
    %2999 = vmatprep.subr.mxu0 0.0
    %3000 = vmatpush1.msra.mxu0 0.0
    %3001 = vmatprep.subr.mxu0 0.0
    %3002 = vmatpush1.msra.mxu0 0.0
    %3003 = vmatprep.subr.mxu0 0.0
    %3004 = vmatpush1.msra.mxu0 0.0
    %3005 = vmatprep.subr.mxu0 0.0
    %3006 = vmatpush1.msra.mxu0 0.0
    %3007 = vmatprep.subr.mxu0 0.0
    %3008 = vmatpush1.msra.mxu0 %v2970
    %3009 = vmatprep.subr.mxu0 0.0
    %3010 = vmatpush1.msra.mxu0 %v2969
    %3011 = vmatprep.subr.mxu0 0.0
    %3012 = vmatpush1.msra.mxu0 %v2968
    %3013 = vmatprep.subr.mxu0 0.0
    %3014 = vmatpush1.msra.mxu0 %v2967
    %3015 = vmatprep.subr.mxu0 0.0
    %3016 = vmatpush2.msra.mxu0 0.0
    %3017 = vmatprep.subr.mxu0 0.0
    %3018 = vmatpush2.msra.mxu0 0.0
    %3019 = vmatprep.subr.mxu0 0.0
    %3020 = vmatpush2.msra.mxu0 0.0
    %3021 = vmatprep.subr.mxu0 0.0
    %3022 = vmatpush2.msra.mxu0 0.0
    %3023 = vmatprep.subr.mxu0 0.0
    %3024 = vmatpush2.msra.mxu0 0.0
    %3025 = vmatprep.subr.mxu0 0.0
    %3026 = vmatpush2.msra.mxu0 0.0
    %3027 = vmatprep.subr.mxu0 0.0
    %3028 = vmatpush2.msra.mxu0 0.0
    %3029 = vmatprep.subr.mxu0 0.0
    %3030 = vmatpush2.msra.mxu0 0.0
    %3031 = vmatprep.subr.mxu0 0.0
    %3032 = vmatpush2.msra.mxu0 0.0
    %3033 = vmatprep.subr.mxu0 0.0
    %3034 = vmatpush2.msra.mxu0 0.0
    %3035 = vmatprep.subr.mxu0 0.0
    %3036 = vmatpush2.msra.mxu0 0.0
    %3037 = vmatprep.subr.mxu0 0.0
    %3038 = vmatpush2.msra.mxu0 0.0
    %3039 = vmatprep.subr.mxu0 0.0
    %3040 = vmatpush2.msra.mxu0 0.0
    %3041 = vmatprep.subr.mxu0 0.0
    %3042 = vmatpush2.msra.mxu0 0.0
    %3043 = vmatprep.subr.mxu0 0.0
    %3044 = vmatpush2.msra.mxu0 0.0
    %3045 = vmatprep.subr.mxu0 0.0
    %3046 = vmatpush2.msra.mxu0 0.0
    %3047 = vmatprep.mubr.f32.mxu0 0.0
    %3048 = vmatmul.mubr.f32.gmra.mxu0 %v2981
    %v3049 = vpop.f32.mrf.mxu0
    %v3050 = vadd.f32 %v2976, %v3049
    %v3051 = vpop.f32.mrf.mxu0
    %3052 = vdwg.mxu0
    %vm3053 = vcmp.gt.f32.partialorder %v3050, 0.0
    %v3054 = vmul.f32 %v3050, 0.3
    %v3055 = vsel %vm3053, %v3050, %v3054
    %v3056 = vld [vmem:[%s13] sm:$0xff]
    %v3057 = vld [vmem:[%s13 + $0x8] sm:$0xff]
    %v3058 = vld [vmem:[#allocation2] sm:$0x1]
    %v3060 = vlaneseq
    %v3061 = vshrl.u32 %v3060, 7
    %v3062 = vsub.s32 0, %v3061
    %v3063 = vrot.slane %v3058, %v3062
    %v3066 = vsel %vm479, %v3055, 0
    %3068 = vmatprep.subr.mxu0 0.0
    %3069 = vmatpush1.msra.mxu0 0.0
    %3070 = vmatprep.subr.mxu0 0.0
    %3071 = vmatpush1.msra.mxu0 0.0
    %3072 = vmatprep.subr.mxu0 0.0
    %3073 = vmatpush1.msra.mxu0 0.0
    %3074 = vmatprep.subr.mxu0 0.0
    %3075 = vmatpush1.msra.mxu0 0.0
    %3076 = vmatprep.subr.mxu0 0.0
    %3077 = vmatpush1.msra.mxu0 0.0
    %3078 = vmatprep.subr.mxu0 0.0
    %3079 = vmatpush1.msra.mxu0 0.0
    %3080 = vmatprep.subr.mxu0 0.0
    %3081 = vmatpush1.msra.mxu0 0.0
    %3082 = vmatprep.subr.mxu0 0.0
    %3083 = vmatpush1.msra.mxu0 0.0
    %3084 = vmatprep.subr.mxu0 0.0
    %3085 = vmatpush1.msra.mxu0 0.0
    %3086 = vmatprep.subr.mxu0 0.0
    %3087 = vmatpush1.msra.mxu0 0.0
    %3088 = vmatprep.subr.mxu0 0.0
    %3089 = vmatpush1.msra.mxu0 0.0
    %3090 = vmatprep.subr.mxu0 0.0
    %3091 = vmatpush1.msra.mxu0 0.0
    %3092 = vmatprep.subr.mxu0 0.0
    %3093 = vmatpush1.msra.mxu0 0.0
    %3094 = vmatprep.subr.mxu0 0.0
    %3095 = vmatpush1.msra.mxu0 0.0
    %3096 = vmatprep.subr.mxu0 0.0
    %3097 = vmatpush1.msra.mxu0 %v3057
    %3098 = vmatprep.subr.mxu0 0.0
    %3099 = vmatpush1.msra.mxu0 %v3056
    %3100 = vmatprep.subr.mxu0 0.0
    %3101 = vmatpush2.msra.mxu0 0.0
    %3102 = vmatprep.subr.mxu0 0.0
    %3103 = vmatpush2.msra.mxu0 0.0
    %3104 = vmatprep.subr.mxu0 0.0
    %3105 = vmatpush2.msra.mxu0 0.0
    %3106 = vmatprep.subr.mxu0 0.0
    %3107 = vmatpush2.msra.mxu0 0.0
    %3108 = vmatprep.subr.mxu0 0.0
    %3109 = vmatpush2.msra.mxu0 0.0
    %3110 = vmatprep.subr.mxu0 0.0
    %3111 = vmatpush2.msra.mxu0 0.0
    %3112 = vmatprep.subr.mxu0 0.0
    %3113 = vmatpush2.msra.mxu0 0.0
    %3114 = vmatprep.subr.mxu0 0.0
    %3115 = vmatpush2.msra.mxu0 0.0
    %3116 = vmatprep.subr.mxu0 0.0
    %3117 = vmatpush2.msra.mxu0 0.0
    %3118 = vmatprep.subr.mxu0 0.0
    %3119 = vmatpush2.msra.mxu0 0.0
    %3120 = vmatprep.subr.mxu0 0.0
    %3121 = vmatpush2.msra.mxu0 0.0
    %3122 = vmatprep.subr.mxu0 0.0
    %3123 = vmatpush2.msra.mxu0 0.0
    %3124 = vmatprep.subr.mxu0 0.0
    %3125 = vmatpush2.msra.mxu0 0.0
    %3126 = vmatprep.subr.mxu0 0.0
    %3127 = vmatpush2.msra.mxu0 0.0
    %3128 = vmatprep.subr.mxu0 0.0
    %3129 = vmatpush2.msra.mxu0 0.0
    %3130 = vmatprep.subr.mxu0 0.0
    %3131 = vmatpush2.msra.mxu0 0.0
    %3132 = vmatprep.mubr.f32.mxu0 0.0
    %3133 = vmatmul.mubr.f32.gmra.mxu0 %v3066
    %v3134 = vpop.f32.mrf.mxu0
    %v3135 = vadd.f32 %v3063, %v3134
    %v3136 = vpop.f32.mrf.mxu0
    %3137 = vdwg.mxu0
    %v3138 = vxor.u32 %v3135, 2147483648
    %v3139 = vmul.f32 %v3138, 1.442695
    %v3140 = vpow.pop %v3139
    %v3141 = vadd.f32 %v3140, 1.0
    %v3142 = vrcp.pop %v3141
    %v3143 = vmul.f32 1.0, %v3142
    %vm3144 = vcmask 1024
    %3145 = vst.msk [vmem:[%s15] sm:$0x3] %vm3144, %v3143
    // Predicated region
    $region74: #{tpu_custom_call.1} parent=1 // pred_check
      _
    $region75: #{tpu_custom_call.1} parent=1 // pred_check_branch
      %3147 = sbr.rel (0) target = $region77
    $region76: #{tpu_custom_call.1} parent=1 // pred_region
      _
    $region77: #{tpu_custom_call.1} parent=1 // pred_fallthru
      _
    // Predicated region
    $region78: #{tpu_custom_call.1} parent=1 // pred_check
      _
    $region79: #{tpu_custom_call.1} parent=1 // pred_check_branch
      %3149 = sbr.rel (0) target = $region81
    $region80: #{tpu_custom_call.1} parent=1 // pred_region
      _
    $region81: #{tpu_custom_call.1} parent=1 // pred_fallthru
      _
    %3150 = vsyncpa [#allocation4], 1
    %3151 = vsyncpa [#allocation6], 1

</llo_original>
